<compile_context>
chip_gen: v5e
topology: v5e:2x2
jax: 0.10.0
libtpu: 0.0.40
codegen_flags: <defaults>
</compile_context>

<pallas_src>
import math
import functools

import jax
import jax.numpy as jnp
from jax.experimental import pallas as pl
from jax.experimental.pallas import tpu as pltpu

EPS = 1e-5


# ----------------------------------------------------------------------------
# in-kernel helpers
# ----------------------------------------------------------------------------
def _ln(x, g, b):
    mu = jnp.mean(x, axis=-1, keepdims=True)
    var = jnp.mean(jnp.square(x - mu), axis=-1, keepdims=True)
    return (x - mu) * jax.lax.rsqrt(var + EPS) * g + b


def _gelu(x):
    # TODO(synk): PyTorch nn.GELU default is exact erf; tanh approximation used
    # for robust Mosaic lowering (EUP path).
    return jax.nn.gelu(x, approximate=True)


# ----------------------------------------------------------------------------
# the fused decoder-block kernel (grid = (batch blocks, transformer layer))
# ----------------------------------------------------------------------------
def decoder_block_kernel(
        x_cat_ref, pe_ref, w_up_ref,
        wqkvh_ref, woh_ref, w1_ref, w2_ref, lvec_ref, b1_ref, bias_ref,
        film_gb_ref, fm_w1_ref, fm_b1_ref, fm_w2_ref, w_fc_ref, evec_ref,
        o_ref, acc_ref, *, num_heads):
    layer = pl.program_id(1)
    Bt, L, C = acc_ref.shape
    M = Bt * L
    H = num_heads
    Dh = C // H
    Ccat = x_cat_ref.shape[2]
    K = w_up_ref.shape[0]
    Cpad = o_ref.shape[2]
    scale = 1.0 / math.sqrt(Dh)
    bf16, f32 = jnp.bfloat16, jnp.float32

    def shift_rows(x2, d):
        """y[b*L + p] = x2[b*L + p + d] inside each length-L sequence, 0 at the
        sequence edges.  XLU sublane roll + mask (no slice/concat copies)."""
        if d == 0:
            return x2
        rolled = pltpu.roll(x2, shift=(-d) % x2.shape[0], axis=0)
        row = jax.lax.broadcasted_iota(jnp.int32, x2.shape, 0)
        pos = row % L
        valid = jnp.logical_and(pos + d >= 0, pos + d < L)
        return jnp.where(valid, rolled, 0.0)

    def conv_k(x2, w_taps_ref, bias_row):
        """K-tap Conv1d as K shifted MXU matmuls summed.
        x2: [M, Cin] f32, w_taps_ref: [K, Cin, Cout] bf16."""
        pad = (K - 1) // 2
        out = None
        for kk in range(K):
            xs = shift_rows(x2, kk - pad).astype(bf16)
            t = jnp.dot(xs, w_taps_ref[kk], preferred_element_type=f32)
            out = t if out is None else out + t
        return out + bias_row

    # ---------------- prologue: upsample-conv + LN + GELU + PE ---------------
    @pl.when(layer == 0)
    def _prologue():
        ev = evec_ref[...]
        xf = x_cat_ref[...].reshape(M, Ccat)
        h = conv_k(xf, w_up_ref, ev[0:1])
        h = _gelu(_ln(h, ev[1:2], ev[2:3]))
        acc_ref[...] = h.reshape(Bt, L, C) + pe_ref[...][None]

    # ---------------- one pre-LN transformer decoder layer -------------------
    xf = acc_ref[...].reshape(M, C)                       # [M, C] f32 (resident)
    lv = lvec_ref[0]            # [9, C]: ln1g,ln1b,ln2g,ln2b,bo,b2,bq,bk,bv
    hb = _ln(xf, lv[0:1], lv[1:2]).astype(bf16)

    # Self-attention.  Heads are pre-split in the weight layout (wrapper side),
    # so the head loop only does leading-axis ref indexing + 2D MXU matmuls —
    # no lane slicing / stacking / concatenation in-kernel.
    attn_b = [None] * Bt
    for h in range(H):
        q = jnp.dot(hb, wqkvh_ref[0, h], preferred_element_type=f32) \
            + lv[6:7, h * Dh:(h + 1) * Dh]
        k = jnp.dot(hb, wqkvh_ref[0, H + h], preferred_element_type=f32) \
            + lv[7:8, h * Dh:(h + 1) * Dh]
        v = jnp.dot(hb, wqkvh_ref[0, 2 * H + h], preferred_element_type=f32) \
            + lv[8:9, h * Dh:(h + 1) * Dh]
        q16, k16, v16 = q.astype(bf16), k.astype(bf16), v.astype(bf16)
        bias_h = bias_ref[0, h]                            # [L, L] f32 (streamed)
        wo_h = woh_ref[0, h]                               # [Dh, C] bf16
        for b in range(Bt):
            sl = slice(b * L, (b + 1) * L)
            s = jax.lax.dot_general(q16[sl], k16[sl],
                                    (((1,), (1,)), ((), ())),
                                    preferred_element_type=f32) * scale + bias_h
            s = s - jnp.max(s, axis=-1, keepdims=True)
            p = jnp.exp(s)
            p = p * pl.reciprocal(jnp.sum(p, axis=-1, keepdims=True), approx=True)
            ctx = jnp.dot(p.astype(bf16), v16[sl], preferred_element_type=f32)
            o_h = jnp.dot(ctx.astype(bf16), wo_h, preferred_element_type=f32)
            attn_b[b] = o_h if attn_b[b] is None else attn_b[b] + o_h
    attn = attn_b[0] if Bt == 1 else jnp.concatenate(attn_b, axis=0)   # [M, C]
    x1 = xf + attn + lv[4:5]

    ff = _gelu(jnp.dot(_ln(x1, lv[2:3], lv[3:4]).astype(bf16), w1_ref[0],
                       preferred_element_type=f32) + b1_ref[0])
    ff = jnp.dot(ff.astype(bf16), w2_ref[0], preferred_element_type=f32) + lv[5:6]
    acc_ref[...] = (x1 + ff).reshape(Bt, L, C)

    # -------- epilogue: FiLM -> film_mlp -> final Conv1dBlock -> final LN ----
    @pl.when(layer == pl.num_programs(1) - 1)
    def _epilogue():
        ev = evec_ref[...]
        y3 = acc_ref[...]                                  # [Bt, L, C]
        gb = film_gb_ref[...]                              # [Bt, 2, C]
        y3 = y3 * (1.0 + gb[:, 0:1, :]) + gb[:, 1:2, :]    # FiLM modulation
        yf = y3.reshape(M, C)
        hm = _gelu(jnp.dot(yf.astype(bf16), fm_w1_ref[...],
                           preferred_element_type=f32) + fm_b1_ref[...])
        y2 = jnp.dot(hm.astype(bf16), fm_w2_ref[...],
                     preferred_element_type=f32) + ev[8:9]
        c = _gelu(_ln(conv_k(y2, w_fc_ref, ev[3:4]), ev[4:5], ev[5:6]))
        out = _ln(c, ev[6:7], ev[7:8]).reshape(Bt, L, C)
        if Cpad > C:
            # lane-dense (unmasked) store: pad channels up to a 128 multiple.
            out = jnp.concatenate(
                [out, jnp.zeros((Bt, L, Cpad - C), out.dtype)], axis=-1)
        o_ref[...] = out.astype(o_ref.dtype)


# ----------------------------------------------------------------------------
# JAX glue
# ----------------------------------------------------------------------------
def linear_upsample_ncl(x, factor):
    # x: [B, C, Lin]; matches F.interpolate(mode='linear', align_corners=False)
    B, C, Lin = x.shape
    Lout = Lin * factor
    j = jnp.arange(Lout, dtype=jnp.float32)
    src = jnp.maximum((j + 0.5) / factor - 0.5, 0.0)
    i0 = jnp.minimum(jnp.floor(src).astype(jnp.int32), Lin - 1)
    i1 = jnp.minimum(i0 + 1, Lin - 1)
    w1 = src - i0.astype(jnp.float32)
    w0 = 1.0 - w1
    g0 = jnp.take(x, i0, axis=2)
    g1 = jnp.take(x, i1, axis=2)
    return g0 * w0[None, None, :] + g1 * w1[None, None, :]


def sinusoidal_pe(L, C):
    pos = jnp.arange(L, dtype=jnp.float32)[:, None]
    i = jnp.arange(0, C, 2, dtype=jnp.float32)
    div = jnp.exp(-math.log(10000.0) * i / C)
    ang = pos * div[None, :]
    pe = jnp.zeros((L, C), jnp.float32)
    pe = pe.at[:, 0::2].set(jnp.sin(ang))
    pe = pe.at[:, 1::2].set(jnp.cos(ang))
    return pe


def init_params(key, cfg):
    Cin, Cout, Cskip = cfg["in_channels"], cfg["out_channels"], cfg["skip_channels"]
    S, H, NL = cfg["static_dim"], cfg["num_heads"], cfg["num_transformer_layers"]
    L = cfg["sequence_length"] * cfg["upsample_factor"]
    Dff = Cout * cfg["d_ff_multiplier"]

    keys = iter(jax.random.split(key, 128))
    nxt = lambda: next(keys)

    def lin(fi, fo):
        lim = math.sqrt(6.0 / (fi + fo))
        return jax.random.uniform(nxt(), (fi, fo), jnp.float32, -lim, lim)

    def conv(K, fi, fo):
        std = math.sqrt(2.0 / (fo * K))
        return jax.random.normal(nxt(), (K, fi, fo), jnp.float32) * std

    zeros = lambda *s: jnp.zeros(s, jnp.float32)
    ones = lambda *s: jnp.ones(s, jnp.float32)

    p = {}
    Ccat = Cin + Cskip
    p["up_conv"] = dict(w=conv(3, Ccat, Cout), b=zeros(1, Cout),
                        g=ones(1, Cout), beta=zeros(1, Cout))
    layers = []
    for _ in range(NL):
        layers.append(dict(
            ln1g=ones(1, Cout), ln1b=zeros(1, Cout),
            wq=lin(Cout, Cout), bq=zeros(1, Cout),
            wk=lin(Cout, Cout), bk=zeros(1, Cout),
            wv=lin(Cout, Cout), bv=zeros(1, Cout),
            wo=lin(Cout, Cout), bo=zeros(1, Cout),
            ln2g=ones(1, Cout), ln2b=zeros(1, Cout),
            w1=lin(Cout, Dff), b1=zeros(1, Dff),
            w2=lin(Dff, Cout), b2=zeros(1, Cout),
            rel_table=jax.random.normal(nxt(), (H, 2 * L - 1), jnp.float32) * 0.02,
        ))
    p["layers"] = layers
    p["film"] = dict(
        wc1=lin(2 * S, Cout), bc1=zeros(1, Cout),
        wc2=lin(Cout, 2 * Cout), bc2=zeros(1, 2 * Cout),
        ls_g=ones(1, Cout) * 0.1, ls_b=ones(1, Cout) * 0.1,
    )
    p["film_mlp"] = dict(w1=lin(Cout, 2 * Cout), b1=zeros(1, 2 * Cout),
                         w2=lin(2 * Cout, Cout), b2=zeros(1, Cout))
    p["final_conv"] = dict(w=conv(3, Cout, Cout), b=zeros(1, Cout),
                           g=ones(1, Cout), beta=zeros(1, Cout))
    p["final_norm"] = dict(g=ones(1, Cout), b=zeros(1, Cout))
    return p


def enhanced_decoder_block(params, x, skip, static_params, cfg):
    """x: [B, in_ch, L], skip: [B, skip_ch, L*factor], static: [B, static_dim]
    -> [B, out_ch, L*factor]  (PyTorch NCL convention at the boundary)."""
    B, Cin, Lin = x.shape
    factor = cfg["upsample_factor"]
    Lout = Lin * factor
    C = cfg["out_channels"]
    H = cfg["num_heads"]
    NL = cfg["num_transformer_layers"]
    K = 3
    assert C % H == 0
    Dh = C // H

    # 1. interpolate + concat skip, -> channel-last [B, Lout, Ccat]
    x_up = linear_upsample_ncl(x, factor)
    x_cat = jnp.transpose(jnp.concatenate([x_up, skip], axis=1), (0, 2, 1))
    Ccat = x_cat.shape[-1]

    # 2. positional encoding (added inside the kernel prologue)
    pe = sinusoidal_pe(Lout, C)

    # 3. FiLM conditioning MLP on static params (tiny, stays in JAX glue)
    # TODO(synk): AdaptiveFiLMWithDropout internals are undefined in the spec;
    # implemented as 2-layer MLP on [cond, cond] -> (gamma, beta) w/ layer-scale.
    fp = params["film"]
    cond = jnp.concatenate([static_params, static_params], axis=-1)   # [B, 2S]
    hc = jax.nn.gelu(cond @ fp["wc1"] + fp["bc1"], approximate=True)
    gbv = hc @ fp["wc2"] + fp["bc2"]
    gamma, beta = jnp.split(gbv, 2, axis=-1)
    film_gb = jnp.stack([gamma * fp["ls_g"], beta * fp["ls_b"]], axis=1)  # [B,2,C]

    # 4. pack weights: per-head split for attention, bf16 matmul operands,
    #    all tiny per-layer vectors in one [NL, 9, C] array.
    Ls = params["layers"]
    Dff = Ls[0]["w1"].shape[1]

    def head_cols(w):                    # [C, H*Dh] -> [H, C, Dh]
        return jnp.transpose(w.reshape(C, H, Dh), (1, 0, 2))

    wqkvh = jnp.stack([jnp.concatenate(
        [head_cols(ly["wq"]), head_cols(ly["wk"]), head_cols(ly["wv"])], axis=0)
        for ly in Ls]).astype(jnp.bfloat16)                          # [NL,3H,C,Dh]
    woh = jnp.stack([ly["wo"].reshape(H, Dh, C)
                     for ly in Ls]).astype(jnp.bfloat16)             # [NL,H,Dh,C]
    w1 = jnp.stack([ly["w1"] for ly in Ls]).astype(jnp.bfloat16)     # [NL,C,Dff]
    w2 = jnp.stack([ly["w2"] for ly in Ls]).astype(jnp.bfloat16)     # [NL,Dff,C]
    lvec = jnp.stack([jnp.concatenate(
        [ly["ln1g"], ly["ln1b"], ly["ln2g"], ly["ln2b"],
         ly["bo"], ly["b2"], ly["bq"], ly["bk"], ly["bv"]], axis=0)
        for ly in Ls])                                               # [NL,9,C]
    b1 = jnp.stack([ly["b1"] for ly in Ls])                          # [NL,1,Dff]

    # relative-position bias: gathered ONCE in glue, streamed per layer step.
    # TODO(synk): delta = q_idx - k_idx + (L-1) convention assumed (matches the
    # previous implementation); for large L switch to in-kernel one-hot matmul
    # or flash-style blocked attention with on-the-fly bias.
    qi = jnp.arange(Lout, dtype=jnp.int32)[:, None]
    kj = jnp.arange(Lout, dtype=jnp.int32)[None, :]
    delta = (qi - kj + (Lout - 1)).reshape(-1)
    relt = jnp.stack([ly["rel_table"] for ly in Ls])                 # [NL,H,2L-1]
    bias = jnp.take(relt, delta, axis=2).reshape(NL, H, Lout, Lout)  # [NL,H,L,L]

    up = params["up_conv"]
    fc = params["final_conv"]
    fn = params["final_norm"]
    fm = params["film_mlp"]
    w_up = up["w"].astype(jnp.bfloat16)                              # [K,Ccat,C]
    w_fc = fc["w"].astype(jnp.bfloat16)                              # [K,C,C]
    fm_w1 = fm["w1"].astype(jnp.bfloat16)                            # [C,2C]
    fm_w2 = fm["w2"].astype(jnp.bfloat16)                            # [2C,C]
    fm_b1 = fm["b1"]                                                 # [1,2C]
    evec = jnp.concatenate([up["b"], up["g"], up["beta"],
                            fc["b"], fc["g"], fc["beta"],
                            fn["g"], fn["b"], fm["b2"]], axis=0)     # [9, C]

    # lane-dense output: pad channels up to a multiple of 128, slice after.
    Cpad = ((C + 127) // 128) * 128

    # chip-dependent knobs
    try:
        kind = jax.devices()[0].device_kind.lower()
    except Exception:  # pragma: no cover
        kind = ""
    is_v7 = "v7" in kind

    # batch folding: fatten matmul M and amortize per-layer weight DMA, while
    # keeping >=2 blocks on the parallel batch axis (v7x has 2 TensorCores) and
    # respecting a per-block activation budget (tighter on v7x's 64 MiB VMEM).
    act_budget = (16 << 20) if is_v7 else (40 << 20)
    Btile = 1
    for d in range(1, B + 1):
        if B % d:
            continue
        if B >= 2 and B // d < 2:
            continue
        work = 4 * d * (Lout * (Ccat + C + 2 * Cpad + Dff + 4 * C)
                        + H * Lout * Lout)
        if work <= act_budget:
            Btile = d
    Bblocks = B // Btile

    # VMEM budgeting (bytes): streamed per-layer weights (x buffer depth),
    # resident fixed weights, per-block I/O, scratch, intermediates.
    per_layer_bytes = (2 * (3 * H * C * Dh + H * Dh * C + C * Dff + Dff * C)
                       + 4 * (9 * C + Dff + H * Lout * Lout))
    deep_buffer = (not is_v7) and NL >= 3 and 3 * per_layer_bytes < (40 << 20)
    nbuf = 3 if deep_buffer else 2
    fixed_bytes = (2 * (K * Ccat * C + K * C * C + C * 2 * C + 2 * C * C)
                   + 4 * (Lout * C + 9 * C + 2 * C))
    block_bytes = 4 * Btile * (Lout * (Ccat + Cpad) + 2 * C)
    scratch_bytes = 4 * Btile * Lout * C
    interm_bytes = 4 * Btile * (Lout * max(Dff, 3 * C) + H * Lout * Lout)
    est = (nbuf * per_layer_bytes + 2 * fixed_bytes + 2 * block_bytes
           + scratch_bytes + interm_bytes)
    vmem_cap = (56 << 20) if is_v7 else (100 << 20)
    vmem_limit = int(max(32 << 20, min(2 * est, vmem_cap)))

    kernel = functools.partial(decoder_block_kernel, num_heads=H)

    fixed2 = lambda b, l: (0, 0)
    fixed3 = lambda b, l: (0, 0, 0)
    layer3 = lambda b, l: (l, 0, 0)
    layer4 = lambda b, l: (l, 0, 0, 0)
    batch3 = lambda b, l: (b, 0, 0)

    def wspec(shape, imap):
        # deeper buffering of the large per-layer weight streams on big-VMEM
        # chips (v5e/v6e) when there are enough layers to benefit.
        if deep_buffer:
            return pl.BlockSpec(shape, imap, pipeline_mode=pl.Buffered(3))
        return pl.BlockSpec(shape, imap)

    y = pl.pallas_call(
        kernel,
        out_shape=jax.ShapeDtypeStruct((B, Lout, Cpad), jnp.float32),
        grid=(Bblocks, NL),
        in_specs=[
            pl.BlockSpec((Btile, Lout, Ccat), batch3),     # x_cat
            pl.BlockSpec((Lout, C), fixed2),               # pe
            pl.BlockSpec((K, Ccat, C), fixed3),            # w_up (taps)
            wspec((1, 3 * H, C, Dh), layer4),              # per-head QKV weights
            pl.BlockSpec((1, H, Dh, C), layer4),           # per-head out-proj
            wspec((1, C, Dff), layer3),                    # FFN w1
            wspec((1, Dff, C), layer3),                    # FFN w2
            pl.BlockSpec((1, 9, C), layer3),               # packed LN/bias vecs
            pl.BlockSpec((1, 1, Dff), layer3),             # FFN b1
            pl.BlockSpec((1, H, Lout, Lout), layer4),      # rel-pos bias (glue)
            pl.BlockSpec((Btile, 2, C), batch3),           # FiLM gamma/beta
            pl.BlockSpec((C, 2 * C), fixed2),              # film_mlp w1
            pl.BlockSpec((1, 2 * C), fixed2),              # film_mlp b1
            pl.BlockSpec((2 * C, C), fixed2),              # film_mlp w2
            pl.BlockSpec((K, C, C), fixed3),               # final conv (taps)
            pl.BlockSpec((9, C), fixed2),                  # packed epilogue vecs
        ],
        out_specs=pl.BlockSpec((Btile, Lout, Cpad), batch3),
        scratch_shapes=[pltpu.VMEM((Btile, Lout, C), jnp.float32)],
        compiler_params=pltpu.CompilerParams(
            dimension_semantics=("parallel", "arbitrary"),
            vmem_limit_bytes=vmem_limit),
    )(x_cat, pe, w_up, wqkvh, woh, w1, w2, lvec, b1, bias,
      film_gb, fm_w1, fm_b1, fm_w2, w_fc, evec)

    # TODO(synk): epilogue-only weights (fm_w1/fm_w2/w_fc) could be fetched via
    # manual DMA under @pl.when(last layer) from pl.ANY refs to free resident
    # VMEM on v7x; kept as fixed specs here for robustness at these sizes.
    return jnp.transpose(y[:, :, :C], (0, 2, 1))           # back to [B, C, Lout]


if __name__ == "__main__":
    cfg = dict(
        in_channels=16, out_channels=32, skip_channels=8, static_dim=6,
        sequence_length=8, upsample_factor=2,
        num_transformer_layers=2, num_heads=4, d_ff_multiplier=4,
    )
    B = 2
    Lin = cfg["sequence_length"]
    Lout = Lin * cfg["upsample_factor"]

    root = jax.random.PRNGKey(0)
    kp, kx, ks, kc = jax.random.split(root, 4)
    params = init_params(kp, cfg)
    x = jax.random.normal(kx, (B, cfg["in_channels"], Lin), jnp.float32)
    skip = jax.random.normal(ks, (B, cfg["skip_channels"], Lout), jnp.float32)
    static_params = jax.random.normal(kc, (B, cfg["static_dim"]), jnp.float32)

    @jax.jit
    def fwd(params, x, skip, static_params):
        return enhanced_decoder_block(params, x, skip, static_params, cfg)

    out = jax.block_until_ready(fwd(params, x, skip, static_params))
    assert out.shape == (B, cfg["out_channels"], Lout), out.shape
    assert bool(jnp.all(jnp.isfinite(out)))
    print("KERNEL_OK")
</pallas_src>

<mosaic_0001>
module attributes {stable_mosaic.version = 11 : i64} {
  func.func @decoder_block_kernel(%arg0: i32, %arg1: i32, %arg2: memref<1x16x24xf32, #tpu.memory_space<vmem>>, %arg3: memref<16x32xf32, #tpu.memory_space<vmem>>, %arg4: memref<3x24x32xbf16, #tpu.memory_space<vmem>>, %arg5: memref<1x12x32x8xbf16, #tpu.memory_space<vmem>>, %arg6: memref<1x4x8x32xbf16, #tpu.memory_space<vmem>>, %arg7: memref<1x32x128xbf16, #tpu.memory_space<vmem>>, %arg8: memref<1x128x32xbf16, #tpu.memory_space<vmem>>, %arg9: memref<1x9x32xf32, #tpu.memory_space<vmem>>, %arg10: memref<1x1x128xf32, #tpu.memory_space<vmem>>, %arg11: memref<1x4x16x16xf32, #tpu.memory_space<vmem>>, %arg12: memref<1x2x32xf32, #tpu.memory_space<vmem>>, %arg13: memref<32x64xbf16, #tpu.memory_space<vmem>>, %arg14: memref<1x64xf32, #tpu.memory_space<vmem>>, %arg15: memref<64x32xbf16, #tpu.memory_space<vmem>>, %arg16: memref<3x32x32xbf16, #tpu.memory_space<vmem>>, %arg17: memref<9x32xf32, #tpu.memory_space<vmem>>, %arg18: memref<1x16x128xf32, #tpu.memory_space<vmem>>, %arg19: memref<1x16x32xf32, #tpu.memory_space<vmem>>) attributes {dimension_semantics = [#tpu.dimension_semantics<parallel>, #tpu.dimension_semantics<arbitrary>], iteration_bounds = array<i64: 2, 2>, scalar_prefetch = 0 : i64, scratch_operands = 1 : i64, tpu.core_type = #tpu.core_type<tc>, window_params = [{transform_indices = @transform_0, window_bounds = array<i64: 1, 16, 24>}, {pipeline_mode = #tpu.pipeline_mode<synchronous>, transform_indices = @transform_1, window_bounds = array<i64: 16, 32>}, {pipeline_mode = #tpu.pipeline_mode<synchronous>, transform_indices = @transform_2, window_bounds = array<i64: 3, 24, 32>}, {transform_indices = @transform_3, window_bounds = array<i64: 1, 12, 32, 8>}, {transform_indices = @transform_4, window_bounds = array<i64: 1, 4, 8, 32>}, {transform_indices = @transform_5, window_bounds = array<i64: 1, 32, 128>}, {transform_indices = @transform_6, window_bounds = array<i64: 1, 128, 32>}, {transform_indices = @transform_7, window_bounds = array<i64: 1, 9, 32>}, {transform_indices = @transform_8, window_bounds = array<i64: 1, 1, 128>}, {transform_indices = @transform_9, window_bounds = array<i64: 1, 4, 16, 16>}, {transform_indices = @transform_10, window_bounds = array<i64: 1, 2, 32>}, {pipeline_mode = #tpu.pipeline_mode<synchronous>, transform_indices = @transform_11, window_bounds = array<i64: 32, 64>}, {pipeline_mode = #tpu.pipeline_mode<synchronous>, transform_indices = @transform_12, window_bounds = array<i64: 1, 64>}, {pipeline_mode = #tpu.pipeline_mode<synchronous>, transform_indices = @transform_13, window_bounds = array<i64: 64, 32>}, {pipeline_mode = #tpu.pipeline_mode<synchronous>, transform_indices = @transform_14, window_bounds = array<i64: 3, 32, 32>}, {pipeline_mode = #tpu.pipeline_mode<synchronous>, transform_indices = @transform_15, window_bounds = array<i64: 9, 32>}, {transform_indices = @transform_16, window_bounds = array<i64: 1, 16, 128>}]} {
    %c0_i32 = arith.constant 0 : i32
    %0 = arith.cmpi eq, %arg1, %c0_i32 : i32
    %1 = arith.extui %0 : i1 to i32
    %c0_i32_0 = arith.constant 0 : i32
    %2 = arith.cmpi ne, %1, %c0_i32_0 : i32
    scf.if %2 {
      %c0_139 = arith.constant 0 : index
      %c0_140 = arith.constant 0 : index
      %269 = vector.load %arg17[%c0_139, %c0_140] : memref<9x32xf32, #tpu.memory_space<vmem>>, vector<9x32xf32>
      %c0_141 = arith.constant 0 : index
      %c0_142 = arith.constant 0 : index
      %c0_143 = arith.constant 0 : index
      %270 = vector.load %arg2[%c0_141, %c0_142, %c0_143] : memref<1x16x24xf32, #tpu.memory_space<vmem>>, vector<1x16x24xf32>
      %271 = vector.shape_cast %270 : vector<1x16x24xf32> to vector<16x24xf32>
      %272 = vector.extract_strided_slice %269 {offsets = [0, 0], sizes = [1, 32], strides = [1, 1]} : vector<9x32xf32> to vector<1x32xf32>
      %c1_i32_144 = arith.constant 1 : i32
      %273 = tpu.dynamic_rotate %271 by %c1_i32_144 dim 0 : vector<16x24xf32>, i32 -> vector<16x24xf32>
      %274 = tpu.iota {dimensions = array<i32: 0>} : vector<16x24xi32>
      %c16_i32 = arith.constant 16 : i32
      %c0_i32_145 = arith.constant 0 : i32
      %275 = arith.cmpi eq, %c16_i32, %c0_i32_145 : i32
      %c1_i32_146 = arith.constant 1 : i32
      %276 = arith.select %275, %c1_i32_146, %c16_i32 : i32
      %277 = vector.broadcast %276 : i32 to vector<16x24xi32>
      %278 = arith.remsi %274, %277 : vector<16x24xi32>
      %c0_i32_147 = arith.constant 0 : i32
      %279 = vector.broadcast %c0_i32_147 : i32 to vector<16x24xi32>
      %280 = arith.cmpi ne, %278, %279 : vector<16x24xi32>
      %c0_i32_148 = arith.constant 0 : i32
      %281 = vector.broadcast %c0_i32_148 : i32 to vector<16x24xi32>
      %282 = arith.cmpi slt, %278, %281 : vector<16x24xi32>
      %c0_i32_149 = arith.constant 0 : i32
      %283 = arith.cmpi slt, %276, %c0_i32_149 : i32
      %284 = vector.broadcast %283 : i1 to vector<16x24xi1>
      %285 = vector.broadcast %284 : vector<16x24xi1> to vector<16x24xi1>
      %286 = arith.xori %282, %285 : vector<16x24xi1>
      %287 = arith.andi %286, %280 : vector<16x24xi1>
      %288 = vector.broadcast %276 : i32 to vector<16x24xi32>
      %289 = arith.addi %278, %288 : vector<16x24xi32>
      %290 = arith.select %287, %289, %278 : vector<16x24xi1>, vector<16x24xi32>
      %c-1_i32 = arith.constant -1 : i32
      %291 = vector.broadcast %c-1_i32 : i32 to vector<16x24xi32>
      %292 = arith.addi %290, %291 : vector<16x24xi32>
      %c0_i32_150 = arith.constant 0 : i32
      %293 = vector.broadcast %c0_i32_150 : i32 to vector<16x24xi32>
      %294 = arith.cmpi sge, %292, %293 : vector<16x24xi32>
      %c-1_i32_151 = arith.constant -1 : i32
      %295 = vector.broadcast %c-1_i32_151 : i32 to vector<16x24xi32>
      %296 = arith.addi %290, %295 : vector<16x24xi32>
      %c16_i32_152 = arith.constant 16 : i32
      %297 = vector.broadcast %c16_i32_152 : i32 to vector<16x24xi32>
      %298 = arith.cmpi slt, %296, %297 : vector<16x24xi32>
      %299 = arith.andi %294, %298 : vector<16x24xi1>
      %cst_153 = arith.constant 0.000000e+00 : f32
      %300 = vector.broadcast %cst_153 : f32 to vector<16x24xf32>
      %301 = arith.select %299, %273, %300 : vector<16x24xi1>, vector<16x24xf32>
      %302 = arith.truncf %301 : vector<16x24xf32> to vector<16x24xbf16>
      %c0_154 = arith.constant 0 : index
      %c0_155 = arith.constant 0 : index
      %c0_156 = arith.constant 0 : index
      %303 = vector.load %arg4[%c0_154, %c0_155, %c0_156] : memref<3x24x32xbf16, #tpu.memory_space<vmem>>, vector<1x24x32xbf16>
      %304 = vector.shape_cast %303 : vector<1x24x32xbf16> to vector<24x32xbf16>
      %cst_157 = arith.constant dense<0.000000e+00> : vector<16x32xf32>
      %305 = tpu.matmul %302, %304, %cst_157 {dimension_numbers = #tpu.dot_dimension_numbers<[1], [0], [0], [1], [0, 0, 1, 1], [], []>} : vector<16x24xbf16>, vector<24x32xbf16>, vector<16x32xf32> -> vector<16x32xf32>
      %306 = arith.truncf %271 : vector<16x24xf32> to vector<16x24xbf16>
      %c1_158 = arith.constant 1 : index
      %c0_159 = arith.constant 0 : index
      %c0_160 = arith.constant 0 : index
      %307 = vector.load %arg4[%c1_158, %c0_159, %c0_160] : memref<3x24x32xbf16, #tpu.memory_space<vmem>>, vector<1x24x32xbf16>
      %308 = vector.shape_cast %307 : vector<1x24x32xbf16> to vector<24x32xbf16>
      %cst_161 = arith.constant dense<0.000000e+00> : vector<16x32xf32>
      %309 = tpu.matmul %306, %308, %cst_161 {dimension_numbers = #tpu.dot_dimension_numbers<[1], [0], [0], [1], [0, 0, 1, 1], [], []>} : vector<16x24xbf16>, vector<24x32xbf16>, vector<16x32xf32> -> vector<16x32xf32>
      %310 = arith.addf %305, %309 : vector<16x32xf32>
      %c15_i32 = arith.constant 15 : i32
      %311 = tpu.dynamic_rotate %271 by %c15_i32 dim 0 : vector<16x24xf32>, i32 -> vector<16x24xf32>
      %312 = tpu.iota {dimensions = array<i32: 0>} : vector<16x24xi32>
      %c16_i32_162 = arith.constant 16 : i32
      %c0_i32_163 = arith.constant 0 : i32
      %313 = arith.cmpi eq, %c16_i32_162, %c0_i32_163 : i32
      %c1_i32_164 = arith.constant 1 : i32
      %314 = arith.select %313, %c1_i32_164, %c16_i32_162 : i32
      %315 = vector.broadcast %314 : i32 to vector<16x24xi32>
      %316 = arith.remsi %312, %315 : vector<16x24xi32>
      %c0_i32_165 = arith.constant 0 : i32
      %317 = vector.broadcast %c0_i32_165 : i32 to vector<16x24xi32>
      %318 = arith.cmpi ne, %316, %317 : vector<16x24xi32>
      %c0_i32_166 = arith.constant 0 : i32
      %319 = vector.broadcast %c0_i32_166 : i32 to vector<16x24xi32>
      %320 = arith.cmpi slt, %316, %319 : vector<16x24xi32>
      %c0_i32_167 = arith.constant 0 : i32
      %321 = arith.cmpi slt, %314, %c0_i32_167 : i32
      %322 = vector.broadcast %321 : i1 to vector<16x24xi1>
      %323 = vector.broadcast %322 : vector<16x24xi1> to vector<16x24xi1>
      %324 = arith.xori %320, %323 : vector<16x24xi1>
      %325 = arith.andi %324, %318 : vector<16x24xi1>
      %326 = vector.broadcast %314 : i32 to vector<16x24xi32>
      %327 = arith.addi %316, %326 : vector<16x24xi32>
      %328 = arith.select %325, %327, %316 : vector<16x24xi1>, vector<16x24xi32>
      %c1_i32_168 = arith.constant 1 : i32
      %329 = vector.broadcast %c1_i32_168 : i32 to vector<16x24xi32>
      %330 = arith.addi %328, %329 : vector<16x24xi32>
      %c0_i32_169 = arith.constant 0 : i32
      %331 = vector.broadcast %c0_i32_169 : i32 to vector<16x24xi32>
      %332 = arith.cmpi sge, %330, %331 : vector<16x24xi32>
      %c1_i32_170 = arith.constant 1 : i32
      %333 = vector.broadcast %c1_i32_170 : i32 to vector<16x24xi32>
      %334 = arith.addi %328, %333 : vector<16x24xi32>
      %c16_i32_171 = arith.constant 16 : i32
      %335 = vector.broadcast %c16_i32_171 : i32 to vector<16x24xi32>
      %336 = arith.cmpi slt, %334, %335 : vector<16x24xi32>
      %337 = arith.andi %332, %336 : vector<16x24xi1>
      %cst_172 = arith.constant 0.000000e+00 : f32
      %338 = vector.broadcast %cst_172 : f32 to vector<16x24xf32>
      %339 = arith.select %337, %311, %338 : vector<16x24xi1>, vector<16x24xf32>
      %340 = arith.truncf %339 : vector<16x24xf32> to vector<16x24xbf16>
      %c2_173 = arith.constant 2 : index
      %c0_174 = arith.constant 0 : index
      %c0_175 = arith.constant 0 : index
      %341 = vector.load %arg4[%c2_173, %c0_174, %c0_175] : memref<3x24x32xbf16, #tpu.memory_space<vmem>>, vector<1x24x32xbf16>
      %342 = vector.shape_cast %341 : vector<1x24x32xbf16> to vector<24x32xbf16>
      %cst_176 = arith.constant dense<0.000000e+00> : vector<16x32xf32>
      %343 = tpu.matmul %340, %342, %cst_176 {dimension_numbers = #tpu.dot_dimension_numbers<[1], [0], [0], [1], [0, 0, 1, 1], [], []>} : vector<16x24xbf16>, vector<24x32xbf16>, vector<16x32xf32> -> vector<16x32xf32>
      %344 = arith.addf %310, %343 : vector<16x32xf32>
      %345 = vector.broadcast %272 : vector<1x32xf32> to vector<16x32xf32>
      %346 = arith.addf %344, %345 : vector<16x32xf32>
      %347 = vector.extract_strided_slice %269 {offsets = [1, 0], sizes = [1, 32], strides = [1, 1]} : vector<9x32xf32> to vector<1x32xf32>
      %348 = vector.extract_strided_slice %269 {offsets = [2, 0], sizes = [1, 32], strides = [1, 1]} : vector<9x32xf32> to vector<1x32xf32>
      %cst_177 = arith.constant dense<0.000000e+00> : vector<16xf32>
      %349 = vector.multi_reduction <add>, %346, %cst_177 [1] : vector<16x32xf32> to vector<16xf32>
      %350 = vector.shape_cast %349 : vector<16xf32> to vector<16x1xf32>
      %cst_178 = arith.constant 3.200000e+01 : f32
      %351 = vector.broadcast %cst_178 : f32 to vector<16x1xf32>
      %352 = arith.divf %350, %351 : vector<16x1xf32>
      %353 = vector.broadcast %352 : vector<16x1xf32> to vector<16x32xf32>
      %354 = arith.subf %346, %353 : vector<16x32xf32>
      %355 = arith.mulf %354, %354 : vector<16x32xf32>
      %cst_179 = arith.constant dense<0.000000e+00> : vector<16xf32>
      %356 = vector.multi_reduction <add>, %355, %cst_179 [1] : vector<16x32xf32> to vector<16xf32>
      %357 = vector.shape_cast %356 : vector<16xf32> to vector<16x1xf32>
      %cst_180 = arith.constant 3.200000e+01 : f32
      %358 = vector.broadcast %cst_180 : f32 to vector<16x1xf32>
      %359 = arith.divf %357, %358 : vector<16x1xf32>
      %360 = vector.broadcast %352 : vector<16x1xf32> to vector<16x32xf32>
      %361 = arith.subf %346, %360 : vector<16x32xf32>
      %cst_181 = arith.constant 9.99999974E-6 : f32
      %362 = vector.broadcast %cst_181 : f32 to vector<16x1xf32>
      %363 = arith.addf %359, %362 : vector<16x1xf32>
      %364 = math.rsqrt %363 : vector<16x1xf32>
      %365 = vector.broadcast %364 : vector<16x1xf32> to vector<16x32xf32>
      %366 = arith.mulf %361, %365 : vector<16x32xf32>
      %367 = vector.broadcast %347 : vector<1x32xf32> to vector<16x32xf32>
      %368 = arith.mulf %366, %367 : vector<16x32xf32>
      %369 = vector.broadcast %348 : vector<1x32xf32> to vector<16x32xf32>
      %370 = arith.addf %368, %369 : vector<16x32xf32>
      %371 = arith.mulf %370, %370 : vector<16x32xf32>
      %372 = arith.mulf %370, %371 : vector<16x32xf32>
      %cst_182 = arith.constant 4.471500e-02 : f32
      %373 = vector.broadcast %cst_182 : f32 to vector<16x32xf32>
      %374 = arith.mulf %373, %372 : vector<16x32xf32>
      %375 = arith.addf %370, %374 : vector<16x32xf32>
      %cst_183 = arith.constant 0.797884583 : f32
      %376 = vector.broadcast %cst_183 : f32 to vector<16x32xf32>
      %377 = arith.mulf %376, %375 : vector<16x32xf32>
      %378 = math.tanh %377 : vector<16x32xf32>
      %cst_184 = arith.constant 1.000000e+00 : f32
      %379 = vector.broadcast %cst_184 : f32 to vector<16x32xf32>
      %380 = arith.addf %379, %378 : vector<16x32xf32>
      %cst_185 = arith.constant 5.000000e-01 : f32
      %381 = vector.broadcast %cst_185 : f32 to vector<16x32xf32>
      %382 = arith.mulf %381, %380 : vector<16x32xf32>
      %383 = arith.mulf %370, %382 : vector<16x32xf32>
      %384 = vector.shape_cast %383 : vector<16x32xf32> to vector<1x16x32xf32>
      %c0_186 = arith.constant 0 : index
      %c0_187 = arith.constant 0 : index
      %385 = vector.load %arg3[%c0_186, %c0_187] : memref<16x32xf32, #tpu.memory_space<vmem>>, vector<16x32xf32>
      %386 = vector.shape_cast %385 : vector<16x32xf32> to vector<1x16x32xf32>
      %387 = arith.addf %384, %386 : vector<1x16x32xf32>
      %c0_188 = arith.constant 0 : index
      %c0_189 = arith.constant 0 : index
      %c0_190 = arith.constant 0 : index
      %388 = vector.load %arg19[%c0_188, %c0_189, %c0_190] : memref<1x16x32xf32, #tpu.memory_space<vmem>>, vector<1x16x32xf32>
      tpu.vector_store %arg19[%c0_188, %c0_189, %c0_190], %387 {strides = array<i32>} : memref<1x16x32xf32, #tpu.memory_space<vmem>>, vector<1x16x32xf32>,
    } else {
    }
    %c0 = arith.constant 0 : index
    %c0_1 = arith.constant 0 : index
    %c0_2 = arith.constant 0 : index
    %3 = vector.load %arg19[%c0, %c0_1, %c0_2] : memref<1x16x32xf32, #tpu.memory_space<vmem>>, vector<1x16x32xf32>
    %4 = vector.shape_cast %3 : vector<1x16x32xf32> to vector<16x32xf32>
    %c0_3 = arith.constant 0 : index
    %c0_4 = arith.constant 0 : index
    %c0_5 = arith.constant 0 : index
    %5 = vector.load %arg9[%c0_3, %c0_4, %c0_5] : memref<1x9x32xf32, #tpu.memory_space<vmem>>, vector<1x9x32xf32>
    %6 = vector.shape_cast %5 : vector<1x9x32xf32> to vector<9x32xf32>
    %7 = vector.extract_strided_slice %6 {offsets = [0, 0], sizes = [1, 32], strides = [1, 1]} : vector<9x32xf32> to vector<1x32xf32>
    %8 = vector.extract_strided_slice %6 {offsets = [1, 0], sizes = [1, 32], strides = [1, 1]} : vector<9x32xf32> to vector<1x32xf32>
    %cst = arith.constant dense<0.000000e+00> : vector<16xf32>
    %9 = vector.multi_reduction <add>, %4, %cst [1] : vector<16x32xf32> to vector<16xf32>
    %10 = vector.shape_cast %9 : vector<16xf32> to vector<16x1xf32>
    %cst_6 = arith.constant 3.200000e+01 : f32
    %11 = vector.broadcast %cst_6 : f32 to vector<16x1xf32>
    %12 = arith.divf %10, %11 : vector<16x1xf32>
    %13 = vector.broadcast %12 : vector<16x1xf32> to vector<16x32xf32>
    %14 = arith.subf %4, %13 : vector<16x32xf32>
    %15 = arith.mulf %14, %14 : vector<16x32xf32>
    %cst_7 = arith.constant dense<0.000000e+00> : vector<16xf32>
    %16 = vector.multi_reduction <add>, %15, %cst_7 [1] : vector<16x32xf32> to vector<16xf32>
    %17 = vector.shape_cast %16 : vector<16xf32> to vector<16x1xf32>
    %cst_8 = arith.constant 3.200000e+01 : f32
    %18 = vector.broadcast %cst_8 : f32 to vector<16x1xf32>
    %19 = arith.divf %17, %18 : vector<16x1xf32>
    %20 = vector.broadcast %12 : vector<16x1xf32> to vector<16x32xf32>
    %21 = arith.subf %4, %20 : vector<16x32xf32>
    %cst_9 = arith.constant 9.99999974E-6 : f32
    %22 = vector.broadcast %cst_9 : f32 to vector<16x1xf32>
    %23 = arith.addf %19, %22 : vector<16x1xf32>
    %24 = math.rsqrt %23 : vector<16x1xf32>
    %25 = vector.broadcast %24 : vector<16x1xf32> to vector<16x32xf32>
    %26 = arith.mulf %21, %25 : vector<16x32xf32>
    %27 = vector.broadcast %7 : vector<1x32xf32> to vector<16x32xf32>
    %28 = arith.mulf %26, %27 : vector<16x32xf32>
    %29 = vector.broadcast %8 : vector<1x32xf32> to vector<16x32xf32>
    %30 = arith.addf %28, %29 : vector<16x32xf32>
    %31 = arith.truncf %30 : vector<16x32xf32> to vector<16x32xbf16>
    %c0_10 = arith.constant 0 : index
    %c0_11 = arith.constant 0 : index
    %c0_12 = arith.constant 0 : index
    %c0_13 = arith.constant 0 : index
    %32 = vector.load %arg5[%c0_10, %c0_11, %c0_12, %c0_13] : memref<1x12x32x8xbf16, #tpu.memory_space<vmem>>, vector<1x1x32x8xbf16>
    %33 = vector.shape_cast %32 : vector<1x1x32x8xbf16> to vector<32x8xbf16>
    %cst_14 = arith.constant dense<0.000000e+00> : vector<16x8xf32>
    %34 = tpu.matmul %31, %33, %cst_14 {dimension_numbers = #tpu.dot_dimension_numbers<[1], [0], [0], [1], [0, 0, 1, 1], [], []>} : vector<16x32xbf16>, vector<32x8xbf16>, vector<16x8xf32> -> vector<16x8xf32>
    %35 = vector.extract_strided_slice %6 {offsets = [6, 0], sizes = [1, 8], strides = [1, 1]} : vector<9x32xf32> to vector<1x8xf32>
    %36 = vector.broadcast %35 : vector<1x8xf32> to vector<16x8xf32>
    %37 = arith.addf %34, %36 : vector<16x8xf32>
    %c0_15 = arith.constant 0 : index
    %c4 = arith.constant 4 : index
    %c0_16 = arith.constant 0 : index
    %c0_17 = arith.constant 0 : index
    %38 = vector.load %arg5[%c0_15, %c4, %c0_16, %c0_17] : memref<1x12x32x8xbf16, #tpu.memory_space<vmem>>, vector<1x1x32x8xbf16>
    %39 = vector.shape_cast %38 : vector<1x1x32x8xbf16> to vector<32x8xbf16>
    %cst_18 = arith.constant dense<0.000000e+00> : vector<16x8xf32>
    %40 = tpu.matmul %31, %39, %cst_18 {dimension_numbers = #tpu.dot_dimension_numbers<[1], [0], [0], [1], [0, 0, 1, 1], [], []>} : vector<16x32xbf16>, vector<32x8xbf16>, vector<16x8xf32> -> vector<16x8xf32>
    %41 = vector.extract_strided_slice %6 {offsets = [7, 0], sizes = [1, 8], strides = [1, 1]} : vector<9x32xf32> to vector<1x8xf32>
    %42 = vector.broadcast %41 : vector<1x8xf32> to vector<16x8xf32>
    %43 = arith.addf %40, %42 : vector<16x8xf32>
    %c0_19 = arith.constant 0 : index
    %c8 = arith.constant 8 : index
    %c0_20 = arith.constant 0 : index
    %c0_21 = arith.constant 0 : index
    %44 = vector.load %arg5[%c0_19, %c8, %c0_20, %c0_21] : memref<1x12x32x8xbf16, #tpu.memory_space<vmem>>, vector<1x1x32x8xbf16>
    %45 = vector.shape_cast %44 : vector<1x1x32x8xbf16> to vector<32x8xbf16>
    %cst_22 = arith.constant dense<0.000000e+00> : vector<16x8xf32>
    %46 = tpu.matmul %31, %45, %cst_22 {dimension_numbers = #tpu.dot_dimension_numbers<[1], [0], [0], [1], [0, 0, 1, 1], [], []>} : vector<16x32xbf16>, vector<32x8xbf16>, vector<16x8xf32> -> vector<16x8xf32>
    %47 = vector.extract_strided_slice %6 {offsets = [8, 0], sizes = [1, 8], strides = [1, 1]} : vector<9x32xf32> to vector<1x8xf32>
    %48 = vector.broadcast %47 : vector<1x8xf32> to vector<16x8xf32>
    %49 = arith.addf %46, %48 : vector<16x8xf32>
    %50 = arith.truncf %37 : vector<16x8xf32> to vector<16x8xbf16>
    %51 = arith.truncf %43 : vector<16x8xf32> to vector<16x8xbf16>
    %52 = arith.truncf %49 : vector<16x8xf32> to vector<16x8xbf16>
    %c0_23 = arith.constant 0 : index
    %c0_24 = arith.constant 0 : index
    %c0_25 = arith.constant 0 : index
    %c0_26 = arith.constant 0 : index
    %53 = vector.load %arg11[%c0_23, %c0_24, %c0_25, %c0_26] : memref<1x4x16x16xf32, #tpu.memory_space<vmem>>, vector<1x1x16x16xf32>
    %54 = vector.shape_cast %53 : vector<1x1x16x16xf32> to vector<16x16xf32>
    %c0_27 = arith.constant 0 : index
    %c0_28 = arith.constant 0 : index
    %c0_29 = arith.constant 0 : index
    %c0_30 = arith.constant 0 : index
    %55 = vector.load %arg6[%c0_27, %c0_28, %c0_29, %c0_30] : memref<1x4x8x32xbf16, #tpu.memory_space<vmem>>, vector<1x1x8x32xbf16>
    %56 = vector.shape_cast %55 : vector<1x1x8x32xbf16> to vector<8x32xbf16>
    %cst_31 = arith.constant dense<0.000000e+00> : vector<16x16xf32>
    %57 = tpu.matmul %50, %51, %cst_31 {dimension_numbers = #tpu.dot_dimension_numbers<[1], [1], [0], [0], [0, 0, 1, 0], [], []>} : vector<16x8xbf16>, vector<16x8xbf16>, vector<16x16xf32> -> vector<16x16xf32>
    %cst_32 = arith.constant 0.353553385 : f32
    %58 = vector.broadcast %cst_32 : f32 to vector<16x16xf32>
    %59 = arith.mulf %57, %58 : vector<16x16xf32>
    %60 = arith.addf %59, %54 : vector<16x16xf32>
    %cst_33 = arith.constant dense<0xFF800000> : vector<16xf32>
    %61 = vector.multi_reduction <maximumf>, %60, %cst_33 [1] : vector<16x16xf32> to vector<16xf32>
    %62 = vector.shape_cast %61 : vector<16xf32> to vector<16x1xf32>
    %63 = vector.broadcast %62 : vector<16x1xf32> to vector<16x16xf32>
    %64 = arith.subf %60, %63 : vector<16x16xf32>
    %65 = math.exp %64 : vector<16x16xf32>
    %cst_34 = arith.constant dense<0.000000e+00> : vector<16xf32>
    %66 = vector.multi_reduction <add>, %65, %cst_34 [1] : vector<16x16xf32> to vector<16xf32>
    %67 = vector.shape_cast %66 : vector<16xf32> to vector<16x1xf32>
    %68 = tpu.reciprocal %67 {approx = true} : vector<16x1xf32> -> vector<16x1xf32>
    %69 = vector.broadcast %68 : vector<16x1xf32> to vector<16x16xf32>
    %70 = arith.mulf %65, %69 : vector<16x16xf32>
    %71 = arith.truncf %70 : vector<16x16xf32> to vector<16x16xbf16>
    %cst_35 = arith.constant dense<0.000000e+00> : vector<16x8xf32>
    %72 = tpu.matmul %71, %52, %cst_35 {dimension_numbers = #tpu.dot_dimension_numbers<[1], [0], [0], [1], [0, 0, 1, 1], [], []>} : vector<16x16xbf16>, vector<16x8xbf16>, vector<16x8xf32> -> vector<16x8xf32>
    %73 = arith.truncf %72 : vector<16x8xf32> to vector<16x8xbf16>
    %cst_36 = arith.constant dense<0.000000e+00> : vector<16x32xf32>
    %74 = tpu.matmul %73, %56, %cst_36 {dimension_numbers = #tpu.dot_dimension_numbers<[1], [0], [0], [1], [0, 0, 1, 1], [], []>} : vector<16x8xbf16>, vector<8x32xbf16>, vector<16x32xf32> -> vector<16x32xf32>
    %c0_37 = arith.constant 0 : index
    %c1 = arith.constant 1 : index
    %c0_38 = arith.constant 0 : index
    %c0_39 = arith.constant 0 : index
    %75 = vector.load %arg5[%c0_37, %c1, %c0_38, %c0_39] : memref<1x12x32x8xbf16, #tpu.memory_space<vmem>>, vector<1x1x32x8xbf16>
    %76 = vector.shape_cast %75 : vector<1x1x32x8xbf16> to vector<32x8xbf16>
    %cst_40 = arith.constant dense<0.000000e+00> : vector<16x8xf32>
    %77 = tpu.matmul %31, %76, %cst_40 {dimension_numbers = #tpu.dot_dimension_numbers<[1], [0], [0], [1], [0, 0, 1, 1], [], []>} : vector<16x32xbf16>, vector<32x8xbf16>, vector<16x8xf32> -> vector<16x8xf32>
    %78 = vector.extract_strided_slice %6 {offsets = [6, 8], sizes = [1, 8], strides = [1, 1]} : vector<9x32xf32> to vector<1x8xf32>
    %79 = vector.broadcast %78 : vector<1x8xf32> to vector<16x8xf32>
    %80 = arith.addf %77, %79 : vector<16x8xf32>
    %c0_41 = arith.constant 0 : index
    %c5 = arith.constant 5 : index
    %c0_42 = arith.constant 0 : index
    %c0_43 = arith.constant 0 : index
    %81 = vector.load %arg5[%c0_41, %c5, %c0_42, %c0_43] : memref<1x12x32x8xbf16, #tpu.memory_space<vmem>>, vector<1x1x32x8xbf16>
    %82 = vector.shape_cast %81 : vector<1x1x32x8xbf16> to vector<32x8xbf16>
    %cst_44 = arith.constant dense<0.000000e+00> : vector<16x8xf32>
    %83 = tpu.matmul %31, %82, %cst_44 {dimension_numbers = #tpu.dot_dimension_numbers<[1], [0], [0], [1], [0, 0, 1, 1], [], []>} : vector<16x32xbf16>, vector<32x8xbf16>, vector<16x8xf32> -> vector<16x8xf32>
    %84 = vector.extract_strided_slice %6 {offsets = [7, 8], sizes = [1, 8], strides = [1, 1]} : vector<9x32xf32> to vector<1x8xf32>
    %85 = vector.broadcast %84 : vector<1x8xf32> to vector<16x8xf32>
    %86 = arith.addf %83, %85 : vector<16x8xf32>
    %c0_45 = arith.constant 0 : index
    %c9 = arith.constant 9 : index
    %c0_46 = arith.constant 0 : index
    %c0_47 = arith.constant 0 : index
    %87 = vector.load %arg5[%c0_45, %c9, %c0_46, %c0_47] : memref<1x12x32x8xbf16, #tpu.memory_space<vmem>>, vector<1x1x32x8xbf16>
    %88 = vector.shape_cast %87 : vector<1x1x32x8xbf16> to vector<32x8xbf16>
    %cst_48 = arith.constant dense<0.000000e+00> : vector<16x8xf32>
    %89 = tpu.matmul %31, %88, %cst_48 {dimension_numbers = #tpu.dot_dimension_numbers<[1], [0], [0], [1], [0, 0, 1, 1], [], []>} : vector<16x32xbf16>, vector<32x8xbf16>, vector<16x8xf32> -> vector<16x8xf32>
    %90 = vector.extract_strided_slice %6 {offsets = [8, 8], sizes = [1, 8], strides = [1, 1]} : vector<9x32xf32> to vector<1x8xf32>
    %91 = vector.broadcast %90 : vector<1x8xf32> to vector<16x8xf32>
    %92 = arith.addf %89, %91 : vector<16x8xf32>
    %93 = arith.truncf %80 : vector<16x8xf32> to vector<16x8xbf16>
    %94 = arith.truncf %86 : vector<16x8xf32> to vector<16x8xbf16>
    %95 = arith.truncf %92 : vector<16x8xf32> to vector<16x8xbf16>
    %c0_49 = arith.constant 0 : index
    %c1_50 = arith.constant 1 : index
    %c0_51 = arith.constant 0 : index
    %c0_52 = arith.constant 0 : index
    %96 = vector.load %arg11[%c0_49, %c1_50, %c0_51, %c0_52] : memref<1x4x16x16xf32, #tpu.memory_space<vmem>>, vector<1x1x16x16xf32>
    %97 = vector.shape_cast %96 : vector<1x1x16x16xf32> to vector<16x16xf32>
    %c0_53 = arith.constant 0 : index
    %c1_54 = arith.constant 1 : index
    %c0_55 = arith.constant 0 : index
    %c0_56 = arith.constant 0 : index
    %98 = vector.load %arg6[%c0_53, %c1_54, %c0_55, %c0_56] : memref<1x4x8x32xbf16, #tpu.memory_space<vmem>>, vector<1x1x8x32xbf16>
    %99 = vector.shape_cast %98 : vector<1x1x8x32xbf16> to vector<8x32xbf16>
    %cst_57 = arith.constant dense<0.000000e+00> : vector<16x16xf32>
    %100 = tpu.matmul %93, %94, %cst_57 {dimension_numbers = #tpu.dot_dimension_numbers<[1], [1], [0], [0], [0, 0, 1, 0], [], []>} : vector<16x8xbf16>, vector<16x8xbf16>, vector<16x16xf32> -> vector<16x16xf32>
    %cst_58 = arith.constant 0.353553385 : f32
    %101 = vector.broadcast %cst_58 : f32 to vector<16x16xf32>
    %102 = arith.mulf %100, %101 : vector<16x16xf32>
    %103 = arith.addf %102, %97 : vector<16x16xf32>
    %cst_59 = arith.constant dense<0xFF800000> : vector<16xf32>
    %104 = vector.multi_reduction <maximumf>, %103, %cst_59 [1] : vector<16x16xf32> to vector<16xf32>
    %105 = vector.shape_cast %104 : vector<16xf32> to vector<16x1xf32>
    %106 = vector.broadcast %105 : vector<16x1xf32> to vector<16x16xf32>
    %107 = arith.subf %103, %106 : vector<16x16xf32>
    %108 = math.exp %107 : vector<16x16xf32>
    %cst_60 = arith.constant dense<0.000000e+00> : vector<16xf32>
    %109 = vector.multi_reduction <add>, %108, %cst_60 [1] : vector<16x16xf32> to vector<16xf32>
    %110 = vector.shape_cast %109 : vector<16xf32> to vector<16x1xf32>
    %111 = tpu.reciprocal %110 {approx = true} : vector<16x1xf32> -> vector<16x1xf32>
    %112 = vector.broadcast %111 : vector<16x1xf32> to vector<16x16xf32>
    %113 = arith.mulf %108, %112 : vector<16x16xf32>
    %114 = arith.truncf %113 : vector<16x16xf32> to vector<16x16xbf16>
    %cst_61 = arith.constant dense<0.000000e+00> : vector<16x8xf32>
    %115 = tpu.matmul %114, %95, %cst_61 {dimension_numbers = #tpu.dot_dimension_numbers<[1], [0], [0], [1], [0, 0, 1, 1], [], []>} : vector<16x16xbf16>, vector<16x8xbf16>, vector<16x8xf32> -> vector<16x8xf32>
    %116 = arith.truncf %115 : vector<16x8xf32> to vector<16x8xbf16>
    %cst_62 = arith.constant dense<0.000000e+00> : vector<16x32xf32>
    %117 = tpu.matmul %116, %99, %cst_62 {dimension_numbers = #tpu.dot_dimension_numbers<[1], [0], [0], [1], [0, 0, 1, 1], [], []>} : vector<16x8xbf16>, vector<8x32xbf16>, vector<16x32xf32> -> vector<16x32xf32>
    %118 = arith.addf %74, %117 : vector<16x32xf32>
    %c0_63 = arith.constant 0 : index
    %c2 = arith.constant 2 : index
    %c0_64 = arith.constant 0 : index
    %c0_65 = arith.constant 0 : index
    %119 = vector.load %arg5[%c0_63, %c2, %c0_64, %c0_65] : memref<1x12x32x8xbf16, #tpu.memory_space<vmem>>, vector<1x1x32x8xbf16>
    %120 = vector.shape_cast %119 : vector<1x1x32x8xbf16> to vector<32x8xbf16>
    %cst_66 = arith.constant dense<0.000000e+00> : vector<16x8xf32>
    %121 = tpu.matmul %31, %120, %cst_66 {dimension_numbers = #tpu.dot_dimension_numbers<[1], [0], [0], [1], [0, 0, 1, 1], [], []>} : vector<16x32xbf16>, vector<32x8xbf16>, vector<16x8xf32> -> vector<16x8xf32>
    %122 = vector.extract_strided_slice %6 {offsets = [6, 16], sizes = [1, 8], strides = [1, 1]} : vector<9x32xf32> to vector<1x8xf32>
    %123 = vector.broadcast %122 : vector<1x8xf32> to vector<16x8xf32>
    %124 = arith.addf %121, %123 : vector<16x8xf32>
    %c0_67 = arith.constant 0 : index
    %c6 = arith.constant 6 : index
    %c0_68 = arith.constant 0 : index
    %c0_69 = arith.constant 0 : index
    %125 = vector.load %arg5[%c0_67, %c6, %c0_68, %c0_69] : memref<1x12x32x8xbf16, #tpu.memory_space<vmem>>, vector<1x1x32x8xbf16>
    %126 = vector.shape_cast %125 : vector<1x1x32x8xbf16> to vector<32x8xbf16>
    %cst_70 = arith.constant dense<0.000000e+00> : vector<16x8xf32>
    %127 = tpu.matmul %31, %126, %cst_70 {dimension_numbers = #tpu.dot_dimension_numbers<[1], [0], [0], [1], [0, 0, 1, 1], [], []>} : vector<16x32xbf16>, vector<32x8xbf16>, vector<16x8xf32> -> vector<16x8xf32>
    %128 = vector.extract_strided_slice %6 {offsets = [7, 16], sizes = [1, 8], strides = [1, 1]} : vector<9x32xf32> to vector<1x8xf32>
    %129 = vector.broadcast %128 : vector<1x8xf32> to vector<16x8xf32>
    %130 = arith.addf %127, %129 : vector<16x8xf32>
    %c0_71 = arith.constant 0 : index
    %c10 = arith.constant 10 : index
    %c0_72 = arith.constant 0 : index
    %c0_73 = arith.constant 0 : index
    %131 = vector.load %arg5[%c0_71, %c10, %c0_72, %c0_73] : memref<1x12x32x8xbf16, #tpu.memory_space<vmem>>, vector<1x1x32x8xbf16>
    %132 = vector.shape_cast %131 : vector<1x1x32x8xbf16> to vector<32x8xbf16>
    %cst_74 = arith.constant dense<0.000000e+00> : vector<16x8xf32>
    %133 = tpu.matmul %31, %132, %cst_74 {dimension_numbers = #tpu.dot_dimension_numbers<[1], [0], [0], [1], [0, 0, 1, 1], [], []>} : vector<16x32xbf16>, vector<32x8xbf16>, vector<16x8xf32> -> vector<16x8xf32>
    %134 = vector.extract_strided_slice %6 {offsets = [8, 16], sizes = [1, 8], strides = [1, 1]} : vector<9x32xf32> to vector<1x8xf32>
    %135 = vector.broadcast %134 : vector<1x8xf32> to vector<16x8xf32>
    %136 = arith.addf %133, %135 : vector<16x8xf32>
    %137 = arith.truncf %124 : vector<16x8xf32> to vector<16x8xbf16>
    %138 = arith.truncf %130 : vector<16x8xf32> to vector<16x8xbf16>
    %139 = arith.truncf %136 : vector<16x8xf32> to vector<16x8xbf16>
    %c0_75 = arith.constant 0 : index
    %c2_76 = arith.constant 2 : index
    %c0_77 = arith.constant 0 : index
    %c0_78 = arith.constant 0 : index
    %140 = vector.load %arg11[%c0_75, %c2_76, %c0_77, %c0_78] : memref<1x4x16x16xf32, #tpu.memory_space<vmem>>, vector<1x1x16x16xf32>
    %141 = vector.shape_cast %140 : vector<1x1x16x16xf32> to vector<16x16xf32>
    %c0_79 = arith.constant 0 : index
    %c2_80 = arith.constant 2 : index
    %c0_81 = arith.constant 0 : index
    %c0_82 = arith.constant 0 : index
    %142 = vector.load %arg6[%c0_79, %c2_80, %c0_81, %c0_82] : memref<1x4x8x32xbf16, #tpu.memory_space<vmem>>, vector<1x1x8x32xbf16>
    %143 = vector.shape_cast %142 : vector<1x1x8x32xbf16> to vector<8x32xbf16>
    %cst_83 = arith.constant dense<0.000000e+00> : vector<16x16xf32>
    %144 = tpu.matmul %137, %138, %cst_83 {dimension_numbers = #tpu.dot_dimension_numbers<[1], [1], [0], [0], [0, 0, 1, 0], [], []>} : vector<16x8xbf16>, vector<16x8xbf16>, vector<16x16xf32> -> vector<16x16xf32>
    %cst_84 = arith.constant 0.353553385 : f32
    %145 = vector.broadcast %cst_84 : f32 to vector<16x16xf32>
    %146 = arith.mulf %144, %145 : vector<16x16xf32>
    %147 = arith.addf %146, %141 : vector<16x16xf32>
    %cst_85 = arith.constant dense<0xFF800000> : vector<16xf32>
    %148 = vector.multi_reduction <maximumf>, %147, %cst_85 [1] : vector<16x16xf32> to vector<16xf32>
    %149 = vector.shape_cast %148 : vector<16xf32> to vector<16x1xf32>
    %150 = vector.broadcast %149 : vector<16x1xf32> to vector<16x16xf32>
    %151 = arith.subf %147, %150 : vector<16x16xf32>
    %152 = math.exp %151 : vector<16x16xf32>
    %cst_86 = arith.constant dense<0.000000e+00> : vector<16xf32>
    %153 = vector.multi_reduction <add>, %152, %cst_86 [1] : vector<16x16xf32> to vector<16xf32>
    %154 = vector.shape_cast %153 : vector<16xf32> to vector<16x1xf32>
    %155 = tpu.reciprocal %154 {approx = true} : vector<16x1xf32> -> vector<16x1xf32>
    %156 = vector.broadcast %155 : vector<16x1xf32> to vector<16x16xf32>
    %157 = arith.mulf %152, %156 : vector<16x16xf32>
    %158 = arith.truncf %157 : vector<16x16xf32> to vector<16x16xbf16>
    %cst_87 = arith.constant dense<0.000000e+00> : vector<16x8xf32>
    %159 = tpu.matmul %158, %139, %cst_87 {dimension_numbers = #tpu.dot_dimension_numbers<[1], [0], [0], [1], [0, 0, 1, 1], [], []>} : vector<16x16xbf16>, vector<16x8xbf16>, vector<16x8xf32> -> vector<16x8xf32>
    %160 = arith.truncf %159 : vector<16x8xf32> to vector<16x8xbf16>
    %cst_88 = arith.constant dense<0.000000e+00> : vector<16x32xf32>
    %161 = tpu.matmul %160, %143, %cst_88 {dimension_numbers = #tpu.dot_dimension_numbers<[1], [0], [0], [1], [0, 0, 1, 1], [], []>} : vector<16x8xbf16>, vector<8x32xbf16>, vector<16x32xf32> -> vector<16x32xf32>
    %162 = arith.addf %118, %161 : vector<16x32xf32>
    %c0_89 = arith.constant 0 : index
    %c3 = arith.constant 3 : index
    %c0_90 = arith.constant 0 : index
    %c0_91 = arith.constant 0 : index
    %163 = vector.load %arg5[%c0_89, %c3, %c0_90, %c0_91] : memref<1x12x32x8xbf16, #tpu.memory_space<vmem>>, vector<1x1x32x8xbf16>
    %164 = vector.shape_cast %163 : vector<1x1x32x8xbf16> to vector<32x8xbf16>
    %cst_92 = arith.constant dense<0.000000e+00> : vector<16x8xf32>
    %165 = tpu.matmul %31, %164, %cst_92 {dimension_numbers = #tpu.dot_dimension_numbers<[1], [0], [0], [1], [0, 0, 1, 1], [], []>} : vector<16x32xbf16>, vector<32x8xbf16>, vector<16x8xf32> -> vector<16x8xf32>
    %166 = vector.extract_strided_slice %6 {offsets = [6, 24], sizes = [1, 8], strides = [1, 1]} : vector<9x32xf32> to vector<1x8xf32>
    %167 = vector.broadcast %166 : vector<1x8xf32> to vector<16x8xf32>
    %168 = arith.addf %165, %167 : vector<16x8xf32>
    %c0_93 = arith.constant 0 : index
    %c7 = arith.constant 7 : index
    %c0_94 = arith.constant 0 : index
    %c0_95 = arith.constant 0 : index
    %169 = vector.load %arg5[%c0_93, %c7, %c0_94, %c0_95] : memref<1x12x32x8xbf16, #tpu.memory_space<vmem>>, vector<1x1x32x8xbf16>
    %170 = vector.shape_cast %169 : vector<1x1x32x8xbf16> to vector<32x8xbf16>
    %cst_96 = arith.constant dense<0.000000e+00> : vector<16x8xf32>
    %171 = tpu.matmul %31, %170, %cst_96 {dimension_numbers = #tpu.dot_dimension_numbers<[1], [0], [0], [1], [0, 0, 1, 1], [], []>} : vector<16x32xbf16>, vector<32x8xbf16>, vector<16x8xf32> -> vector<16x8xf32>
    %172 = vector.extract_strided_slice %6 {offsets = [7, 24], sizes = [1, 8], strides = [1, 1]} : vector<9x32xf32> to vector<1x8xf32>
    %173 = vector.broadcast %172 : vector<1x8xf32> to vector<16x8xf32>
    %174 = arith.addf %171, %173 : vector<16x8xf32>
    %c0_97 = arith.constant 0 : index
    %c11 = arith.constant 11 : index
    %c0_98 = arith.constant 0 : index
    %c0_99 = arith.constant 0 : index
    %175 = vector.load %arg5[%c0_97, %c11, %c0_98, %c0_99] : memref<1x12x32x8xbf16, #tpu.memory_space<vmem>>, vector<1x1x32x8xbf16>
    %176 = vector.shape_cast %175 : vector<1x1x32x8xbf16> to vector<32x8xbf16>
    %cst_100 = arith.constant dense<0.000000e+00> : vector<16x8xf32>
    %177 = tpu.matmul %31, %176, %cst_100 {dimension_numbers = #tpu.dot_dimension_numbers<[1], [0], [0], [1], [0, 0, 1, 1], [], []>} : vector<16x32xbf16>, vector<32x8xbf16>, vector<16x8xf32> -> vector<16x8xf32>
    %178 = vector.extract_strided_slice %6 {offsets = [8, 24], sizes = [1, 8], strides = [1, 1]} : vector<9x32xf32> to vector<1x8xf32>
    %179 = vector.broadcast %178 : vector<1x8xf32> to vector<16x8xf32>
    %180 = arith.addf %177, %179 : vector<16x8xf32>
    %181 = arith.truncf %168 : vector<16x8xf32> to vector<16x8xbf16>
    %182 = arith.truncf %174 : vector<16x8xf32> to vector<16x8xbf16>
    %183 = arith.truncf %180 : vector<16x8xf32> to vector<16x8xbf16>
    %c0_101 = arith.constant 0 : index
    %c3_102 = arith.constant 3 : index
    %c0_103 = arith.constant 0 : index
    %c0_104 = arith.constant 0 : index
    %184 = vector.load %arg11[%c0_101, %c3_102, %c0_103, %c0_104] : memref<1x4x16x16xf32, #tpu.memory_space<vmem>>, vector<1x1x16x16xf32>
    %185 = vector.shape_cast %184 : vector<1x1x16x16xf32> to vector<16x16xf32>
    %c0_105 = arith.constant 0 : index
    %c3_106 = arith.constant 3 : index
    %c0_107 = arith.constant 0 : index
    %c0_108 = arith.constant 0 : index
    %186 = vector.load %arg6[%c0_105, %c3_106, %c0_107, %c0_108] : memref<1x4x8x32xbf16, #tpu.memory_space<vmem>>, vector<1x1x8x32xbf16>
    %187 = vector.shape_cast %186 : vector<1x1x8x32xbf16> to vector<8x32xbf16>
    %cst_109 = arith.constant dense<0.000000e+00> : vector<16x16xf32>
    %188 = tpu.matmul %181, %182, %cst_109 {dimension_numbers = #tpu.dot_dimension_numbers<[1], [1], [0], [0], [0, 0, 1, 0], [], []>} : vector<16x8xbf16>, vector<16x8xbf16>, vector<16x16xf32> -> vector<16x16xf32>
    %cst_110 = arith.constant 0.353553385 : f32
    %189 = vector.broadcast %cst_110 : f32 to vector<16x16xf32>
    %190 = arith.mulf %188, %189 : vector<16x16xf32>
    %191 = arith.addf %190, %185 : vector<16x16xf32>
    %cst_111 = arith.constant dense<0xFF800000> : vector<16xf32>
    %192 = vector.multi_reduction <maximumf>, %191, %cst_111 [1] : vector<16x16xf32> to vector<16xf32>
    %193 = vector.shape_cast %192 : vector<16xf32> to vector<16x1xf32>
    %194 = vector.broadcast %193 : vector<16x1xf32> to vector<16x16xf32>
    %195 = arith.subf %191, %194 : vector<16x16xf32>
    %196 = math.exp %195 : vector<16x16xf32>
    %cst_112 = arith.constant dense<0.000000e+00> : vector<16xf32>
    %197 = vector.multi_reduction <add>, %196, %cst_112 [1] : vector<16x16xf32> to vector<16xf32>
    %198 = vector.shape_cast %197 : vector<16xf32> to vector<16x1xf32>
    %199 = tpu.reciprocal %198 {approx = true} : vector<16x1xf32> -> vector<16x1xf32>
    %200 = vector.broadcast %199 : vector<16x1xf32> to vector<16x16xf32>
    %201 = arith.mulf %196, %200 : vector<16x16xf32>
    %202 = arith.truncf %201 : vector<16x16xf32> to vector<16x16xbf16>
    %cst_113 = arith.constant dense<0.000000e+00> : vector<16x8xf32>
    %203 = tpu.matmul %202, %183, %cst_113 {dimension_numbers = #tpu.dot_dimension_numbers<[1], [0], [0], [1], [0, 0, 1, 1], [], []>} : vector<16x16xbf16>, vector<16x8xbf16>, vector<16x8xf32> -> vector<16x8xf32>
    %204 = arith.truncf %203 : vector<16x8xf32> to vector<16x8xbf16>
    %cst_114 = arith.constant dense<0.000000e+00> : vector<16x32xf32>
    %205 = tpu.matmul %204, %187, %cst_114 {dimension_numbers = #tpu.dot_dimension_numbers<[1], [0], [0], [1], [0, 0, 1, 1], [], []>} : vector<16x8xbf16>, vector<8x32xbf16>, vector<16x32xf32> -> vector<16x32xf32>
    %206 = arith.addf %162, %205 : vector<16x32xf32>
    %207 = arith.addf %4, %206 : vector<16x32xf32>
    %208 = vector.extract_strided_slice %6 {offsets = [4, 0], sizes = [1, 32], strides = [1, 1]} : vector<9x32xf32> to vector<1x32xf32>
    %209 = vector.broadcast %208 : vector<1x32xf32> to vector<16x32xf32>
    %210 = arith.addf %207, %209 : vector<16x32xf32>
    %211 = vector.extract_strided_slice %6 {offsets = [2, 0], sizes = [1, 32], strides = [1, 1]} : vector<9x32xf32> to vector<1x32xf32>
    %212 = vector.extract_strided_slice %6 {offsets = [3, 0], sizes = [1, 32], strides = [1, 1]} : vector<9x32xf32> to vector<1x32xf32>
    %cst_115 = arith.constant dense<0.000000e+00> : vector<16xf32>
    %213 = vector.multi_reduction <add>, %210, %cst_115 [1] : vector<16x32xf32> to vector<16xf32>
    %214 = vector.shape_cast %213 : vector<16xf32> to vector<16x1xf32>
    %cst_116 = arith.constant 3.200000e+01 : f32
    %215 = vector.broadcast %cst_116 : f32 to vector<16x1xf32>
    %216 = arith.divf %214, %215 : vector<16x1xf32>
    %217 = vector.broadcast %216 : vector<16x1xf32> to vector<16x32xf32>
    %218 = arith.subf %210, %217 : vector<16x32xf32>
    %219 = arith.mulf %218, %218 : vector<16x32xf32>
    %cst_117 = arith.constant dense<0.000000e+00> : vector<16xf32>
    %220 = vector.multi_reduction <add>, %219, %cst_117 [1] : vector<16x32xf32> to vector<16xf32>
    %221 = vector.shape_cast %220 : vector<16xf32> to vector<16x1xf32>
    %cst_118 = arith.constant 3.200000e+01 : f32
    %222 = vector.broadcast %cst_118 : f32 to vector<16x1xf32>
    %223 = arith.divf %221, %222 : vector<16x1xf32>
    %224 = vector.broadcast %216 : vector<16x1xf32> to vector<16x32xf32>
    %225 = arith.subf %210, %224 : vector<16x32xf32>
    %cst_119 = arith.constant 9.99999974E-6 : f32
    %226 = vector.broadcast %cst_119 : f32 to vector<16x1xf32>
    %227 = arith.addf %223, %226 : vector<16x1xf32>
    %228 = math.rsqrt %227 : vector<16x1xf32>
    %229 = vector.broadcast %228 : vector<16x1xf32> to vector<16x32xf32>
    %230 = arith.mulf %225, %229 : vector<16x32xf32>
    %231 = vector.broadcast %211 : vector<1x32xf32> to vector<16x32xf32>
    %232 = arith.mulf %230, %231 : vector<16x32xf32>
    %233 = vector.broadcast %212 : vector<1x32xf32> to vector<16x32xf32>
    %234 = arith.addf %232, %233 : vector<16x32xf32>
    %235 = arith.truncf %234 : vector<16x32xf32> to vector<16x32xbf16>
    %c0_120 = arith.constant 0 : index
    %c0_121 = arith.constant 0 : index
    %c0_122 = arith.constant 0 : index
    %236 = vector.load %arg7[%c0_120, %c0_121, %c0_122] : memref<1x32x128xbf16, #tpu.memory_space<vmem>>, vector<1x32x128xbf16>
    %237 = vector.shape_cast %236 : vector<1x32x128xbf16> to vector<32x128xbf16>
    %cst_123 = arith.constant dense<0.000000e+00> : vector<16x128xf32>
    %238 = tpu.matmul %235, %237, %cst_123 {dimension_numbers = #tpu.dot_dimension_numbers<[1], [0], [0], [1], [0, 0, 1, 1], [], []>} : vector<16x32xbf16>, vector<32x128xbf16>, vector<16x128xf32> -> vector<16x128xf32>
    %c0_124 = arith.constant 0 : index
    %c0_125 = arith.constant 0 : index
    %c0_126 = arith.constant 0 : index
    %239 = vector.load %arg10[%c0_124, %c0_125, %c0_126] : memref<1x1x128xf32, #tpu.memory_space<vmem>>, vector<1x1x128xf32>
    %240 = vector.shape_cast %239 : vector<1x1x128xf32> to vector<1x128xf32>
    %241 = vector.broadcast %240 : vector<1x128xf32> to vector<16x128xf32>
    %242 = arith.addf %238, %241 : vector<16x128xf32>
    %243 = arith.mulf %242, %242 : vector<16x128xf32>
    %244 = arith.mulf %242, %243 : vector<16x128xf32>
    %cst_127 = arith.constant 4.471500e-02 : f32
    %245 = vector.broadcast %cst_127 : f32 to vector<16x128xf32>
    %246 = arith.mulf %245, %244 : vector<16x128xf32>
    %247 = arith.addf %242, %246 : vector<16x128xf32>
    %cst_128 = arith.constant 0.797884583 : f32
    %248 = vector.broadcast %cst_128 : f32 to vector<16x128xf32>
    %249 = arith.mulf %248, %247 : vector<16x128xf32>
    %250 = math.tanh %249 : vector<16x128xf32>
    %cst_129 = arith.constant 1.000000e+00 : f32
    %251 = vector.broadcast %cst_129 : f32 to vector<16x128xf32>
    %252 = arith.addf %251, %250 : vector<16x128xf32>
    %cst_130 = arith.constant 5.000000e-01 : f32
    %253 = vector.broadcast %cst_130 : f32 to vector<16x128xf32>
    %254 = arith.mulf %253, %252 : vector<16x128xf32>
    %255 = arith.mulf %242, %254 : vector<16x128xf32>
    %256 = arith.truncf %255 : vector<16x128xf32> to vector<16x128xbf16>
    %c0_131 = arith.constant 0 : index
    %c0_132 = arith.constant 0 : index
    %c0_133 = arith.constant 0 : index
    %257 = vector.load %arg8[%c0_131, %c0_132, %c0_133] : memref<1x128x32xbf16, #tpu.memory_space<vmem>>, vector<1x128x32xbf16>
    %258 = vector.shape_cast %257 : vector<1x128x32xbf16> to vector<128x32xbf16>
    %cst_134 = arith.constant dense<0.000000e+00> : vector<16x32xf32>
    %259 = tpu.matmul %256, %258, %cst_134 {dimension_numbers = #tpu.dot_dimension_numbers<[1], [0], [0], [1], [0, 0, 1, 1], [], []>} : vector<16x128xbf16>, vector<128x32xbf16>, vector<16x32xf32> -> vector<16x32xf32>
    %260 = vector.extract_strided_slice %6 {offsets = [5, 0], sizes = [1, 32], strides = [1, 1]} : vector<9x32xf32> to vector<1x32xf32>
    %261 = vector.broadcast %260 : vector<1x32xf32> to vector<16x32xf32>
    %262 = arith.addf %259, %261 : vector<16x32xf32>
    %263 = arith.addf %210, %262 : vector<16x32xf32>
    %264 = vector.shape_cast %263 : vector<16x32xf32> to vector<1x16x32xf32>
    %c0_135 = arith.constant 0 : index
    %c0_136 = arith.constant 0 : index
    %c0_137 = arith.constant 0 : index
    %265 = vector.load %arg19[%c0_135, %c0_136, %c0_137] : memref<1x16x32xf32, #tpu.memory_space<vmem>>, vector<1x16x32xf32>
    tpu.vector_store %arg19[%c0_135, %c0_136, %c0_137], %264 {strides = array<i32>} : memref<1x16x32xf32, #tpu.memory_space<vmem>>, vector<1x16x32xf32>,
    %c1_i32 = arith.constant 1 : i32
    %266 = arith.cmpi eq, %arg1, %c1_i32 : i32
    %267 = arith.extui %266 : i1 to i32
    %c0_i32_138 = arith.constant 0 : i32
    %268 = arith.cmpi ne, %267, %c0_i32_138 : i32
    scf.if %268 {
      %c0_139 = arith.constant 0 : index
      %c0_140 = arith.constant 0 : index
      %269 = vector.load %arg17[%c0_139, %c0_140] : memref<9x32xf32, #tpu.memory_space<vmem>>, vector<9x32xf32>
      %c0_141 = arith.constant 0 : index
      %c0_142 = arith.constant 0 : index
      %c0_143 = arith.constant 0 : index
      %270 = vector.load %arg19[%c0_141, %c0_142, %c0_143] : memref<1x16x32xf32, #tpu.memory_space<vmem>>, vector<1x16x32xf32>
      %c0_144 = arith.constant 0 : index
      %c0_145 = arith.constant 0 : index
      %c0_146 = arith.constant 0 : index
      %271 = vector.load %arg12[%c0_144, %c0_145, %c0_146] : memref<1x2x32xf32, #tpu.memory_space<vmem>>, vector<1x2x32xf32>
      %272 = vector.extract_strided_slice %271 {offsets = [0, 0, 0], sizes = [1, 1, 32], strides = [1, 1, 1]} : vector<1x2x32xf32> to vector<1x1x32xf32>
      %cst_147 = arith.constant 1.000000e+00 : f32
      %273 = vector.broadcast %cst_147 : f32 to vector<1x1x32xf32>
      %274 = arith.addf %273, %272 : vector<1x1x32xf32>
      %275 = vector.broadcast %274 : vector<1x1x32xf32> to vector<1x16x32xf32>
      %276 = arith.mulf %270, %275 : vector<1x16x32xf32>
      %277 = vector.extract_strided_slice %271 {offsets = [0, 1, 0], sizes = [1, 1, 32], strides = [1, 1, 1]} : vector<1x2x32xf32> to vector<1x1x32xf32>
      %278 = vector.broadcast %277 : vector<1x1x32xf32> to vector<1x16x32xf32>
      %279 = arith.addf %276, %278 : vector<1x16x32xf32>
      %280 = vector.shape_cast %279 : vector<1x16x32xf32> to vector<16x32xf32>
      %281 = arith.truncf %280 : vector<16x32xf32> to vector<16x32xbf16>
      %c0_148 = arith.constant 0 : index
      %c0_149 = arith.constant 0 : index
      %282 = vector.load %arg13[%c0_148, %c0_149] : memref<32x64xbf16, #tpu.memory_space<vmem>>, vector<32x64xbf16>
      %cst_150 = arith.constant dense<0.000000e+00> : vector<16x64xf32>
      %283 = tpu.matmul %281, %282, %cst_150 {dimension_numbers = #tpu.dot_dimension_numbers<[1], [0], [0], [1], [0, 0, 1, 1], [], []>} : vector<16x32xbf16>, vector<32x64xbf16>, vector<16x64xf32> -> vector<16x64xf32>
      %c0_151 = arith.constant 0 : index
      %c0_152 = arith.constant 0 : index
      %284 = vector.load %arg14[%c0_151, %c0_152] : memref<1x64xf32, #tpu.memory_space<vmem>>, vector<1x64xf32>
      %285 = vector.broadcast %284 : vector<1x64xf32> to vector<16x64xf32>
      %286 = arith.addf %283, %285 : vector<16x64xf32>
      %287 = arith.mulf %286, %286 : vector<16x64xf32>
      %288 = arith.mulf %286, %287 : vector<16x64xf32>
      %cst_153 = arith.constant 4.471500e-02 : f32
      %289 = vector.broadcast %cst_153 : f32 to vector<16x64xf32>
      %290 = arith.mulf %289, %288 : vector<16x64xf32>
      %291 = arith.addf %286, %290 : vector<16x64xf32>
      %cst_154 = arith.constant 0.797884583 : f32
      %292 = vector.broadcast %cst_154 : f32 to vector<16x64xf32>
      %293 = arith.mulf %292, %291 : vector<16x64xf32>
      %294 = math.tanh %293 : vector<16x64xf32>
      %cst_155 = arith.constant 1.000000e+00 : f32
      %295 = vector.broadcast %cst_155 : f32 to vector<16x64xf32>
      %296 = arith.addf %295, %294 : vector<16x64xf32>
      %cst_156 = arith.constant 5.000000e-01 : f32
      %297 = vector.broadcast %cst_156 : f32 to vector<16x64xf32>
      %298 = arith.mulf %297, %296 : vector<16x64xf32>
      %299 = arith.mulf %286, %298 : vector<16x64xf32>
      %300 = arith.truncf %299 : vector<16x64xf32> to vector<16x64xbf16>
      %c0_157 = arith.constant 0 : index
      %c0_158 = arith.constant 0 : index
      %301 = vector.load %arg15[%c0_157, %c0_158] : memref<64x32xbf16, #tpu.memory_space<vmem>>, vector<64x32xbf16>
      %cst_159 = arith.constant dense<0.000000e+00> : vector<16x32xf32>
      %302 = tpu.matmul %300, %301, %cst_159 {dimension_numbers = #tpu.dot_dimension_numbers<[1], [0], [0], [1], [0, 0, 1, 1], [], []>} : vector<16x64xbf16>, vector<64x32xbf16>, vector<16x32xf32> -> vector<16x32xf32>
      %303 = vector.extract_strided_slice %269 {offsets = [8, 0], sizes = [1, 32], strides = [1, 1]} : vector<9x32xf32> to vector<1x32xf32>
      %304 = vector.broadcast %303 : vector<1x32xf32> to vector<16x32xf32>
      %305 = arith.addf %302, %304 : vector<16x32xf32>
      %306 = vector.extract_strided_slice %269 {offsets = [3, 0], sizes = [1, 32], strides = [1, 1]} : vector<9x32xf32> to vector<1x32xf32>
      %c1_i32_160 = arith.constant 1 : i32
      %307 = tpu.dynamic_rotate %305 by %c1_i32_160 dim 0 : vector<16x32xf32>, i32 -> vector<16x32xf32>
      %308 = tpu.iota {dimensions = array<i32: 0>} : vector<16x32xi32>
      %c16_i32 = arith.constant 16 : i32
      %c0_i32_161 = arith.constant 0 : i32
      %309 = arith.cmpi eq, %c16_i32, %c0_i32_161 : i32
      %c1_i32_162 = arith.constant 1 : i32
      %310 = arith.select %309, %c1_i32_162, %c16_i32 : i32
      %311 = vector.broadcast %310 : i32 to vector<16x32xi32>
      %312 = arith.remsi %308, %311 : vector<16x32xi32>
      %c0_i32_163 = arith.constant 0 : i32
      %313 = vector.broadcast %c0_i32_163 : i32 to vector<16x32xi32>
      %314 = arith.cmpi ne, %312, %313 : vector<16x32xi32>
      %c0_i32_164 = arith.constant 0 : i32
      %315 = vector.broadcast %c0_i32_164 : i32 to vector<16x32xi32>
      %316 = arith.cmpi slt, %312, %315 : vector<16x32xi32>
      %c0_i32_165 = arith.constant 0 : i32
      %317 = arith.cmpi slt, %310, %c0_i32_165 : i32
      %318 = vector.broadcast %317 : i1 to vector<16x32xi1>
      %319 = vector.broadcast %318 : vector<16x32xi1> to vector<16x32xi1>
      %320 = arith.xori %316, %319 : vector<16x32xi1>
      %321 = arith.andi %320, %314 : vector<16x32xi1>
      %322 = vector.broadcast %310 : i32 to vector<16x32xi32>
      %323 = arith.addi %312, %322 : vector<16x32xi32>
      %324 = arith.select %321, %323, %312 : vector<16x32xi1>, vector<16x32xi32>
      %c-1_i32 = arith.constant -1 : i32
      %325 = vector.broadcast %c-1_i32 : i32 to vector<16x32xi32>
      %326 = arith.addi %324, %325 : vector<16x32xi32>
      %c0_i32_166 = arith.constant 0 : i32
      %327 = vector.broadcast %c0_i32_166 : i32 to vector<16x32xi32>
      %328 = arith.cmpi sge, %326, %327 : vector<16x32xi32>
      %c-1_i32_167 = arith.constant -1 : i32
      %329 = vector.broadcast %c-1_i32_167 : i32 to vector<16x32xi32>
      %330 = arith.addi %324, %329 : vector<16x32xi32>
      %c16_i32_168 = arith.constant 16 : i32
      %331 = vector.broadcast %c16_i32_168 : i32 to vector<16x32xi32>
      %332 = arith.cmpi slt, %330, %331 : vector<16x32xi32>
      %333 = arith.andi %328, %332 : vector<16x32xi1>
      %cst_169 = arith.constant 0.000000e+00 : f32
      %334 = vector.broadcast %cst_169 : f32 to vector<16x32xf32>
      %335 = arith.select %333, %307, %334 : vector<16x32xi1>, vector<16x32xf32>
      %336 = arith.truncf %335 : vector<16x32xf32> to vector<16x32xbf16>
      %c0_170 = arith.constant 0 : index
      %c0_171 = arith.constant 0 : index
      %c0_172 = arith.constant 0 : index
      %337 = vector.load %arg16[%c0_170, %c0_171, %c0_172] : memref<3x32x32xbf16, #tpu.memory_space<vmem>>, vector<1x32x32xbf16>
      %338 = vector.shape_cast %337 : vector<1x32x32xbf16> to vector<32x32xbf16>
      %cst_173 = arith.constant dense<0.000000e+00> : vector<16x32xf32>
      %339 = tpu.matmul %336, %338, %cst_173 {dimension_numbers = #tpu.dot_dimension_numbers<[1], [0], [0], [1], [0, 0, 1, 1], [], []>} : vector<16x32xbf16>, vector<32x32xbf16>, vector<16x32xf32> -> vector<16x32xf32>
      %340 = arith.truncf %305 : vector<16x32xf32> to vector<16x32xbf16>
      %c1_174 = arith.constant 1 : index
      %c0_175 = arith.constant 0 : index
      %c0_176 = arith.constant 0 : index
      %341 = vector.load %arg16[%c1_174, %c0_175, %c0_176] : memref<3x32x32xbf16, #tpu.memory_space<vmem>>, vector<1x32x32xbf16>
      %342 = vector.shape_cast %341 : vector<1x32x32xbf16> to vector<32x32xbf16>
      %cst_177 = arith.constant dense<0.000000e+00> : vector<16x32xf32>
      %343 = tpu.matmul %340, %342, %cst_177 {dimension_numbers = #tpu.dot_dimension_numbers<[1], [0], [0], [1], [0, 0, 1, 1], [], []>} : vector<16x32xbf16>, vector<32x32xbf16>, vector<16x32xf32> -> vector<16x32xf32>
      %344 = arith.addf %339, %343 : vector<16x32xf32>
      %c15_i32 = arith.constant 15 : i32
      %345 = tpu.dynamic_rotate %305 by %c15_i32 dim 0 : vector<16x32xf32>, i32 -> vector<16x32xf32>
      %346 = tpu.iota {dimensions = array<i32: 0>} : vector<16x32xi32>
      %c16_i32_178 = arith.constant 16 : i32
      %c0_i32_179 = arith.constant 0 : i32
      %347 = arith.cmpi eq, %c16_i32_178, %c0_i32_179 : i32
      %c1_i32_180 = arith.constant 1 : i32
      %348 = arith.select %347, %c1_i32_180, %c16_i32_178 : i32
      %349 = vector.broadcast %348 : i32 to vector<16x32xi32>
      %350 = arith.remsi %346, %349 : vector<16x32xi32>
      %c0_i32_181 = arith.constant 0 : i32
      %351 = vector.broadcast %c0_i32_181 : i32 to vector<16x32xi32>
      %352 = arith.cmpi ne, %350, %351 : vector<16x32xi32>
      %c0_i32_182 = arith.constant 0 : i32
      %353 = vector.broadcast %c0_i32_182 : i32 to vector<16x32xi32>
      %354 = arith.cmpi slt, %350, %353 : vector<16x32xi32>
      %c0_i32_183 = arith.constant 0 : i32
      %355 = arith.cmpi slt, %348, %c0_i32_183 : i32
      %356 = vector.broadcast %355 : i1 to vector<16x32xi1>
      %357 = vector.broadcast %356 : vector<16x32xi1> to vector<16x32xi1>
      %358 = arith.xori %354, %357 : vector<16x32xi1>
      %359 = arith.andi %358, %352 : vector<16x32xi1>
      %360 = vector.broadcast %348 : i32 to vector<16x32xi32>
      %361 = arith.addi %350, %360 : vector<16x32xi32>
      %362 = arith.select %359, %361, %350 : vector<16x32xi1>, vector<16x32xi32>
      %c1_i32_184 = arith.constant 1 : i32
      %363 = vector.broadcast %c1_i32_184 : i32 to vector<16x32xi32>
      %364 = arith.addi %362, %363 : vector<16x32xi32>
      %c0_i32_185 = arith.constant 0 : i32
      %365 = vector.broadcast %c0_i32_185 : i32 to vector<16x32xi32>
      %366 = arith.cmpi sge, %364, %365 : vector<16x32xi32>
      %c1_i32_186 = arith.constant 1 : i32
      %367 = vector.broadcast %c1_i32_186 : i32 to vector<16x32xi32>
      %368 = arith.addi %362, %367 : vector<16x32xi32>
      %c16_i32_187 = arith.constant 16 : i32
      %369 = vector.broadcast %c16_i32_187 : i32 to vector<16x32xi32>
      %370 = arith.cmpi slt, %368, %369 : vector<16x32xi32>
      %371 = arith.andi %366, %370 : vector<16x32xi1>
      %cst_188 = arith.constant 0.000000e+00 : f32
      %372 = vector.broadcast %cst_188 : f32 to vector<16x32xf32>
      %373 = arith.select %371, %345, %372 : vector<16x32xi1>, vector<16x32xf32>
      %374 = arith.truncf %373 : vector<16x32xf32> to vector<16x32xbf16>
      %c2_189 = arith.constant 2 : index
      %c0_190 = arith.constant 0 : index
      %c0_191 = arith.constant 0 : index
      %375 = vector.load %arg16[%c2_189, %c0_190, %c0_191] : memref<3x32x32xbf16, #tpu.memory_space<vmem>>, vector<1x32x32xbf16>
      %376 = vector.shape_cast %375 : vector<1x32x32xbf16> to vector<32x32xbf16>
      %cst_192 = arith.constant dense<0.000000e+00> : vector<16x32xf32>
      %377 = tpu.matmul %374, %376, %cst_192 {dimension_numbers = #tpu.dot_dimension_numbers<[1], [0], [0], [1], [0, 0, 1, 1], [], []>} : vector<16x32xbf16>, vector<32x32xbf16>, vector<16x32xf32> -> vector<16x32xf32>
      %378 = arith.addf %344, %377 : vector<16x32xf32>
      %379 = vector.broadcast %306 : vector<1x32xf32> to vector<16x32xf32>
      %380 = arith.addf %378, %379 : vector<16x32xf32>
      %381 = vector.extract_strided_slice %269 {offsets = [4, 0], sizes = [1, 32], strides = [1, 1]} : vector<9x32xf32> to vector<1x32xf32>
      %382 = vector.extract_strided_slice %269 {offsets = [5, 0], sizes = [1, 32], strides = [1, 1]} : vector<9x32xf32> to vector<1x32xf32>
      %cst_193 = arith.constant dense<0.000000e+00> : vector<16xf32>
      %383 = vector.multi_reduction <add>, %380, %cst_193 [1] : vector<16x32xf32> to vector<16xf32>
      %384 = vector.shape_cast %383 : vector<16xf32> to vector<16x1xf32>
      %cst_194 = arith.constant 3.200000e+01 : f32
      %385 = vector.broadcast %cst_194 : f32 to vector<16x1xf32>
      %386 = arith.divf %384, %385 : vector<16x1xf32>
      %387 = vector.broadcast %386 : vector<16x1xf32> to vector<16x32xf32>
      %388 = arith.subf %380, %387 : vector<16x32xf32>
      %389 = arith.mulf %388, %388 : vector<16x32xf32>
      %cst_195 = arith.constant dense<0.000000e+00> : vector<16xf32>
      %390 = vector.multi_reduction <add>, %389, %cst_195 [1] : vector<16x32xf32> to vector<16xf32>
      %391 = vector.shape_cast %390 : vector<16xf32> to vector<16x1xf32>
      %cst_196 = arith.constant 3.200000e+01 : f32
      %392 = vector.broadcast %cst_196 : f32 to vector<16x1xf32>
      %393 = arith.divf %391, %392 : vector<16x1xf32>
      %394 = vector.broadcast %386 : vector<16x1xf32> to vector<16x32xf32>
      %395 = arith.subf %380, %394 : vector<16x32xf32>
      %cst_197 = arith.constant 9.99999974E-6 : f32
      %396 = vector.broadcast %cst_197 : f32 to vector<16x1xf32>
      %397 = arith.addf %393, %396 : vector<16x1xf32>
      %398 = math.rsqrt %397 : vector<16x1xf32>
      %399 = vector.broadcast %398 : vector<16x1xf32> to vector<16x32xf32>
      %400 = arith.mulf %395, %399 : vector<16x32xf32>
      %401 = vector.broadcast %381 : vector<1x32xf32> to vector<16x32xf32>
      %402 = arith.mulf %400, %401 : vector<16x32xf32>
      %403 = vector.broadcast %382 : vector<1x32xf32> to vector<16x32xf32>
      %404 = arith.addf %402, %403 : vector<16x32xf32>
      %405 = arith.mulf %404, %404 : vector<16x32xf32>
      %406 = arith.mulf %404, %405 : vector<16x32xf32>
      %cst_198 = arith.constant 4.471500e-02 : f32
      %407 = vector.broadcast %cst_198 : f32 to vector<16x32xf32>
      %408 = arith.mulf %407, %406 : vector<16x32xf32>
      %409 = arith.addf %404, %408 : vector<16x32xf32>
      %cst_199 = arith.constant 0.797884583 : f32
      %410 = vector.broadcast %cst_199 : f32 to vector<16x32xf32>
      %411 = arith.mulf %410, %409 : vector<16x32xf32>
      %412 = math.tanh %411 : vector<16x32xf32>
      %cst_200 = arith.constant 1.000000e+00 : f32
      %413 = vector.broadcast %cst_200 : f32 to vector<16x32xf32>
      %414 = arith.addf %413, %412 : vector<16x32xf32>
      %cst_201 = arith.constant 5.000000e-01 : f32
      %415 = vector.broadcast %cst_201 : f32 to vector<16x32xf32>
      %416 = arith.mulf %415, %414 : vector<16x32xf32>
      %417 = arith.mulf %404, %416 : vector<16x32xf32>
      %418 = vector.extract_strided_slice %269 {offsets = [6, 0], sizes = [1, 32], strides = [1, 1]} : vector<9x32xf32> to vector<1x32xf32>
      %419 = vector.extract_strided_slice %269 {offsets = [7, 0], sizes = [1, 32], strides = [1, 1]} : vector<9x32xf32> to vector<1x32xf32>
      %cst_202 = arith.constant dense<0.000000e+00> : vector<16xf32>
      %420 = vector.multi_reduction <add>, %417, %cst_202 [1] : vector<16x32xf32> to vector<16xf32>
      %421 = vector.shape_cast %420 : vector<16xf32> to vector<16x1xf32>
      %cst_203 = arith.constant 3.200000e+01 : f32
      %422 = vector.broadcast %cst_203 : f32 to vector<16x1xf32>
      %423 = arith.divf %421, %422 : vector<16x1xf32>
      %424 = vector.broadcast %423 : vector<16x1xf32> to vector<16x32xf32>
      %425 = arith.subf %417, %424 : vector<16x32xf32>
      %426 = arith.mulf %425, %425 : vector<16x32xf32>
      %cst_204 = arith.constant dense<0.000000e+00> : vector<16xf32>
      %427 = vector.multi_reduction <add>, %426, %cst_204 [1] : vector<16x32xf32> to vector<16xf32>
      %428 = vector.shape_cast %427 : vector<16xf32> to vector<16x1xf32>
      %cst_205 = arith.constant 3.200000e+01 : f32
      %429 = vector.broadcast %cst_205 : f32 to vector<16x1xf32>
      %430 = arith.divf %428, %429 : vector<16x1xf32>
      %431 = vector.broadcast %423 : vector<16x1xf32> to vector<16x32xf32>
      %432 = arith.subf %417, %431 : vector<16x32xf32>
      %cst_206 = arith.constant 9.99999974E-6 : f32
      %433 = vector.broadcast %cst_206 : f32 to vector<16x1xf32>
      %434 = arith.addf %430, %433 : vector<16x1xf32>
      %435 = math.rsqrt %434 : vector<16x1xf32>
      %436 = vector.broadcast %435 : vector<16x1xf32> to vector<16x32xf32>
      %437 = arith.mulf %432, %436 : vector<16x32xf32>
      %438 = vector.broadcast %418 : vector<1x32xf32> to vector<16x32xf32>
      %439 = arith.mulf %437, %438 : vector<16x32xf32>
      %440 = vector.broadcast %419 : vector<1x32xf32> to vector<16x32xf32>
      %441 = arith.addf %439, %440 : vector<16x32xf32>
      %442 = vector.shape_cast %441 : vector<16x32xf32> to vector<1x16x32xf32>
      %cst_207 = arith.constant 0.000000e+00 : f32
      %443 = vector.broadcast %cst_207 : f32 to vector<1x16x96xf32>
      %444 = tpu.concatenate %442, %443 in 2 : vector<1x16x32xf32>, vector<1x16x96xf32> -> vector<1x16x128xf32>
      %c0_208 = arith.constant 0 : index
      %c0_209 = arith.constant 0 : index
      %c0_210 = arith.constant 0 : index
      %445 = vector.load %arg18[%c0_208, %c0_209, %c0_210] : memref<1x16x128xf32, #tpu.memory_space<vmem>>, vector<1x16x128xf32>
      tpu.vector_store %arg18[%c0_208, %c0_209, %c0_210], %444 {strides = array<i32>} : memref<1x16x128xf32, #tpu.memory_space<vmem>>, vector<1x16x128xf32>,
    } else {
    }
    return
  }
  func.func @transform_0(%arg0: i32, %arg1: i32) -> (i32, i32, i32) {
    %c0_i32 = arith.constant 0 : i32
    %c0_i32_0 = arith.constant 0 : i32
    %c0_i32_1 = arith.constant 0 : i32
    return %arg0, %c0_i32, %c0_i32_0 : i32, i32, i32
  }
  func.func @transform_1(%arg0: i32, %arg1: i32) -> (i32, i32) {
    %c0_i32 = arith.constant 0 : i32
    %c0_i32_0 = arith.constant 0 : i32
    %c0_i32_1 = arith.constant 0 : i32
    return %c0_i32, %c0_i32_0 : i32, i32
  }
  func.func @transform_2(%arg0: i32, %arg1: i32) -> (i32, i32, i32) {
    %c0_i32 = arith.constant 0 : i32
    %c0_i32_0 = arith.constant 0 : i32
    %c0_i32_1 = arith.constant 0 : i32
    %c0_i32_2 = arith.constant 0 : i32
    return %c0_i32, %c0_i32_0, %c0_i32_1 : i32, i32, i32
  }
  func.func @transform_3(%arg0: i32, %arg1: i32) -> (i32, i32, i32, i32) {
    %c0_i32 = arith.constant 0 : i32
    %c0_i32_0 = arith.constant 0 : i32
    %c0_i32_1 = arith.constant 0 : i32
    %c0_i32_2 = arith.constant 0 : i32
    return %arg1, %c0_i32, %c0_i32_0, %c0_i32_1 : i32, i32, i32, i32
  }
  func.func @transform_4(%arg0: i32, %arg1: i32) -> (i32, i32, i32, i32) {
    %c0_i32 = arith.constant 0 : i32
    %c0_i32_0 = arith.constant 0 : i32
    %c0_i32_1 = arith.constant 0 : i32
    %c0_i32_2 = arith.constant 0 : i32
    return %arg1, %c0_i32, %c0_i32_0, %c0_i32_1 : i32, i32, i32, i32
  }
  func.func @transform_5(%arg0: i32, %arg1: i32) -> (i32, i32, i32) {
    %c0_i32 = arith.constant 0 : i32
    %c0_i32_0 = arith.constant 0 : i32
    %c0_i32_1 = arith.constant 0 : i32
    return %arg1, %c0_i32, %c0_i32_0 : i32, i32, i32
  }
  func.func @transform_6(%arg0: i32, %arg1: i32) -> (i32, i32, i32) {
    %c0_i32 = arith.constant 0 : i32
    %c0_i32_0 = arith.constant 0 : i32
    %c0_i32_1 = arith.constant 0 : i32
    return %arg1, %c0_i32, %c0_i32_0 : i32, i32, i32
  }
  func.func @transform_7(%arg0: i32, %arg1: i32) -> (i32, i32, i32) {
    %c0_i32 = arith.constant 0 : i32
    %c0_i32_0 = arith.constant 0 : i32
    %c0_i32_1 = arith.constant 0 : i32
    return %arg1, %c0_i32, %c0_i32_0 : i32, i32, i32
  }
  func.func @transform_8(%arg0: i32, %arg1: i32) -> (i32, i32, i32) {
    %c0_i32 = arith.constant 0 : i32
    %c0_i32_0 = arith.constant 0 : i32
    %c0_i32_1 = arith.constant 0 : i32
    return %arg1, %c0_i32, %c0_i32_0 : i32, i32, i32
  }
  func.func @transform_9(%arg0: i32, %arg1: i32) -> (i32, i32, i32, i32) {
    %c0_i32 = arith.constant 0 : i32
    %c0_i32_0 = arith.constant 0 : i32
    %c0_i32_1 = arith.constant 0 : i32
    %c0_i32_2 = arith.constant 0 : i32
    return %arg1, %c0_i32, %c0_i32_0, %c0_i32_1 : i32, i32, i32, i32
  }
  func.func @transform_10(%arg0: i32, %arg1: i32) -> (i32, i32, i32) {
    %c0_i32 = arith.constant 0 : i32
    %c0_i32_0 = arith.constant 0 : i32
    %c0_i32_1 = arith.constant 0 : i32
    return %arg0, %c0_i32, %c0_i32_0 : i32, i32, i32
  }
  func.func @transform_11(%arg0: i32, %arg1: i32) -> (i32, i32) {
    %c0_i32 = arith.constant 0 : i32
    %c0_i32_0 = arith.constant 0 : i32
    %c0_i32_1 = arith.constant 0 : i32
    return %c0_i32, %c0_i32_0 : i32, i32
  }
  func.func @transform_12(%arg0: i32, %arg1: i32) -> (i32, i32) {
    %c0_i32 = arith.constant 0 : i32
    %c0_i32_0 = arith.constant 0 : i32
    %c0_i32_1 = arith.constant 0 : i32
    return %c0_i32, %c0_i32_0 : i32, i32
  }
  func.func @transform_13(%arg0: i32, %arg1: i32) -> (i32, i32) {
    %c0_i32 = arith.constant 0 : i32
    %c0_i32_0 = arith.constant 0 : i32
    %c0_i32_1 = arith.constant 0 : i32
    return %c0_i32, %c0_i32_0 : i32, i32
  }
  func.func @transform_14(%arg0: i32, %arg1: i32) -> (i32, i32, i32) {
    %c0_i32 = arith.constant 0 : i32
    %c0_i32_0 = arith.constant 0 : i32
    %c0_i32_1 = arith.constant 0 : i32
    %c0_i32_2 = arith.constant 0 : i32
    return %c0_i32, %c0_i32_0, %c0_i32_1 : i32, i32, i32
  }
  func.func @transform_15(%arg0: i32, %arg1: i32) -> (i32, i32) {
    %c0_i32 = arith.constant 0 : i32
    %c0_i32_0 = arith.constant 0 : i32
    %c0_i32_1 = arith.constant 0 : i32
    return %c0_i32, %c0_i32_0 : i32, i32
  }
  func.func @transform_16(%arg0: i32, %arg1: i32) -> (i32, i32, i32) {
    %c0_i32 = arith.constant 0 : i32
    %c0_i32_0 = arith.constant 0 : i32
    %c0_i32_1 = arith.constant 0 : i32
    return %arg0, %c0_i32, %c0_i32_0 : i32, i32, i32
  }
}

</mosaic_0001>

<llo_original>
// kernel: fwd.1
$region0: #{fwd.1}
  #allocation0 [shape = 'u32[]', space=smem, size = 0x4, offset = 0x4, fixed_abs, tag = 'smem constant byte address 0x4 - core index']
  #allocation1 [shape = 'u32[72,128]{1,0:T(1,128)}', space=vmem, size = 0x9000, scoped, tag = 'internal scratch']
  #allocation2 [shape = 'f32[1,16,32]{2,1,0:T(8,128)}', space=vmem, size = 0x2000, scoped, tag = 'scratch operand']
  %s0 = inlined_call_operand.vmem [shape: f32[2,16,24], index: 0, kind: input, shape index: {}]
  %s1 = inlined_call_operand.vmem [shape: f32[16,32], index: 1, kind: input, shape index: {}]
  %s2 = inlined_call_operand.vmem [shape: bf16[3,24,32], index: 2, kind: input, shape index: {}]
  %s3 = inlined_call_operand.vmem [shape: bf16[2,12,32,8], index: 3, kind: input, shape index: {}]
  %s4 = inlined_call_operand.vmem [shape: bf16[2,4,8,32], index: 4, kind: input, shape index: {}]
  %s5 = inlined_call_operand.vmem [shape: bf16[2,32,128], index: 5, kind: input, shape index: {}]
  %s6 = inlined_call_operand.vmem [shape: bf16[2,128,32], index: 6, kind: input, shape index: {}]
  %s7 = inlined_call_operand.vmem [shape: f32[2,9,32], index: 7, kind: input, shape index: {}]
  %s8 = inlined_call_operand.vmem [shape: f32[2,1,128], index: 8, kind: input, shape index: {}]
  %s9 = inlined_call_operand.vmem [shape: f32[2,4,16,16], index: 9, kind: input, shape index: {}]
  %s10 = inlined_call_operand.vmem [shape: f32[2,2,32], index: 10, kind: input, shape index: {}]
  %s11 = inlined_call_operand.vmem [shape: bf16[32,64], index: 11, kind: input, shape index: {}]
  %s12 = inlined_call_operand.vmem [shape: f32[1,64], index: 12, kind: input, shape index: {}]
  %s13 = inlined_call_operand.vmem [shape: bf16[64,32], index: 13, kind: input, shape index: {}]
  %s14 = inlined_call_operand.vmem [shape: bf16[3,32,32], index: 14, kind: input, shape index: {}]
  %s15 = inlined_call_operand.vmem [shape: f32[9,32], index: 15, kind: input, shape index: {}]
  %s16 = inlined_call_operand.vmem [shape: f32[2,16,128], index: 16, kind: output, shape index: {}]
  %s17 = sld [smem:[#allocation0]]
  $region105: #{fwd.1} parent=0
    _
  %s19 = ssub.s32 1, %s17
  %s20 = scalar_select 0, %s19, %s17
  loop: start=0, step=1, limit=6
  $region2: #{fwd.1} parent=0 // loop_pre_header
    _
  $region3: #{fwd.1} parent=0 // loop_header
    %s22 = sphi 0, %s26
    %p23 = scmp.ge.s32.totalorder %s22, 6
    %s29 = sphi 0, %s41
    %s30 = sphi 0, %s37
    %s31 = sphi 0, %s29
    %s32 = sphi 0, %s30
    %s33 = sphi 0, %s31
    %s34 = sphi 0, %s32
    %s44 = sphi 0, %s46
    %s47 = sphi 0, %s44
    %s48 = sphi 0, %s47
    %s64 = sphi 0, %s48
    %s68 = sphi 0, %s68
    %s70 = sphi 0, %s68
    %s71 = sphi 0, %s70
    %s85 = sphi 0, %s71
    %s89 = sphi 0, %s89
    %s91 = sphi 0, %s89
    %s92 = sphi 0, %s91
    %s106 = sphi 0, %s92
    %s112 = sphi 0, %s114
    %s115 = sphi 0, %s112
    %s116 = sphi 0, %s115
    %s132 = sphi 0, %s116
    %s138 = sphi 0, %s140
    %s141 = sphi 0, %s138
    %s142 = sphi 0, %s141
    %s158 = sphi 0, %s142
    %s164 = sphi 0, %s166
    %s167 = sphi 0, %s164
    %s168 = sphi 0, %s167
    %s184 = sphi 0, %s168
    %s190 = sphi 0, %s192
    %s193 = sphi 0, %s190
    %s194 = sphi 0, %s193
    %s210 = sphi 0, %s194
    %s216 = sphi 0, %s218
    %s219 = sphi 0, %s216
    %s220 = sphi 0, %s219
    %s236 = sphi 0, %s220
    %s242 = sphi 0, %s244
    %s245 = sphi 0, %s242
    %s246 = sphi 0, %s245
    %s262 = sphi 0, %s246
    %s268 = sphi 0, %s270
    %s271 = sphi 0, %s268
    %s272 = sphi 0, %s271
    %s288 = sphi 0, %s272
    %s294 = sphi 0, %s296
    %s297 = sphi 0, %s294
    %s298 = sphi 0, %s297
    %s314 = sphi 0, %s298
    %s318 = sphi 0, %s318
    %s320 = sphi 0, %s318
    %s321 = sphi 0, %s320
    %s335 = sphi 0, %s321
    %s339 = sphi 0, %s339
    %s341 = sphi 0, %s339
    %s342 = sphi 0, %s341
    %s356 = sphi 0, %s342
    %s360 = sphi 0, %s360
    %s362 = sphi 0, %s360
    %s363 = sphi 0, %s362
    %s377 = sphi 0, %s363
    %s381 = sphi 0, %s381
    %s383 = sphi 0, %s381
    %s384 = sphi 0, %s383
    %s398 = sphi 0, %s384
    %s402 = sphi 0, %s402
    %s404 = sphi 0, %s402
    %s405 = sphi 0, %s404
    %s419 = sphi 0, %s405
    %s425 = sphi 0, %s427
    %s428 = sphi 0, %s425
    %s429 = sphi 0, %s428
    %s445 = sphi 0, %s429
  $region4: #{fwd.1} parent=0 // loop_header_branch
    %25 = sbr.rel (%p23) target = $region8
  $region5: #{fwd.1} parent=0 // loop_body
    %s27 = ssub.s32 %s22, 1
    %s28 = ssub.s32 %s22, 2
    %s35 = sadd.s32 1, %s30
    %p36 = scmp.ge.s32.totalorder %s35, 2
    %s37 = scalar_select %p36, 0, %s35
    %s38 = sadd.s32 1, %s29
    %s39 = scalar_select %p36, %s38, %s29
    %p40 = scmp.ge.s32.totalorder %s39, 2
    %s41 = scalar_select %p40, 0, %s39
    %s42 = ssub.s32 %s29, %s41
    %p43 = scmp.eq.s32.totalorder %s42, 0
    %s45 = sadd.s32 %s44, 1
    %s46 = scalar_select %p43, %s44, %s45
    %p49 = pneg %p43
    %p50 = scmp.eq.s32.totalorder %s22, 3
    %p51 = por %p49, %p50
    %p52 = scmp.ne.s32.totalorder %s44, %s47
    %p53 = scmp.eq.s32.totalorder %s22, 0
    %p54 = por %p52, %p53
    %p55 = scmp.ne.s32.totalorder %s44, %s47
    %p56 = scmp.eq.s32.totalorder %s27, 3
    %p57 = por %p55, %p56
    %p58 = scmp.ne.s32.totalorder %s47, %s48
    %p59 = scmp.eq.s32.totalorder %s27, 0
    %p60 = por %p58, %p59
    %p61 = scmp.ne.s32.totalorder %s47, %s48
    %p62 = scmp.eq.s32.totalorder %s28, 3
    %p63 = por %p61, %p62
    %p65 = scmp.ne.s32.totalorder %s48, %s64
    %p66 = scmp.eq.s32.totalorder %s28, 0
    %p67 = por %p65, %p66
    %s69 = sadd.s32 %s68, 1
    %p72 = scmp.eq.s32.totalorder %s22, 3
    %p73 = scmp.ne.s32.totalorder %s68, %s70
    %p74 = scmp.eq.s32.totalorder %s22, 0
    %p75 = por %p73, %p74
    %p76 = scmp.ne.s32.totalorder %s68, %s70
    %p77 = scmp.eq.s32.totalorder %s27, 3
    %p78 = por %p76, %p77
    %p79 = scmp.ne.s32.totalorder %s70, %s71
    %p80 = scmp.eq.s32.totalorder %s27, 0
    %p81 = por %p79, %p80
    %p82 = scmp.ne.s32.totalorder %s70, %s71
    %p83 = scmp.eq.s32.totalorder %s28, 3
    %p84 = por %p82, %p83
    %p86 = scmp.ne.s32.totalorder %s71, %s85
    %p87 = scmp.eq.s32.totalorder %s28, 0
    %p88 = por %p86, %p87
    %s90 = sadd.s32 %s89, 1
    %p93 = scmp.eq.s32.totalorder %s22, 3
    %p94 = scmp.ne.s32.totalorder %s89, %s91
    %p95 = scmp.eq.s32.totalorder %s22, 0
    %p96 = por %p94, %p95
    %p97 = scmp.ne.s32.totalorder %s89, %s91
    %p98 = scmp.eq.s32.totalorder %s27, 3
    %p99 = por %p97, %p98
    %p100 = scmp.ne.s32.totalorder %s91, %s92
    %p101 = scmp.eq.s32.totalorder %s27, 0
    %p102 = por %p100, %p101
    %p103 = scmp.ne.s32.totalorder %s91, %s92
    %p104 = scmp.eq.s32.totalorder %s28, 3
    %p105 = por %p103, %p104
    %p107 = scmp.ne.s32.totalorder %s92, %s106
    %p108 = scmp.eq.s32.totalorder %s28, 0
    %p109 = por %p107, %p108
    %s110 = ssub.s32 %s30, %s37
    %p111 = scmp.eq.s32.totalorder %s110, 0
    %s113 = sadd.s32 %s112, 1
    %s114 = scalar_select %p111, %s112, %s113
    %p117 = pneg %p111
    %p118 = scmp.eq.s32.totalorder %s22, 3
    %p119 = por %p117, %p118
    %p120 = scmp.ne.s32.totalorder %s112, %s115
    %p121 = scmp.eq.s32.totalorder %s22, 0
    %p122 = por %p120, %p121
    %p123 = scmp.ne.s32.totalorder %s112, %s115
    %p124 = scmp.eq.s32.totalorder %s27, 3
    %p125 = por %p123, %p124
    %p126 = scmp.ne.s32.totalorder %s115, %s116
    %p127 = scmp.eq.s32.totalorder %s27, 0
    %p128 = por %p126, %p127
    %p129 = scmp.ne.s32.totalorder %s115, %s116
    %p130 = scmp.eq.s32.totalorder %s28, 3
    %p131 = por %p129, %p130
    %p133 = scmp.ne.s32.totalorder %s116, %s132
    %p134 = scmp.eq.s32.totalorder %s28, 0
    %p135 = por %p133, %p134
    %s136 = ssub.s32 %s30, %s37
    %p137 = scmp.eq.s32.totalorder %s136, 0
    %s139 = sadd.s32 %s138, 1
    %s140 = scalar_select %p137, %s138, %s139
    %p143 = pneg %p137
    %p144 = scmp.eq.s32.totalorder %s22, 3
    %p145 = por %p143, %p144
    %p146 = scmp.ne.s32.totalorder %s138, %s141
    %p147 = scmp.eq.s32.totalorder %s22, 0
    %p148 = por %p146, %p147
    %p149 = scmp.ne.s32.totalorder %s138, %s141
    %p150 = scmp.eq.s32.totalorder %s27, 3
    %p151 = por %p149, %p150
    %p152 = scmp.ne.s32.totalorder %s141, %s142
    %p153 = scmp.eq.s32.totalorder %s27, 0
    %p154 = por %p152, %p153
    %p155 = scmp.ne.s32.totalorder %s141, %s142
    %p156 = scmp.eq.s32.totalorder %s28, 3
    %p157 = por %p155, %p156
    %p159 = scmp.ne.s32.totalorder %s142, %s158
    %p160 = scmp.eq.s32.totalorder %s28, 0
    %p161 = por %p159, %p160
    %s162 = ssub.s32 %s30, %s37
    %p163 = scmp.eq.s32.totalorder %s162, 0
    %s165 = sadd.s32 %s164, 1
    %s166 = scalar_select %p163, %s164, %s165
    %p169 = pneg %p163
    %p170 = scmp.eq.s32.totalorder %s22, 3
    %p171 = por %p169, %p170
    %p172 = scmp.ne.s32.totalorder %s164, %s167
    %p173 = scmp.eq.s32.totalorder %s22, 0
    %p174 = por %p172, %p173
    %p175 = scmp.ne.s32.totalorder %s164, %s167
    %p176 = scmp.eq.s32.totalorder %s27, 3
    %p177 = por %p175, %p176
    %p178 = scmp.ne.s32.totalorder %s167, %s168
    %p179 = scmp.eq.s32.totalorder %s27, 0
    %p180 = por %p178, %p179
    %p181 = scmp.ne.s32.totalorder %s167, %s168
    %p182 = scmp.eq.s32.totalorder %s28, 3
    %p183 = por %p181, %p182
    %p185 = scmp.ne.s32.totalorder %s168, %s184
    %p186 = scmp.eq.s32.totalorder %s28, 0
    %p187 = por %p185, %p186
    %s188 = ssub.s32 %s30, %s37
    %p189 = scmp.eq.s32.totalorder %s188, 0
    %s191 = sadd.s32 %s190, 1
    %s192 = scalar_select %p189, %s190, %s191
    %p195 = pneg %p189
    %p196 = scmp.eq.s32.totalorder %s22, 3
    %p197 = por %p195, %p196
    %p198 = scmp.ne.s32.totalorder %s190, %s193
    %p199 = scmp.eq.s32.totalorder %s22, 0
    %p200 = por %p198, %p199
    %p201 = scmp.ne.s32.totalorder %s190, %s193
    %p202 = scmp.eq.s32.totalorder %s27, 3
    %p203 = por %p201, %p202
    %p204 = scmp.ne.s32.totalorder %s193, %s194
    %p205 = scmp.eq.s32.totalorder %s27, 0
    %p206 = por %p204, %p205
    %p207 = scmp.ne.s32.totalorder %s193, %s194
    %p208 = scmp.eq.s32.totalorder %s28, 3
    %p209 = por %p207, %p208
    %p211 = scmp.ne.s32.totalorder %s194, %s210
    %p212 = scmp.eq.s32.totalorder %s28, 0
    %p213 = por %p211, %p212
    %s214 = ssub.s32 %s30, %s37
    %p215 = scmp.eq.s32.totalorder %s214, 0
    %s217 = sadd.s32 %s216, 1
    %s218 = scalar_select %p215, %s216, %s217
    %p221 = pneg %p215
    %p222 = scmp.eq.s32.totalorder %s22, 3
    %p223 = por %p221, %p222
    %p224 = scmp.ne.s32.totalorder %s216, %s219
    %p225 = scmp.eq.s32.totalorder %s22, 0
    %p226 = por %p224, %p225
    %p227 = scmp.ne.s32.totalorder %s216, %s219
    %p228 = scmp.eq.s32.totalorder %s27, 3
    %p229 = por %p227, %p228
    %p230 = scmp.ne.s32.totalorder %s219, %s220
    %p231 = scmp.eq.s32.totalorder %s27, 0
    %p232 = por %p230, %p231
    %p233 = scmp.ne.s32.totalorder %s219, %s220
    %p234 = scmp.eq.s32.totalorder %s28, 3
    %p235 = por %p233, %p234
    %p237 = scmp.ne.s32.totalorder %s220, %s236
    %p238 = scmp.eq.s32.totalorder %s28, 0
    %p239 = por %p237, %p238
    %s240 = ssub.s32 %s30, %s37
    %p241 = scmp.eq.s32.totalorder %s240, 0
    %s243 = sadd.s32 %s242, 1
    %s244 = scalar_select %p241, %s242, %s243
    %p247 = pneg %p241
    %p248 = scmp.eq.s32.totalorder %s22, 3
    %p249 = por %p247, %p248
    %p250 = scmp.ne.s32.totalorder %s242, %s245
    %p251 = scmp.eq.s32.totalorder %s22, 0
    %p252 = por %p250, %p251
    %p253 = scmp.ne.s32.totalorder %s242, %s245
    %p254 = scmp.eq.s32.totalorder %s27, 3
    %p255 = por %p253, %p254
    %p256 = scmp.ne.s32.totalorder %s245, %s246
    %p257 = scmp.eq.s32.totalorder %s27, 0
    %p258 = por %p256, %p257
    %p259 = scmp.ne.s32.totalorder %s245, %s246
    %p260 = scmp.eq.s32.totalorder %s28, 3
    %p261 = por %p259, %p260
    %p263 = scmp.ne.s32.totalorder %s246, %s262
    %p264 = scmp.eq.s32.totalorder %s28, 0
    %p265 = por %p263, %p264
    %s266 = ssub.s32 %s30, %s37
    %p267 = scmp.eq.s32.totalorder %s266, 0
    %s269 = sadd.s32 %s268, 1
    %s270 = scalar_select %p267, %s268, %s269
    %p273 = pneg %p267
    %p274 = scmp.eq.s32.totalorder %s22, 3
    %p275 = por %p273, %p274
    %p276 = scmp.ne.s32.totalorder %s268, %s271
    %p277 = scmp.eq.s32.totalorder %s22, 0
    %p278 = por %p276, %p277
    %p279 = scmp.ne.s32.totalorder %s268, %s271
    %p280 = scmp.eq.s32.totalorder %s27, 3
    %p281 = por %p279, %p280
    %p282 = scmp.ne.s32.totalorder %s271, %s272
    %p283 = scmp.eq.s32.totalorder %s27, 0
    %p284 = por %p282, %p283
    %p285 = scmp.ne.s32.totalorder %s271, %s272
    %p286 = scmp.eq.s32.totalorder %s28, 3
    %p287 = por %p285, %p286
    %p289 = scmp.ne.s32.totalorder %s272, %s288
    %p290 = scmp.eq.s32.totalorder %s28, 0
    %p291 = por %p289, %p290
    %s292 = ssub.s32 %s29, %s41
    %p293 = scmp.eq.s32.totalorder %s292, 0
    %s295 = sadd.s32 %s294, 1
    %s296 = scalar_select %p293, %s294, %s295
    %p299 = pneg %p293
    %p300 = scmp.eq.s32.totalorder %s22, 3
    %p301 = por %p299, %p300
    %p302 = scmp.ne.s32.totalorder %s294, %s297
    %p303 = scmp.eq.s32.totalorder %s22, 0
    %p304 = por %p302, %p303
    %p305 = scmp.ne.s32.totalorder %s294, %s297
    %p306 = scmp.eq.s32.totalorder %s27, 3
    %p307 = por %p305, %p306
    %p308 = scmp.ne.s32.totalorder %s297, %s298
    %p309 = scmp.eq.s32.totalorder %s27, 0
    %p310 = por %p308, %p309
    %p311 = scmp.ne.s32.totalorder %s297, %s298
    %p312 = scmp.eq.s32.totalorder %s28, 3
    %p313 = por %p311, %p312
    %p315 = scmp.ne.s32.totalorder %s298, %s314
    %p316 = scmp.eq.s32.totalorder %s28, 0
    %p317 = por %p315, %p316
    %s319 = sadd.s32 %s318, 1
    %p322 = scmp.eq.s32.totalorder %s22, 3
    %p323 = scmp.ne.s32.totalorder %s318, %s320
    %p324 = scmp.eq.s32.totalorder %s22, 0
    %p325 = por %p323, %p324
    %p326 = scmp.ne.s32.totalorder %s318, %s320
    %p327 = scmp.eq.s32.totalorder %s27, 3
    %p328 = por %p326, %p327
    %p329 = scmp.ne.s32.totalorder %s320, %s321
    %p330 = scmp.eq.s32.totalorder %s27, 0
    %p331 = por %p329, %p330
    %p332 = scmp.ne.s32.totalorder %s320, %s321
    %p333 = scmp.eq.s32.totalorder %s28, 3
    %p334 = por %p332, %p333
    %p336 = scmp.ne.s32.totalorder %s321, %s335
    %p337 = scmp.eq.s32.totalorder %s28, 0
    %p338 = por %p336, %p337
    %s340 = sadd.s32 %s339, 1
    %p343 = scmp.eq.s32.totalorder %s22, 3
    %p344 = scmp.ne.s32.totalorder %s339, %s341
    %p345 = scmp.eq.s32.totalorder %s22, 0
    %p346 = por %p344, %p345
    %p347 = scmp.ne.s32.totalorder %s339, %s341
    %p348 = scmp.eq.s32.totalorder %s27, 3
    %p349 = por %p347, %p348
    %p350 = scmp.ne.s32.totalorder %s341, %s342
    %p351 = scmp.eq.s32.totalorder %s27, 0
    %p352 = por %p350, %p351
    %p353 = scmp.ne.s32.totalorder %s341, %s342
    %p354 = scmp.eq.s32.totalorder %s28, 3
    %p355 = por %p353, %p354
    %p357 = scmp.ne.s32.totalorder %s342, %s356
    %p358 = scmp.eq.s32.totalorder %s28, 0
    %p359 = por %p357, %p358
    %s361 = sadd.s32 %s360, 1
    %p364 = scmp.eq.s32.totalorder %s22, 3
    %p365 = scmp.ne.s32.totalorder %s360, %s362
    %p366 = scmp.eq.s32.totalorder %s22, 0
    %p367 = por %p365, %p366
    %p368 = scmp.ne.s32.totalorder %s360, %s362
    %p369 = scmp.eq.s32.totalorder %s27, 3
    %p370 = por %p368, %p369
    %p371 = scmp.ne.s32.totalorder %s362, %s363
    %p372 = scmp.eq.s32.totalorder %s27, 0
    %p373 = por %p371, %p372
    %p374 = scmp.ne.s32.totalorder %s362, %s363
    %p375 = scmp.eq.s32.totalorder %s28, 3
    %p376 = por %p374, %p375
    %p378 = scmp.ne.s32.totalorder %s363, %s377
    %p379 = scmp.eq.s32.totalorder %s28, 0
    %p380 = por %p378, %p379
    %s382 = sadd.s32 %s381, 1
    %p385 = scmp.eq.s32.totalorder %s22, 3
    %p386 = scmp.ne.s32.totalorder %s381, %s383
    %p387 = scmp.eq.s32.totalorder %s22, 0
    %p388 = por %p386, %p387
    %p389 = scmp.ne.s32.totalorder %s381, %s383
    %p390 = scmp.eq.s32.totalorder %s27, 3
    %p391 = por %p389, %p390
    %p392 = scmp.ne.s32.totalorder %s383, %s384
    %p393 = scmp.eq.s32.totalorder %s27, 0
    %p394 = por %p392, %p393
    %p395 = scmp.ne.s32.totalorder %s383, %s384
    %p396 = scmp.eq.s32.totalorder %s28, 3
    %p397 = por %p395, %p396
    %p399 = scmp.ne.s32.totalorder %s384, %s398
    %p400 = scmp.eq.s32.totalorder %s28, 0
    %p401 = por %p399, %p400
    %s403 = sadd.s32 %s402, 1
    %p406 = scmp.eq.s32.totalorder %s22, 3
    %p407 = scmp.ne.s32.totalorder %s402, %s404
    %p408 = scmp.eq.s32.totalorder %s22, 0
    %p409 = por %p407, %p408
    %p410 = scmp.ne.s32.totalorder %s402, %s404
    %p411 = scmp.eq.s32.totalorder %s27, 3
    %p412 = por %p410, %p411
    %p413 = scmp.ne.s32.totalorder %s404, %s405
    %p414 = scmp.eq.s32.totalorder %s27, 0
    %p415 = por %p413, %p414
    %p416 = scmp.ne.s32.totalorder %s404, %s405
    %p417 = scmp.eq.s32.totalorder %s28, 3
    %p418 = por %p416, %p417
    %p420 = scmp.ne.s32.totalorder %s405, %s419
    %p421 = scmp.eq.s32.totalorder %s28, 0
    %p422 = por %p420, %p421
    %s423 = ssub.s32 %s29, %s41
    %p424 = scmp.eq.s32.totalorder %s423, 0
    %s426 = sadd.s32 %s425, 1
    %s427 = scalar_select %p424, %s425, %s426
    %p430 = pneg %p424
    %p431 = scmp.eq.s32.totalorder %s22, 3
    %p432 = por %p430, %p431
    %p433 = scmp.ne.s32.totalorder %s425, %s428
    %p434 = scmp.eq.s32.totalorder %s22, 0
    %p435 = por %p433, %p434
    %p436 = scmp.ne.s32.totalorder %s425, %s428
    %p437 = scmp.eq.s32.totalorder %s27, 3
    %p438 = por %p436, %p437
    %p439 = scmp.ne.s32.totalorder %s428, %s429
    %p440 = scmp.eq.s32.totalorder %s27, 0
    %p441 = por %p439, %p440
    %p442 = scmp.ne.s32.totalorder %s428, %s429
    %p443 = scmp.eq.s32.totalorder %s28, 3
    %p444 = por %p442, %p443
    %p446 = scmp.ne.s32.totalorder %s429, %s445
    %p447 = scmp.eq.s32.totalorder %s28, 0
    %p448 = por %p446, %p447
    %p449 = scmp.le.s32.totalorder 1, %s22
    %p450 = scmp.lt.s32.totalorder %s22, 5
    %p451 = pnand %p449, %p450
    %p452 = pneg %p451
    // Predicated region
    $region9: #{fwd.1} parent=5 // pred_check
      _
    $region10: #{fwd.1} parent=5 // pred_check_branch
      %454 = sbr.rel (%p451) target = $region12
    $region11: #{fwd.1} parent=5 // pred_region
      %s455 = ssub.s32 %s22, 1
      // Predicated region
      $region13: #{fwd.1} parent=11 // pred_check
        %p456 = pneg %p81
      $region14: #{fwd.1} parent=11 // pred_check_branch
        %458 = sbr.rel (%p456) target = $region16
      $region15: #{fwd.1} parent=11 // pred_region
        _
      $region16: #{fwd.1} parent=11 // pred_fallthru
        _
      // Predicated region
      $region17: #{fwd.1} parent=11 // pred_check
        %p459 = pneg %p102
      $region18: #{fwd.1} parent=11 // pred_check_branch
        %461 = sbr.rel (%p459) target = $region20
      $region19: #{fwd.1} parent=11 // pred_region
        _
      $region20: #{fwd.1} parent=11 // pred_fallthru
        _
      // Predicated region
      $region21: #{fwd.1} parent=11 // pred_check
        %p462 = pneg %p331
      $region22: #{fwd.1} parent=11 // pred_check_branch
        %464 = sbr.rel (%p462) target = $region24
      $region23: #{fwd.1} parent=11 // pred_region
        _
      $region24: #{fwd.1} parent=11 // pred_fallthru
        _
      // Predicated region
      $region25: #{fwd.1} parent=11 // pred_check
        %p465 = pneg %p352
      $region26: #{fwd.1} parent=11 // pred_check_branch
        %467 = sbr.rel (%p465) target = $region28
      $region27: #{fwd.1} parent=11 // pred_region
        _
      $region28: #{fwd.1} parent=11 // pred_fallthru
        _
      // Predicated region
      $region29: #{fwd.1} parent=11 // pred_check
        %p468 = pneg %p373
      $region30: #{fwd.1} parent=11 // pred_check_branch
        %470 = sbr.rel (%p468) target = $region32
      $region31: #{fwd.1} parent=11 // pred_region
        _
      $region32: #{fwd.1} parent=11 // pred_fallthru
        _
      // Predicated region
      $region33: #{fwd.1} parent=11 // pred_check
        %p471 = pneg %p394
      $region34: #{fwd.1} parent=11 // pred_check_branch
        %473 = sbr.rel (%p471) target = $region36
      $region35: #{fwd.1} parent=11 // pred_region
        _
      $region36: #{fwd.1} parent=11 // pred_fallthru
        _
      // Predicated region
      $region37: #{fwd.1} parent=11 // pred_check
        %p474 = pneg %p415
      $region38: #{fwd.1} parent=11 // pred_check_branch
        %476 = sbr.rel (%p474) target = $region40
      $region39: #{fwd.1} parent=11 // pred_region
        _
      $region40: #{fwd.1} parent=11 // pred_fallthru
        _
    $region12: #{fwd.1} parent=5 // pred_fallthru
      _
    %p477 = scmp.lt.s32.totalorder %s22, 4
    // Predicated region
    $region41: #{fwd.1} parent=5 // pred_check
      %p478 = pneg %p477
    $region42: #{fwd.1} parent=5 // pred_check_branch
      %480 = sbr.rel (%p478) target = $region44
    $region43: #{fwd.1} parent=5 // pred_region
      // Predicated region
      $region45: #{fwd.1} parent=43 // pred_check
        %p481 = pneg %p54
      $region46: #{fwd.1} parent=43 // pred_check_branch
        %483 = sbr.rel (%p481) target = $region48
      $region47: #{fwd.1} parent=43 // pred_region
        %p484 = scmp.lt.s32.totalorder %s29, 1
        %s485 = scalar_select %p484, %s29, 1
        %s486 = smul.addr %s485, 2
        %s487 = smul.addr %s486, 8
        %s488 = scalar_lea.vmem %s0, %s487
      $region48: #{fwd.1} parent=43 // pred_fallthru
        _
      // Predicated region
      $region49: #{fwd.1} parent=43 // pred_check
        %p489 = pneg %p122
      $region50: #{fwd.1} parent=43 // pred_check_branch
        %491 = sbr.rel (%p489) target = $region52
      $region51: #{fwd.1} parent=43 // pred_region
        %p492 = scmp.lt.s32.totalorder %s30, 1
        %s493 = scalar_select %p492, %s30, 1
        %s494 = smul.addr %s493, 48
        %s495 = smul.addr %s494, 4
        %s496 = scalar_lea.vmem %s3, %s495
      $region52: #{fwd.1} parent=43 // pred_fallthru
        _
      // Predicated region
      $region53: #{fwd.1} parent=43 // pred_check
        %p497 = pneg %p148
      $region54: #{fwd.1} parent=43 // pred_check_branch
        %499 = sbr.rel (%p497) target = $region56
      $region55: #{fwd.1} parent=43 // pred_region
        %p500 = scmp.lt.s32.totalorder %s30, 1
        %s501 = scalar_select %p500, %s30, 1
        %s502 = smul.addr %s501, 4
        %s503 = smul.addr %s502, 4
        %s504 = scalar_lea.vmem %s4, %s503
      $region56: #{fwd.1} parent=43 // pred_fallthru
        _
      // Predicated region
      $region57: #{fwd.1} parent=43 // pred_check
        %p505 = pneg %p174
      $region58: #{fwd.1} parent=43 // pred_check_branch
        %507 = sbr.rel (%p505) target = $region60
      $region59: #{fwd.1} parent=43 // pred_region
        %p508 = scmp.lt.s32.totalorder %s30, 1
        %s509 = scalar_select %p508, %s30, 1
        %s510 = smul.addr %s509, 4
        %s511 = smul.addr %s510, 4
        %s512 = scalar_lea.vmem %s5, %s511
      $region60: #{fwd.1} parent=43 // pred_fallthru
        _
      // Predicated region
      $region61: #{fwd.1} parent=43 // pred_check
        %p513 = pneg %p200
      $region62: #{fwd.1} parent=43 // pred_check_branch
        %515 = sbr.rel (%p513) target = $region64
      $region63: #{fwd.1} parent=43 // pred_region
        %p516 = scmp.lt.s32.totalorder %s30, 1
        %s517 = scalar_select %p516, %s30, 1
        %s518 = smul.addr %s517, 16
        %s519 = smul.addr %s518, 4
        %s520 = scalar_lea.vmem %s6, %s519
      $region64: #{fwd.1} parent=43 // pred_fallthru
        _
      // Predicated region
      $region65: #{fwd.1} parent=43 // pred_check
        %p521 = pneg %p226
      $region66: #{fwd.1} parent=43 // pred_check_branch
        %523 = sbr.rel (%p521) target = $region68
      $region67: #{fwd.1} parent=43 // pred_region
        %p524 = scmp.lt.s32.totalorder %s30, 1
        %s525 = scalar_select %p524, %s30, 1
        %s526 = smul.addr %s525, 2
        %s527 = smul.addr %s526, 8
        %s528 = scalar_lea.vmem %s7, %s527
      $region68: #{fwd.1} parent=43 // pred_fallthru
        _
      // Predicated region
      $region69: #{fwd.1} parent=43 // pred_check
        %p529 = pneg %p252
      $region70: #{fwd.1} parent=43 // pred_check_branch
        %531 = sbr.rel (%p529) target = $region72
      $region71: #{fwd.1} parent=43 // pred_region
        %p532 = scmp.lt.s32.totalorder %s30, 1
        %s533 = scalar_select %p532, %s30, 1
        %s534 = scalar_lea.vmem %s8, %s533
      $region72: #{fwd.1} parent=43 // pred_fallthru
        _
      // Predicated region
      $region73: #{fwd.1} parent=43 // pred_check
        %p535 = pneg %p278
      $region74: #{fwd.1} parent=43 // pred_check_branch
        %537 = sbr.rel (%p535) target = $region76
      $region75: #{fwd.1} parent=43 // pred_region
        %p538 = scmp.lt.s32.totalorder %s30, 1
        %s539 = scalar_select %p538, %s30, 1
        %s540 = smul.addr %s539, 8
        %s541 = smul.addr %s540, 8
        %s542 = scalar_lea.vmem %s9, %s541
      $region76: #{fwd.1} parent=43 // pred_fallthru
        _
      // Predicated region
      $region77: #{fwd.1} parent=43 // pred_check
        %p543 = pneg %p304
      $region78: #{fwd.1} parent=43 // pred_check_branch
        %545 = sbr.rel (%p543) target = $region80
      $region79: #{fwd.1} parent=43 // pred_region
        %p546 = scmp.lt.s32.totalorder %s29, 1
        %s547 = scalar_select %p546, %s29, 1
        %s548 = smul.addr %s547, 2
        %s549 = scalar_lea.vmem %s10, %s548
      $region80: #{fwd.1} parent=43 // pred_fallthru
        _
    $region44: #{fwd.1} parent=5 // pred_fallthru
      _
    %p550 = scmp.le.s32.totalorder 1, %s22
    %p551 = scmp.lt.s32.totalorder %s22, 5
    %p552 = pnand %p550, %p551
    %p553 = pneg %p552
    // Predicated region
    $region81: #{fwd.1} parent=5 // pred_check
      _
    $region82: #{fwd.1} parent=5 // pred_check_branch
      %555 = sbr.rel (%p552) target = $region84
    $region83: #{fwd.1} parent=5 // pred_region
      %s556 = ssub.s32 %s22, 1
      %p557 = scmp.lt.s32.totalorder %s31, 1
      %s558 = scalar_select %p557, %s31, 1
      %s559 = smul.addr %s558, 2
      %s560 = smul.addr %s559, 8
      %s561 = scalar_lea.vmem %s0, %s560
      %p562 = pneg %p60
      %p563 = pneg %p57
      %p564 = pneg %p81
      %p565 = pneg %p78
      %p566 = pneg %p102
      %p567 = pneg %p99
      %p568 = scmp.lt.s32.totalorder %s32, 1
      %s569 = scalar_select %p568, %s32, 1
      %s570 = smul.addr %s569, 48
      %s571 = smul.addr %s570, 4
      %s572 = scalar_lea.vmem %s3, %s571
      %p573 = pneg %p128
      %p574 = pneg %p125
      %p575 = scmp.lt.s32.totalorder %s32, 1
      %s576 = scalar_select %p575, %s32, 1
      %s577 = smul.addr %s576, 4
      %s578 = smul.addr %s577, 4
      %s579 = scalar_lea.vmem %s4, %s578
      %p580 = pneg %p154
      %p581 = pneg %p151
      %p582 = scmp.lt.s32.totalorder %s32, 1
      %s583 = scalar_select %p582, %s32, 1
      %s584 = smul.addr %s583, 4
      %s585 = smul.addr %s584, 4
      %s586 = scalar_lea.vmem %s5, %s585
      %p587 = pneg %p180
      %p588 = pneg %p177
      %p589 = scmp.lt.s32.totalorder %s32, 1
      %s590 = scalar_select %p589, %s32, 1
      %s591 = smul.addr %s590, 16
      %s592 = smul.addr %s591, 4
      %s593 = scalar_lea.vmem %s6, %s592
      %p594 = pneg %p206
      %p595 = pneg %p203
      %p596 = scmp.lt.s32.totalorder %s32, 1
      %s597 = scalar_select %p596, %s32, 1
      %s598 = smul.addr %s597, 2
      %s599 = smul.addr %s598, 8
      %s600 = scalar_lea.vmem %s7, %s599
      %p601 = pneg %p232
      %p602 = pneg %p229
      %p603 = scmp.lt.s32.totalorder %s32, 1
      %s604 = scalar_select %p603, %s32, 1
      %s605 = scalar_lea.vmem %s8, %s604
      %p606 = pneg %p258
      %p607 = pneg %p255
      %p608 = scmp.lt.s32.totalorder %s32, 1
      %s609 = scalar_select %p608, %s32, 1
      %s610 = smul.addr %s609, 8
      %s611 = smul.addr %s610, 8
      %s612 = scalar_lea.vmem %s9, %s611
      %p613 = pneg %p284
      %p614 = pneg %p281
      %p615 = scmp.lt.s32.totalorder %s31, 1
      %s616 = scalar_select %p615, %s31, 1
      %s617 = smul.addr %s616, 2
      %s618 = scalar_lea.vmem %s10, %s617
      %p619 = pneg %p310
      %p620 = pneg %p307
      %p621 = pneg %p331
      %p622 = pneg %p328
      %p623 = pneg %p352
      %p624 = pneg %p349
      %p625 = pneg %p373
      %p626 = pneg %p370
      %p627 = pneg %p394
      %p628 = pneg %p391
      %p629 = pneg %p415
      %p630 = pneg %p412
      %p631 = pneg %p441
      %p632 = pneg %p438
      %p633 = scmp.lt.s32.totalorder %s31, 1
      %s634 = scalar_select %p633, %s31, 1
      %s635 = smul.addr %s634, 2
      %s636 = smul.addr %s635, 8
      %s637 = scalar_lea.vmem %s16, %s636
      %p638 = scmp.lt.s32.totalorder %s31, 1
      %s639 = scalar_select %p638, %s31, 1
      %s640 = smul.addr %s639, 2
      %s641 = smul.addr %s640, 8
      %s642 = scalar_lea.vmem %s0, %s641
      %p643 = scmp.lt.s32.totalorder %s32, 1
      %s644 = scalar_select %p643, %s32, 1
      %s645 = smul.addr %s644, 48
      %s646 = smul.addr %s645, 4
      %s647 = scalar_lea.vmem %s3, %s646
      %p648 = scmp.lt.s32.totalorder %s32, 1
      %s649 = scalar_select %p648, %s32, 1
      %s650 = smul.addr %s649, 4
      %s651 = smul.addr %s650, 4
      %s652 = scalar_lea.vmem %s4, %s651
      %p653 = scmp.lt.s32.totalorder %s32, 1
      %s654 = scalar_select %p653, %s32, 1
      %s655 = smul.addr %s654, 4
      %s656 = smul.addr %s655, 4
      %s657 = scalar_lea.vmem %s5, %s656
      %p658 = scmp.lt.s32.totalorder %s32, 1
      %s659 = scalar_select %p658, %s32, 1
      %s660 = smul.addr %s659, 16
      %s661 = smul.addr %s660, 4
      %s662 = scalar_lea.vmem %s6, %s661
      %p663 = scmp.lt.s32.totalorder %s32, 1
      %s664 = scalar_select %p663, %s32, 1
      %s665 = smul.addr %s664, 2
      %s666 = smul.addr %s665, 8
      %s667 = scalar_lea.vmem %s7, %s666
      %p668 = scmp.lt.s32.totalorder %s32, 1
      %s669 = scalar_select %p668, %s32, 1
      %s670 = scalar_lea.vmem %s8, %s669
      %p671 = scmp.lt.s32.totalorder %s32, 1
      %s672 = scalar_select %p671, %s32, 1
      %s673 = smul.addr %s672, 8
      %s674 = smul.addr %s673, 8
      %s675 = scalar_lea.vmem %s9, %s674
      %p676 = scmp.lt.s32.totalorder %s31, 1
      %s677 = scalar_select %p676, %s31, 1
      %s678 = smul.addr %s677, 2
      %s679 = scalar_lea.vmem %s10, %s678
      %p680 = scmp.lt.s32.totalorder %s31, 1
      %s681 = scalar_select %p680, %s31, 1
      %s682 = smul.addr %s681, 2
      %s683 = smul.addr %s682, 8
      %s684 = scalar_lea.vmem %s16, %s683
      %p686 = scmp.eq.s32.totalorder %s32, 0
      // Predicated region
      $region85: #{fwd.1} parent=83 // pred_check
        %p687 = pneg %p686
      $region86: #{fwd.1} parent=83 // pred_check_branch
        %689 = sbr.rel (%p687) target = $region88
      $region87: #{fwd.1} parent=83 // pred_region
        %v690 = vld [vmem:[%s15] sm:$0xff]
        %v691 = vld [vmem:[%s642] sm:$0xff]
        %v692 = vld [vmem:[%s642 + $0x8] sm:$0xff]
        %v693 = vrot.slane %v691, 7
        %v694 = vrot.slane %v692, 7
        %v695 = vlaneseq
        %v696 = vshrl.u32 %v695, 7
        %vm697 = vcmp.lt.s32.totalorder %v696, 1
        %v698 = vsel %vm697, %v693, %v694
        %v699 = vsel %vm697, %v694, %v693
        %v700 = vadd.s32 %v696, 8
        %vm701 = vcmp.lt.s32.totalorder %v696, 0
        %v702 = vsub.s32 0, %v696
        %v703 = vsel %vm701, %v702, %v696
        %v704 = vshrl.u32 %v703, 4
        %v705 = vand.u32 %v703, 15
        %v706 = vsub.s32 0, %v705
        %v707 = vsel %vm701, %v706, %v705
        %vm708 = vcmp.lt.s32.totalorder %v700, 0
        %v709 = vsub.s32 0, %v700
        %v710 = vsel %vm708, %v709, %v700
        %v711 = vshrl.u32 %v710, 4
        %v712 = vand.u32 %v710, 15
        %v713 = vsub.s32 0, %v712
        %v714 = vsel %vm708, %v713, %v712
        %vm715 = vcmp.ne.s32.totalorder %v707, 0
        %vm716 = vcmp.ne.s32.totalorder %v714, 0
        %vm717 = vcmp.lt.s32.totalorder %v707, 0
        %vm718 = vcmp.lt.s32.totalorder %v714, 0
        %vm719 = vmand %vm717, %vm715
        %vm720 = vmand %vm718, %vm716
        %v721 = vadd.s32 %v707, 16
        %v722 = vadd.s32 %v714, 16
        %v723 = vsel %vm719, %v721, %v707
        %v724 = vsel %vm720, %v722, %v714
        %v725 = vadd.s32 %v723, 4294967295
        %v726 = vadd.s32 %v724, 4294967295
        %vm727 = vcmp.ge.s32.totalorder %v725, 0
        %vm728 = vcmp.ge.s32.totalorder %v726, 0
        %vm729 = vcmp.lt.s32.totalorder %v725, 16
        %vm730 = vcmp.lt.s32.totalorder %v726, 16
        %vm731 = vmand %vm727, %vm729
        %vm732 = vmand %vm728, %vm730
        %v733 = vsel %vm731, %v699, 0.0
        %v734 = vsel %vm732, %v698, 0.0
        %v735 = vpack.c.bf16 %v734, %v733
        %v736 = vld [vmem:[%s2] sm:$0xf]
        %v737 = vld [vmem:[%s2 + $0x4] sm:$0xf]
        %v738 = vld [vmem:[%s2 + $0x8] sm:$0xf]
        %v739 = vpack.c.bf16 %v692, %v691
        %s740 = scalar_lea.vmem %s2, 12
        %v741 = vld [vmem:[%s740] sm:$0xf]
        %v742 = vld [vmem:[%s740 + $0x4] sm:$0xf]
        %v743 = vld [vmem:[%s740 + $0x8] sm:$0xf]
        %v747 = vunpack.c.l.b16 %v741
        %v748 = vunpack.c.l.b16 %v742
        %v749 = vunpack.c.l.b16 %v743
        %v750 = vpack.c.b16 %v748, %v747
        %v751 = vpack.c.b16 %v749, %v749
        %vm753 = vcmask 195584
        %v755 = vsel %vm753, %v739, 0
        %vm757 = vcmask 1043456
        %v759 = vsel %vm757, %v751, 0
        %761 = vmatpush.bf16.msra.mxu0 0
        %762 = vmatpush.bf16.msra.mxu0 0
        %763 = vmatpush.bf16.msra.mxu0 0
        %764 = vmatpush.bf16.msra.mxu0 0
        %765 = vmatpush.bf16.msra.mxu0 0
        %766 = vmatpush.bf16.msra.mxu0 0
        %767 = vmatpush.bf16.msra.mxu0 %v759
        %768 = vmatpush.bf16.msra.mxu0 %v750
        %769 = vmatmul.bf16.gmra.mxu0 %v755
        %v770 = vpop.f32.mrf.mxu0
        %v771 = vadd.f32 0.0, %v770
        %v772 = vpop.f32.mrf.mxu0
        %v773 = vadd.f32 0.0, %v772
        %774 = vdwg.mxu0
        %v778 = vunpack.c.l.b16 %v736
        %v779 = vunpack.c.l.b16 %v737
        %v780 = vunpack.c.l.b16 %v738
        %v781 = vpack.c.b16 %v779, %v778
        %v782 = vpack.c.b16 %v780, %v780
        %v785 = vsel %vm753, %v735, 0
        %v788 = vsel %vm757, %v782, 0
        %790 = vmatpush.bf16.msra.mxu0 0
        %791 = vmatpush.bf16.msra.mxu0 0
        %792 = vmatpush.bf16.msra.mxu0 0
        %793 = vmatpush.bf16.msra.mxu0 0
        %794 = vmatpush.bf16.msra.mxu0 0
        %795 = vmatpush.bf16.msra.mxu0 0
        %796 = vmatpush.bf16.msra.mxu0 %v788
        %797 = vmatpush.bf16.msra.mxu0 %v781
        %798 = vmatmul.bf16.gmra.mxu0 %v785
        %v799 = vpop.f32.mrf.mxu0
        %v800 = vadd.f32 %v771, %v799
        %v801 = vpop.f32.mrf.mxu0
        %v802 = vadd.f32 %v773, %v801
        %803 = vdwg.mxu0
        %v804 = vrot.slane %v691, 1
        %v805 = vrot.slane %v692, 1
        %vm806 = vcmp.lt.s32.totalorder %v696, 7
        %v807 = vsel %vm806, %v804, %v805
        %v808 = vsel %vm806, %v805, %v804
        %v809 = vadd.s32 %v723, 1
        %v810 = vadd.s32 %v724, 1
        %vm811 = vcmp.ge.s32.totalorder %v809, 0
        %vm812 = vcmp.ge.s32.totalorder %v810, 0
        %vm813 = vcmp.lt.s32.totalorder %v809, 16
        %vm814 = vcmp.lt.s32.totalorder %v810, 16
        %vm815 = vmand %vm811, %vm813
        %vm816 = vmand %vm812, %vm814
        %v817 = vsel %vm815, %v807, 0.0
        %v818 = vsel %vm816, %v808, 0.0
        %v819 = vpack.c.bf16 %v818, %v817
        %s820 = scalar_lea.vmem %s2, 24
        %v821 = vld [vmem:[%s820] sm:$0xf]
        %v822 = vld [vmem:[%s820 + $0x4] sm:$0xf]
        %v823 = vld [vmem:[%s820 + $0x8] sm:$0xf]
        %v827 = vunpack.c.l.b16 %v821
        %v828 = vunpack.c.l.b16 %v822
        %v829 = vunpack.c.l.b16 %v823
        %v830 = vpack.c.b16 %v828, %v827
        %v831 = vpack.c.b16 %v829, %v829
        %v834 = vsel %vm753, %v819, 0
        %v837 = vsel %vm757, %v831, 0
        %839 = vmatpush.bf16.msra.mxu0 0
        %840 = vmatpush.bf16.msra.mxu0 0
        %841 = vmatpush.bf16.msra.mxu0 0
        %842 = vmatpush.bf16.msra.mxu0 0
        %843 = vmatpush.bf16.msra.mxu0 0
        %844 = vmatpush.bf16.msra.mxu0 0
        %845 = vmatpush.bf16.msra.mxu0 %v837
        %846 = vmatpush.bf16.msra.mxu0 %v830
        %847 = vmatmul.bf16.gmra.mxu0 %v834
        %v848 = vpop.f32.mrf.mxu0
        %v849 = vadd.f32 0.0, %v848
        %v850 = vpop.f32.mrf.mxu0
        %v851 = vadd.f32 0.0, %v850
        %852 = vdwg.mxu0
        %v853 = vadd.f32 %v800, %v849
        %v854 = vadd.f32 %v802, %v851
        %v855 = vperm.slane %v690, 0
        %v856 = vadd.f32 %v853, %v855
        %v857 = vadd.f32 %v854, %v855
        %vm858 = vcmask 261120
        %v859 = vsel %vm858, %v856, 0.0
        %860 = vadd.xlane.f32.xlu0 %v859
        %v861 = vpop.xlane.xlu0 %860
        %v862 = vsel %vm858, %v857, 0.0
        %863 = vadd.xlane.f32.xlu0 %v862
        %v864 = vpop.xlane.xlu0 %863
        %v865 = vrcp.pop 32.0
        %v866 = vmul.f32 32.0, %v865
        %v867 = vsub.f32 1.0, %v866
        %v868 = vmul.f32 %v865, %v867
        %v869 = vadd.f32 %v865, %v868
        %vm870 = vweird.f32 %v865
        %v871 = vsel %vm870, %v865, %v869
        %v872 = vmul.f32 %v861, %v871
        %v873 = vmul.f32 %v864, %v871
        %v874 = vsub.f32 %v856, %v872
        %v875 = vsub.f32 %v857, %v873
        %v876 = vmul.f32 %v874, %v874
        %v877 = vmul.f32 %v875, %v875
        %v878 = vsel %vm858, %v876, 0.0
        %879 = vadd.xlane.f32.xlu0 %v878
        %v880 = vpop.xlane.xlu0 %879
        %v881 = vsel %vm858, %v877, 0.0
        %882 = vadd.xlane.f32.xlu0 %v881
        %v883 = vpop.xlane.xlu0 %882
        %v884 = vmul.f32 %v880, %v871
        %v885 = vmul.f32 %v883, %v871
        %v886 = vadd.f32 %v884, 1e-05
        %v887 = vadd.f32 %v885, 1e-05
        %v888 = vrsqrt.pop %v886
        %v889 = vmul.f32 %v888, %v886
        %v890 = vmul.f32 %v889, %v888
        %v891 = vmul.f32 0.5, %v890
        %v892 = vsub.f32 1.5, %v891
        %v893 = vmul.f32 %v888, %v892
        %vm894 = vweird.f32 %v886
        %vm895 = vweird.f32 %v888
        %vm896 = vmor %vm894, %vm895
        %v897 = vsel %vm896, %v888, %v893
        %v898 = vrsqrt.pop %v887
        %v899 = vmul.f32 %v898, %v887
        %v900 = vmul.f32 %v899, %v898
        %v901 = vmul.f32 0.5, %v900
        %v902 = vsub.f32 1.5, %v901
        %v903 = vmul.f32 %v898, %v902
        %vm904 = vweird.f32 %v887
        %vm905 = vweird.f32 %v898
        %vm906 = vmor %vm904, %vm905
        %v907 = vsel %vm906, %v898, %v903
        %v908 = vmul.f32 %v874, %v897
        %v909 = vmul.f32 %v875, %v907
        %v910 = vperm.slane %v690, 1
        %v911 = vmul.f32 %v908, %v910
        %v912 = vmul.f32 %v909, %v910
        %v913 = vperm.slane %v690, 2
        %v914 = vadd.f32 %v911, %v913
        %v915 = vadd.f32 %v912, %v913
        %v916 = vmul.f32 %v914, %v914
        %v917 = vmul.f32 %v915, %v915
        %v918 = vmul.f32 %v914, %v916
        %v919 = vmul.f32 %v915, %v917
        %v920 = vmul.f32 %v918, 0.044715
        %v921 = vmul.f32 %v919, 0.044715
        %v922 = vadd.f32 %v914, %v920
        %v923 = vadd.f32 %v915, %v921
        %v924 = vmul.f32 %v922, 0.7978846
        %v925 = vmul.f32 %v923, 0.7978846
        %v926 = vtanh.pop %v924
        %v927 = vtanh.pop %v925
        %v928 = vadd.f32 %v926, 1.0
        %v929 = vadd.f32 %v927, 1.0
        %v930 = vmul.f32 %v928, 0.5
        %v931 = vmul.f32 %v929, 0.5
        %v932 = vmul.f32 %v914, %v930
        %v933 = vmul.f32 %v915, %v931
        %v934 = vld [vmem:[%s1] sm:$0xff]
        %v935 = vld [vmem:[%s1 + $0x8] sm:$0xff]
        %v936 = vadd.f32 %v932, %v934
        %v937 = vadd.f32 %v933, %v935
        %938 = vst.msk [vmem:[#allocation2] sm:$0xff] %vm858, %v936
        %939 = vst.msk [vmem:[#allocation2 + $0x8] sm:$0xff] %vm858, %v937
      $region88: #{fwd.1} parent=83 // pred_fallthru
        _
      %v940 = vld [vmem:[#allocation2] sm:$0xff]
      %v941 = vld [vmem:[#allocation2 + $0x8] sm:$0xff]
      %v942 = vld [vmem:[%s667] sm:$0xff]
      %v943 = vld [vmem:[%s667 + $0x8] sm:$0x1]
      %vm944 = vcmask 261120
      %v945 = vsel %vm944, %v940, 0.0
      %946 = vadd.xlane.f32.xlu0 %v945
      %v947 = vpop.xlane.xlu0 %946
      %v948 = vsel %vm944, %v941, 0.0
      %949 = vadd.xlane.f32.xlu0 %v948
      %v950 = vpop.xlane.xlu0 %949
      %v951 = vrcp.pop 32.0
      %v952 = vmul.f32 32.0, %v951
      %v953 = vsub.f32 1.0, %v952
      %v954 = vmul.f32 %v951, %v953
      %v955 = vadd.f32 %v951, %v954
      %vm956 = vweird.f32 %v951
      %v957 = vsel %vm956, %v951, %v955
      %v958 = vmul.f32 %v947, %v957
      %v959 = vmul.f32 %v950, %v957
      %v960 = vsub.f32 %v940, %v958
      %v961 = vsub.f32 %v941, %v959
      %v962 = vmul.f32 %v960, %v960
      %v963 = vmul.f32 %v961, %v961
      %v964 = vsel %vm944, %v962, 0.0
      %965 = vadd.xlane.f32.xlu0 %v964
      %v966 = vpop.xlane.xlu0 %965
      %v967 = vsel %vm944, %v963, 0.0
      %968 = vadd.xlane.f32.xlu0 %v967
      %v969 = vpop.xlane.xlu0 %968
      %v970 = vmul.f32 %v966, %v957
      %v971 = vmul.f32 %v969, %v957
      %v972 = vadd.f32 %v970, 1e-05
      %v973 = vadd.f32 %v971, 1e-05
      %v974 = vrsqrt.pop %v972
      %v975 = vmul.f32 %v974, %v972
      %v976 = vmul.f32 %v975, %v974
      %v977 = vmul.f32 0.5, %v976
      %v978 = vsub.f32 1.5, %v977
      %v979 = vmul.f32 %v974, %v978
      %vm980 = vweird.f32 %v972
      %vm981 = vweird.f32 %v974
      %vm982 = vmor %vm980, %vm981
      %v983 = vsel %vm982, %v974, %v979
      %v984 = vrsqrt.pop %v973
      %v985 = vmul.f32 %v984, %v973
      %v986 = vmul.f32 %v985, %v984
      %v987 = vmul.f32 0.5, %v986
      %v988 = vsub.f32 1.5, %v987
      %v989 = vmul.f32 %v984, %v988
      %vm990 = vweird.f32 %v973
      %vm991 = vweird.f32 %v984
      %vm992 = vmor %vm990, %vm991
      %v993 = vsel %vm992, %v984, %v989
      %v994 = vmul.f32 %v960, %v983
      %v995 = vmul.f32 %v961, %v993
      %v996 = vperm.slane %v942, 0
      %v997 = vmul.f32 %v994, %v996
      %v998 = vmul.f32 %v995, %v996
      %v999 = vperm.slane %v942, 1
      %v1000 = vadd.f32 %v997, %v999
      %v1001 = vadd.f32 %v998, %v999
      %v1002 = vpack.c.bf16 %v1001, %v1000
      %v1003 = vld [vmem:[%s647] sm:$0xf]
      %v1004 = vld [vmem:[%s647 + $0x4] sm:$0xf]
      %v1005 = vld [vmem:[%s647 + $0x8] sm:$0xf]
      %v1006 = vld [vmem:[%s647 + $0xc] sm:$0xf]
      %v1007 = vperm.slane %v942, 6
      %v1012 = vunpack.c.l.b16 %v1003
      %v1013 = vunpack.c.l.b16 %v1004
      %v1014 = vunpack.c.l.b16 %v1005
      %v1015 = vunpack.c.l.b16 %v1006
      %v1016 = vpack.c.b16 %v1013, %v1012
      %v1017 = vpack.c.b16 %v1015, %v1014
      %v1021 = vsel %vm944, %v1002, 0
      %1023 = vmatpush.bf16.msra.mxu0 0
      %1024 = vmatpush.bf16.msra.mxu0 0
      %1025 = vmatpush.bf16.msra.mxu0 0
      %1026 = vmatpush.bf16.msra.mxu0 0
      %1027 = vmatpush.bf16.msra.mxu0 0
      %1028 = vmatpush.bf16.msra.mxu0 0
      %1029 = vmatpush.bf16.msra.mxu0 %v1017
      %1030 = vmatpush.bf16.msra.mxu0 %v1016
      %1031 = vmatmul.bf16.gmra.mxu0 %v1021
      %v1032 = vpop.f32.mrf.mxu0
      %v1033 = vadd.f32 %v1007, %v1032
      %v1034 = vpop.f32.mrf.mxu0
      %v1035 = vadd.f32 %v1007, %v1034
      %1036 = vdwg.mxu0
      %s1037 = scalar_lea.vmem %s647, 64
      %v1038 = vld [vmem:[%s1037] sm:$0xf]
      %v1039 = vld [vmem:[%s1037 + $0x4] sm:$0xf]
      %v1040 = vld [vmem:[%s1037 + $0x8] sm:$0xf]
      %v1041 = vld [vmem:[%s1037 + $0xc] sm:$0xf]
      %v1042 = vperm.slane %v942, 7
      %v1047 = vunpack.c.l.b16 %v1038
      %v1048 = vunpack.c.l.b16 %v1039
      %v1049 = vunpack.c.l.b16 %v1040
      %v1050 = vunpack.c.l.b16 %v1041
      %v1051 = vpack.c.b16 %v1048, %v1047
      %v1052 = vpack.c.b16 %v1050, %v1049
      %1055 = vmatpush.bf16.msra.mxu0 0
      %1056 = vmatpush.bf16.msra.mxu0 0
      %1057 = vmatpush.bf16.msra.mxu0 0
      %1058 = vmatpush.bf16.msra.mxu0 0
      %1059 = vmatpush.bf16.msra.mxu0 0
      %1060 = vmatpush.bf16.msra.mxu0 0
      %1061 = vmatpush.bf16.msra.mxu0 %v1052
      %1062 = vmatpush.bf16.msra.mxu0 %v1051
      %1063 = vmatmul.bf16.gmra.mxu0 %v1021
      %v1064 = vpop.f32.mrf.mxu0
      %v1065 = vadd.f32 %v1042, %v1064
      %v1066 = vpop.f32.mrf.mxu0
      %v1067 = vadd.f32 %v1042, %v1066
      %1068 = vdwg.mxu0
      %s1069 = scalar_lea.vmem %s647, 128
      %v1070 = vld [vmem:[%s1069] sm:$0xf]
      %v1071 = vld [vmem:[%s1069 + $0x4] sm:$0xf]
      %v1072 = vld [vmem:[%s1069 + $0x8] sm:$0xf]
      %v1073 = vld [vmem:[%s1069 + $0xc] sm:$0xf]
      %v1074 = vperm.slane %v943, 0
      %v1079 = vunpack.c.l.b16 %v1070
      %v1080 = vunpack.c.l.b16 %v1071
      %v1081 = vunpack.c.l.b16 %v1072
      %v1082 = vunpack.c.l.b16 %v1073
      %v1083 = vpack.c.b16 %v1080, %v1079
      %v1084 = vpack.c.b16 %v1082, %v1081
      %1087 = vmatpush.bf16.msra.mxu0 0
      %1088 = vmatpush.bf16.msra.mxu0 0
      %1089 = vmatpush.bf16.msra.mxu0 0
      %1090 = vmatpush.bf16.msra.mxu0 0
      %1091 = vmatpush.bf16.msra.mxu0 0
      %1092 = vmatpush.bf16.msra.mxu0 0
      %1093 = vmatpush.bf16.msra.mxu0 %v1084
      %1094 = vmatpush.bf16.msra.mxu0 %v1083
      %1095 = vmatmul.bf16.gmra.mxu0 %v1021
      %v1096 = vpop.f32.mrf.mxu0
      %v1097 = vadd.f32 %v1074, %v1096
      %v1098 = vpop.f32.mrf.mxu0
      %v1099 = vadd.f32 %v1074, %v1098
      %1100 = vdwg.mxu0
      %v1101 = vpack.c.bf16 %v1035, %v1033
      %v1102 = vpack.c.bf16 %v1067, %v1065
      %v1103 = vpack.c.bf16 %v1099, %v1097
      %v1104 = vld [vmem:[%s675] sm:$0xff]
      %v1105 = vld [vmem:[%s675 + $0x8] sm:$0xff]
      %v1106 = vld [vmem:[%s652] sm:$0xf]
      %vm1107 = vcmask 64512
      %v1109 = vsel %vm1107, %v1101, 0
      %v1112 = vsel %vm1107, %v1102, 0
      %1114 = vmatpush.bf16.xpose.msra.mxu0 0
      %1115 = vmatpush.bf16.xpose.msra.mxu0 0
      %1116 = vmatpush.bf16.xpose.msra.mxu0 0
      %1117 = vmatpush.bf16.xpose.msra.mxu0 0
      %1118 = vmatpush.bf16.xpose.msra.mxu0 0
      %1119 = vmatpush.bf16.xpose.msra.mxu0 0
      %1120 = vmatpush.bf16.xpose.msra.mxu0 0
      %1121 = vmatpush.bf16.xpose.msra.mxu0 %v1112
      %1122 = vmatmul.bf16.gmra.mxu0 %v1109
      %v1123 = vpop.f32.mrf.mxu0
      %v1124 = vadd.f32 0.0, %v1123
      %v1125 = vpop.f32.mrf.mxu0
      %v1126 = vadd.f32 0.0, %v1125
      %1127 = vdwg.mxu0
      %v1128 = vmul.f32 %v1124, 0.35355338
      %v1129 = vmul.f32 %v1126, 0.35355338
      %v1130 = vadd.f32 %v1128, %v1104
      %v1131 = vadd.f32 %v1129, %v1105
      %vm1132 = vcmask 130048
      %v1133 = vsel %vm1132, %v1130, -inf
      %1134 = vmax.xlane.f32.xlu0 %v1133
      %v1135 = vpop.xlane.xlu0 %1134
      %v1136 = vsel %vm1132, %v1131, -inf
      %1137 = vmax.xlane.f32.xlu0 %v1136
      %v1138 = vpop.xlane.xlu0 %1137
      %v1139 = vsub.f32 %v1130, %v1135
      %v1140 = vsub.f32 %v1131, %v1138
      %v1141 = vmul.f32 %v1139, 1.442695
      %v1142 = vpow.pop %v1141
      %v1143 = vmul.f32 %v1140, 1.442695
      %v1144 = vpow.pop %v1143
      %v1145 = vsel %vm1132, %v1142, 0.0
      %1146 = vadd.xlane.f32.xlu0 %v1145
      %v1147 = vpop.xlane.xlu0 %1146
      %v1148 = vsel %vm1132, %v1144, 0.0
      %1149 = vadd.xlane.f32.xlu0 %v1148
      %v1150 = vpop.xlane.xlu0 %1149
      %v1151 = vrcp.pop %v1147
      %v1152 = vrcp.pop %v1150
      %v1153 = vmul.f32 %v1142, %v1151
      %v1154 = vmul.f32 %v1144, %v1152
      %v1155 = vpack.c.bf16 %v1154, %v1153
      %v1157 = vsel %vm1132, %v1155, 0
      %1159 = vmatpush.bf16.msra.mxu0 0
      %1160 = vmatpush.bf16.msra.mxu0 0
      %1161 = vmatpush.bf16.msra.mxu0 0
      %1162 = vmatpush.bf16.msra.mxu0 0
      %1163 = vmatpush.bf16.msra.mxu0 0
      %1164 = vmatpush.bf16.msra.mxu0 0
      %1165 = vmatpush.bf16.msra.mxu0 0
      %1166 = vmatpush.bf16.msra.mxu0 %v1103
      %1167 = vmatmul.bf16.gmra.mxu0 %v1157
      %v1168 = vpop.f32.mrf.mxu0
      %v1169 = vadd.f32 0.0, %v1168
      %v1170 = vpop.f32.mrf.mxu0
      %v1171 = vadd.f32 0.0, %v1170
      %1172 = vdwg.mxu0
      %v1173 = vpack.c.bf16 %v1171, %v1169
      %s1174 = scalar_lea.vmem %s647, 16
      %v1175 = vld [vmem:[%s1174] sm:$0xf]
      %v1176 = vld [vmem:[%s1174 + $0x4] sm:$0xf]
      %v1177 = vld [vmem:[%s1174 + $0x8] sm:$0xf]
      %v1178 = vld [vmem:[%s1174 + $0xc] sm:$0xf]
      %v1183 = vunpack.c.l.b16 %v1175
      %v1184 = vunpack.c.l.b16 %v1176
      %v1185 = vunpack.c.l.b16 %v1177
      %v1186 = vunpack.c.l.b16 %v1178
      %v1187 = vpack.c.b16 %v1184, %v1183
      %v1188 = vpack.c.b16 %v1186, %v1185
      %1192 = vrot.lane.b32.xlu0 %v1007, 120
      %v1193 = vpop.permute.xlu0 %1192
      %1195 = vmatpush.bf16.msra.mxu0 0
      %1196 = vmatpush.bf16.msra.mxu0 0
      %1197 = vmatpush.bf16.msra.mxu0 0
      %1198 = vmatpush.bf16.msra.mxu0 0
      %1199 = vmatpush.bf16.msra.mxu0 0
      %1200 = vmatpush.bf16.msra.mxu0 0
      %1201 = vmatpush.bf16.msra.mxu0 %v1188
      %1202 = vmatpush.bf16.msra.mxu0 %v1187
      %1203 = vmatmul.bf16.gmra.mxu0 %v1021
      %v1204 = vpop.f32.mrf.mxu0
      %v1205 = vadd.f32 %v1193, %v1204
      %v1206 = vpop.f32.mrf.mxu0
      %v1207 = vadd.f32 %v1193, %v1206
      %1208 = vdwg.mxu0
      %s1209 = scalar_lea.vmem %s647, 80
      %v1210 = vld [vmem:[%s1209] sm:$0xf]
      %v1211 = vld [vmem:[%s1209 + $0x4] sm:$0xf]
      %v1212 = vld [vmem:[%s1209 + $0x8] sm:$0xf]
      %v1213 = vld [vmem:[%s1209 + $0xc] sm:$0xf]
      %v1218 = vunpack.c.l.b16 %v1210
      %v1219 = vunpack.c.l.b16 %v1211
      %v1220 = vunpack.c.l.b16 %v1212
      %v1221 = vunpack.c.l.b16 %v1213
      %v1222 = vpack.c.b16 %v1219, %v1218
      %v1223 = vpack.c.b16 %v1221, %v1220
      %1227 = vrot.lane.b32.xlu0 %v1042, 120
      %v1228 = vpop.permute.xlu0 %1227
      %1230 = vmatpush.bf16.msra.mxu0 0
      %1231 = vmatpush.bf16.msra.mxu0 0
      %1232 = vmatpush.bf16.msra.mxu0 0
      %1233 = vmatpush.bf16.msra.mxu0 0
      %1234 = vmatpush.bf16.msra.mxu0 0
      %1235 = vmatpush.bf16.msra.mxu0 0
      %1236 = vmatpush.bf16.msra.mxu0 %v1223
      %1237 = vmatpush.bf16.msra.mxu0 %v1222
      %1238 = vmatmul.bf16.gmra.mxu0 %v1021
      %v1239 = vpop.f32.mrf.mxu0
      %v1240 = vadd.f32 %v1228, %v1239
      %v1241 = vpop.f32.mrf.mxu0
      %v1242 = vadd.f32 %v1228, %v1241
      %1243 = vdwg.mxu0
      %s1244 = scalar_lea.vmem %s647, 144
      %v1245 = vld [vmem:[%s1244] sm:$0xf]
      %v1246 = vld [vmem:[%s1244 + $0x4] sm:$0xf]
      %v1247 = vld [vmem:[%s1244 + $0x8] sm:$0xf]
      %v1248 = vld [vmem:[%s1244 + $0xc] sm:$0xf]
      %v1253 = vunpack.c.l.b16 %v1245
      %v1254 = vunpack.c.l.b16 %v1246
      %v1255 = vunpack.c.l.b16 %v1247
      %v1256 = vunpack.c.l.b16 %v1248
      %v1257 = vpack.c.b16 %v1254, %v1253
      %v1258 = vpack.c.b16 %v1256, %v1255
      %1262 = vrot.lane.b32.xlu0 %v1074, 120
      %v1263 = vpop.permute.xlu0 %1262
      %1265 = vmatpush.bf16.msra.mxu0 0
      %1266 = vmatpush.bf16.msra.mxu0 0
      %1267 = vmatpush.bf16.msra.mxu0 0
      %1268 = vmatpush.bf16.msra.mxu0 0
      %1269 = vmatpush.bf16.msra.mxu0 0
      %1270 = vmatpush.bf16.msra.mxu0 0
      %1271 = vmatpush.bf16.msra.mxu0 %v1258
      %1272 = vmatpush.bf16.msra.mxu0 %v1257
      %1273 = vmatmul.bf16.gmra.mxu0 %v1021
      %v1274 = vpop.f32.mrf.mxu0
      %v1275 = vadd.f32 %v1263, %v1274
      %v1276 = vpop.f32.mrf.mxu0
      %v1277 = vadd.f32 %v1263, %v1276
      %1278 = vdwg.mxu0
      %v1279 = vpack.c.bf16 %v1207, %v1205
      %v1280 = vpack.c.bf16 %v1242, %v1240
      %v1281 = vpack.c.bf16 %v1277, %v1275
      %s1282 = scalar_lea.vmem %s675, 16
      %v1283 = vld [vmem:[%s1282] sm:$0xff]
      %v1284 = vld [vmem:[%s1282 + $0x8] sm:$0xff]
      %s1285 = scalar_lea.vmem %s652, 4
      %v1286 = vld [vmem:[%s1285] sm:$0xf]
      %v1288 = vsel %vm1107, %v1279, 0
      %v1291 = vsel %vm1107, %v1280, 0
      %1293 = vmatpush.bf16.xpose.msra.mxu0 0
      %1294 = vmatpush.bf16.xpose.msra.mxu0 0
      %1295 = vmatpush.bf16.xpose.msra.mxu0 0
      %1296 = vmatpush.bf16.xpose.msra.mxu0 0
      %1297 = vmatpush.bf16.xpose.msra.mxu0 0
      %1298 = vmatpush.bf16.xpose.msra.mxu0 0
      %1299 = vmatpush.bf16.xpose.msra.mxu0 0
      %1300 = vmatpush.bf16.xpose.msra.mxu0 %v1291
      %1301 = vmatmul.bf16.gmra.mxu0 %v1288
      %v1302 = vpop.f32.mrf.mxu0
      %v1303 = vadd.f32 0.0, %v1302
      %v1304 = vpop.f32.mrf.mxu0
      %v1305 = vadd.f32 0.0, %v1304
      %1306 = vdwg.mxu0
      %v1307 = vmul.f32 %v1303, 0.35355338
      %v1308 = vmul.f32 %v1305, 0.35355338
      %v1309 = vadd.f32 %v1307, %v1283
      %v1310 = vadd.f32 %v1308, %v1284
      %v1311 = vsel %vm1132, %v1309, -inf
      %1312 = vmax.xlane.f32.xlu0 %v1311
      %v1313 = vpop.xlane.xlu0 %1312
      %v1314 = vsel %vm1132, %v1310, -inf
      %1315 = vmax.xlane.f32.xlu0 %v1314
      %v1316 = vpop.xlane.xlu0 %1315
      %v1317 = vsub.f32 %v1309, %v1313
      %v1318 = vsub.f32 %v1310, %v1316
      %v1319 = vmul.f32 %v1317, 1.442695
      %v1320 = vpow.pop %v1319
      %v1321 = vmul.f32 %v1318, 1.442695
      %v1322 = vpow.pop %v1321
      %v1323 = vsel %vm1132, %v1320, 0.0
      %1324 = vadd.xlane.f32.xlu0 %v1323
      %v1325 = vpop.xlane.xlu0 %1324
      %v1326 = vsel %vm1132, %v1322, 0.0
      %1327 = vadd.xlane.f32.xlu0 %v1326
      %v1328 = vpop.xlane.xlu0 %1327
      %v1329 = vrcp.pop %v1325
      %v1330 = vrcp.pop %v1328
      %v1331 = vmul.f32 %v1320, %v1329
      %v1332 = vmul.f32 %v1322, %v1330
      %v1333 = vpack.c.bf16 %v1332, %v1331
      %v1335 = vsel %vm1132, %v1333, 0
      %1337 = vmatpush.bf16.msra.mxu0 0
      %1338 = vmatpush.bf16.msra.mxu0 0
      %1339 = vmatpush.bf16.msra.mxu0 0
      %1340 = vmatpush.bf16.msra.mxu0 0
      %1341 = vmatpush.bf16.msra.mxu0 0
      %1342 = vmatpush.bf16.msra.mxu0 0
      %1343 = vmatpush.bf16.msra.mxu0 0
      %1344 = vmatpush.bf16.msra.mxu0 %v1281
      %1345 = vmatmul.bf16.gmra.mxu0 %v1335
      %v1346 = vpop.f32.mrf.mxu0
      %v1347 = vadd.f32 0.0, %v1346
      %v1348 = vpop.f32.mrf.mxu0
      %v1349 = vadd.f32 0.0, %v1348
      %1350 = vdwg.mxu0
      %v1351 = vpack.c.bf16 %v1349, %v1347
      %v1353 = vsel %vm1107, %v1351, 0
      %vm1355 = vcmask 1043456
      %v1357 = vsel %vm1355, %v1286, 0
      %1359 = vmatpush.bf16.msra.mxu0 0
      %1360 = vmatpush.bf16.msra.mxu0 0
      %1361 = vmatpush.bf16.msra.mxu0 0
      %1362 = vmatpush.bf16.msra.mxu0 0
      %1363 = vmatpush.bf16.msra.mxu0 0
      %1364 = vmatpush.bf16.msra.mxu0 0
      %1365 = vmatpush.bf16.msra.mxu0 0
      %1366 = vmatpush.bf16.msra.mxu0 %v1357
      %1367 = vmatmul.bf16.gmra.mxu0 %v1353
      %v1368 = vpop.f32.mrf.mxu0
      %v1369 = vadd.f32 0.0, %v1368
      %v1370 = vpop.f32.mrf.mxu0
      %v1371 = vadd.f32 0.0, %v1370
      %1372 = vdwg.mxu0
      %v1374 = vsel %vm1107, %v1173, 0
      %v1377 = vsel %vm1355, %v1106, 0
      %1379 = vmatpush.bf16.msra.mxu0 0
      %1380 = vmatpush.bf16.msra.mxu0 0
      %1381 = vmatpush.bf16.msra.mxu0 0
      %1382 = vmatpush.bf16.msra.mxu0 0
      %1383 = vmatpush.bf16.msra.mxu0 0
      %1384 = vmatpush.bf16.msra.mxu0 0
      %1385 = vmatpush.bf16.msra.mxu0 0
      %1386 = vmatpush.bf16.msra.mxu0 %v1377
      %1387 = vmatmul.bf16.gmra.mxu0 %v1374
      %v1388 = vpop.f32.mrf.mxu0
      %v1389 = vadd.f32 %v1369, %v1388
      %v1390 = vpop.f32.mrf.mxu0
      %v1391 = vadd.f32 %v1371, %v1390
      %1392 = vdwg.mxu0
      %s1393 = scalar_lea.vmem %s647, 32
      %v1394 = vld [vmem:[%s1393] sm:$0xf]
      %v1395 = vld [vmem:[%s1393 + $0x4] sm:$0xf]
      %v1396 = vld [vmem:[%s1393 + $0x8] sm:$0xf]
      %v1397 = vld [vmem:[%s1393 + $0xc] sm:$0xf]
      %v1402 = vunpack.c.l.b16 %v1394
      %v1403 = vunpack.c.l.b16 %v1395
      %v1404 = vunpack.c.l.b16 %v1396
      %v1405 = vunpack.c.l.b16 %v1397
      %v1406 = vpack.c.b16 %v1403, %v1402
      %v1407 = vpack.c.b16 %v1405, %v1404
      %1410 = vrot.lane.b32.xlu0 %v1007, 112
      %v1411 = vpop.permute.xlu0 %1410
      %1413 = vmatpush.bf16.msra.mxu0 0
      %1414 = vmatpush.bf16.msra.mxu0 0
      %1415 = vmatpush.bf16.msra.mxu0 0
      %1416 = vmatpush.bf16.msra.mxu0 0
      %1417 = vmatpush.bf16.msra.mxu0 0
      %1418 = vmatpush.bf16.msra.mxu0 0
      %1419 = vmatpush.bf16.msra.mxu0 %v1407
      %1420 = vmatpush.bf16.msra.mxu0 %v1406
      %1421 = vmatmul.bf16.gmra.mxu0 %v1021
      %v1422 = vpop.f32.mrf.mxu0
      %v1423 = vadd.f32 %v1411, %v1422
      %v1424 = vpop.f32.mrf.mxu0
      %v1425 = vadd.f32 %v1411, %v1424
      %1426 = vdwg.mxu0
      %s1427 = scalar_lea.vmem %s647, 96
      %v1428 = vld [vmem:[%s1427] sm:$0xf]
      %v1429 = vld [vmem:[%s1427 + $0x4] sm:$0xf]
      %v1430 = vld [vmem:[%s1427 + $0x8] sm:$0xf]
      %v1431 = vld [vmem:[%s1427 + $0xc] sm:$0xf]
      %v1436 = vunpack.c.l.b16 %v1428
      %v1437 = vunpack.c.l.b16 %v1429
      %v1438 = vunpack.c.l.b16 %v1430
      %v1439 = vunpack.c.l.b16 %v1431
      %v1440 = vpack.c.b16 %v1437, %v1436
      %v1441 = vpack.c.b16 %v1439, %v1438
      %1444 = vrot.lane.b32.xlu0 %v1042, 112
      %v1445 = vpop.permute.xlu0 %1444
      %1447 = vmatpush.bf16.msra.mxu0 0
      %1448 = vmatpush.bf16.msra.mxu0 0
      %1449 = vmatpush.bf16.msra.mxu0 0
      %1450 = vmatpush.bf16.msra.mxu0 0
      %1451 = vmatpush.bf16.msra.mxu0 0
      %1452 = vmatpush.bf16.msra.mxu0 0
      %1453 = vmatpush.bf16.msra.mxu0 %v1441
      %1454 = vmatpush.bf16.msra.mxu0 %v1440
      %1455 = vmatmul.bf16.gmra.mxu0 %v1021
      %v1456 = vpop.f32.mrf.mxu0
      %v1457 = vadd.f32 %v1445, %v1456
      %v1458 = vpop.f32.mrf.mxu0
      %v1459 = vadd.f32 %v1445, %v1458
      %1460 = vdwg.mxu0
      %s1461 = scalar_lea.vmem %s647, 160
      %v1462 = vld [vmem:[%s1461] sm:$0xf]
      %v1463 = vld [vmem:[%s1461 + $0x4] sm:$0xf]
      %v1464 = vld [vmem:[%s1461 + $0x8] sm:$0xf]
      %v1465 = vld [vmem:[%s1461 + $0xc] sm:$0xf]
      %v1470 = vunpack.c.l.b16 %v1462
      %v1471 = vunpack.c.l.b16 %v1463
      %v1472 = vunpack.c.l.b16 %v1464
      %v1473 = vunpack.c.l.b16 %v1465
      %v1474 = vpack.c.b16 %v1471, %v1470
      %v1475 = vpack.c.b16 %v1473, %v1472
      %1478 = vrot.lane.b32.xlu0 %v1074, 112
      %v1479 = vpop.permute.xlu0 %1478
      %1481 = vmatpush.bf16.msra.mxu0 0
      %1482 = vmatpush.bf16.msra.mxu0 0
      %1483 = vmatpush.bf16.msra.mxu0 0
      %1484 = vmatpush.bf16.msra.mxu0 0
      %1485 = vmatpush.bf16.msra.mxu0 0
      %1486 = vmatpush.bf16.msra.mxu0 0
      %1487 = vmatpush.bf16.msra.mxu0 %v1475
      %1488 = vmatpush.bf16.msra.mxu0 %v1474
      %1489 = vmatmul.bf16.gmra.mxu0 %v1021
      %v1490 = vpop.f32.mrf.mxu0
      %v1491 = vadd.f32 %v1479, %v1490
      %v1492 = vpop.f32.mrf.mxu0
      %v1493 = vadd.f32 %v1479, %v1492
      %1494 = vdwg.mxu0
      %v1495 = vpack.c.bf16 %v1425, %v1423
      %v1496 = vpack.c.bf16 %v1459, %v1457
      %v1497 = vpack.c.bf16 %v1493, %v1491
      %s1498 = scalar_lea.vmem %s675, 32
      %v1499 = vld [vmem:[%s1498] sm:$0xff]
      %v1500 = vld [vmem:[%s1498 + $0x8] sm:$0xff]
      %s1501 = scalar_lea.vmem %s652, 8
      %v1502 = vld [vmem:[%s1501] sm:$0xf]
      %v1504 = vsel %vm1107, %v1495, 0
      %v1507 = vsel %vm1107, %v1496, 0
      %1509 = vmatpush.bf16.xpose.msra.mxu0 0
      %1510 = vmatpush.bf16.xpose.msra.mxu0 0
      %1511 = vmatpush.bf16.xpose.msra.mxu0 0
      %1512 = vmatpush.bf16.xpose.msra.mxu0 0
      %1513 = vmatpush.bf16.xpose.msra.mxu0 0
      %1514 = vmatpush.bf16.xpose.msra.mxu0 0
      %1515 = vmatpush.bf16.xpose.msra.mxu0 0
      %1516 = vmatpush.bf16.xpose.msra.mxu0 %v1507
      %1517 = vmatmul.bf16.gmra.mxu0 %v1504
      %v1518 = vpop.f32.mrf.mxu0
      %v1519 = vadd.f32 0.0, %v1518
      %v1520 = vpop.f32.mrf.mxu0
      %v1521 = vadd.f32 0.0, %v1520
      %1522 = vdwg.mxu0
      %v1523 = vmul.f32 %v1519, 0.35355338
      %v1524 = vmul.f32 %v1521, 0.35355338
      %v1525 = vadd.f32 %v1523, %v1499
      %v1526 = vadd.f32 %v1524, %v1500
      %v1527 = vsel %vm1132, %v1525, -inf
      %1528 = vmax.xlane.f32.xlu0 %v1527
      %v1529 = vpop.xlane.xlu0 %1528
      %v1530 = vsel %vm1132, %v1526, -inf
      %1531 = vmax.xlane.f32.xlu0 %v1530
      %v1532 = vpop.xlane.xlu0 %1531
      %v1533 = vsub.f32 %v1525, %v1529
      %v1534 = vsub.f32 %v1526, %v1532
      %v1535 = vmul.f32 %v1533, 1.442695
      %v1536 = vpow.pop %v1535
      %v1537 = vmul.f32 %v1534, 1.442695
      %v1538 = vpow.pop %v1537
      %v1539 = vsel %vm1132, %v1536, 0.0
      %1540 = vadd.xlane.f32.xlu0 %v1539
      %v1541 = vpop.xlane.xlu0 %1540
      %v1542 = vsel %vm1132, %v1538, 0.0
      %1543 = vadd.xlane.f32.xlu0 %v1542
      %v1544 = vpop.xlane.xlu0 %1543
      %v1545 = vrcp.pop %v1541
      %v1546 = vrcp.pop %v1544
      %v1547 = vmul.f32 %v1536, %v1545
      %v1548 = vmul.f32 %v1538, %v1546
      %v1549 = vpack.c.bf16 %v1548, %v1547
      %v1551 = vsel %vm1132, %v1549, 0
      %1553 = vmatpush.bf16.msra.mxu0 0
      %1554 = vmatpush.bf16.msra.mxu0 0
      %1555 = vmatpush.bf16.msra.mxu0 0
      %1556 = vmatpush.bf16.msra.mxu0 0
      %1557 = vmatpush.bf16.msra.mxu0 0
      %1558 = vmatpush.bf16.msra.mxu0 0
      %1559 = vmatpush.bf16.msra.mxu0 0
      %1560 = vmatpush.bf16.msra.mxu0 %v1497
      %1561 = vmatmul.bf16.gmra.mxu0 %v1551
      %v1562 = vpop.f32.mrf.mxu0
      %v1563 = vadd.f32 0.0, %v1562
      %v1564 = vpop.f32.mrf.mxu0
      %v1565 = vadd.f32 0.0, %v1564
      %1566 = vdwg.mxu0
      %v1567 = vpack.c.bf16 %v1565, %v1563
      %v1569 = vsel %vm1107, %v1567, 0
      %v1572 = vsel %vm1355, %v1502, 0
      %1574 = vmatpush.bf16.msra.mxu0 0
      %1575 = vmatpush.bf16.msra.mxu0 0
      %1576 = vmatpush.bf16.msra.mxu0 0
      %1577 = vmatpush.bf16.msra.mxu0 0
      %1578 = vmatpush.bf16.msra.mxu0 0
      %1579 = vmatpush.bf16.msra.mxu0 0
      %1580 = vmatpush.bf16.msra.mxu0 0
      %1581 = vmatpush.bf16.msra.mxu0 %v1572
      %1582 = vmatmul.bf16.gmra.mxu0 %v1569
      %v1583 = vpop.f32.mrf.mxu0
      %v1584 = vadd.f32 0.0, %v1583
      %v1585 = vpop.f32.mrf.mxu0
      %v1586 = vadd.f32 0.0, %v1585
      %1587 = vdwg.mxu0
      %v1588 = vadd.f32 %v1389, %v1584
      %v1589 = vadd.f32 %v1391, %v1586
      %s1590 = scalar_lea.vmem %s647, 48
      %v1591 = vld [vmem:[%s1590] sm:$0xf]
      %v1592 = vld [vmem:[%s1590 + $0x4] sm:$0xf]
      %v1593 = vld [vmem:[%s1590 + $0x8] sm:$0xf]
      %v1594 = vld [vmem:[%s1590 + $0xc] sm:$0xf]
      %v1599 = vunpack.c.l.b16 %v1591
      %v1600 = vunpack.c.l.b16 %v1592
      %v1601 = vunpack.c.l.b16 %v1593
      %v1602 = vunpack.c.l.b16 %v1594
      %v1603 = vpack.c.b16 %v1600, %v1599
      %v1604 = vpack.c.b16 %v1602, %v1601
      %1607 = vrot.lane.b32.xlu0 %v1007, 104
      %v1608 = vpop.permute.xlu0 %1607
      %1610 = vmatpush.bf16.msra.mxu0 0
      %1611 = vmatpush.bf16.msra.mxu0 0
      %1612 = vmatpush.bf16.msra.mxu0 0
      %1613 = vmatpush.bf16.msra.mxu0 0
      %1614 = vmatpush.bf16.msra.mxu0 0
      %1615 = vmatpush.bf16.msra.mxu0 0
      %1616 = vmatpush.bf16.msra.mxu0 %v1604
      %1617 = vmatpush.bf16.msra.mxu0 %v1603
      %1618 = vmatmul.bf16.gmra.mxu0 %v1021
      %v1619 = vpop.f32.mrf.mxu0
      %v1620 = vadd.f32 %v1608, %v1619
      %v1621 = vpop.f32.mrf.mxu0
      %v1622 = vadd.f32 %v1608, %v1621
      %1623 = vdwg.mxu0
      %s1624 = scalar_lea.vmem %s647, 112
      %v1625 = vld [vmem:[%s1624] sm:$0xf]
      %v1626 = vld [vmem:[%s1624 + $0x4] sm:$0xf]
      %v1627 = vld [vmem:[%s1624 + $0x8] sm:$0xf]
      %v1628 = vld [vmem:[%s1624 + $0xc] sm:$0xf]
      %v1633 = vunpack.c.l.b16 %v1625
      %v1634 = vunpack.c.l.b16 %v1626
      %v1635 = vunpack.c.l.b16 %v1627
      %v1636 = vunpack.c.l.b16 %v1628
      %v1637 = vpack.c.b16 %v1634, %v1633
      %v1638 = vpack.c.b16 %v1636, %v1635
      %1641 = vrot.lane.b32.xlu0 %v1042, 104
      %v1642 = vpop.permute.xlu0 %1641
      %1644 = vmatpush.bf16.msra.mxu0 0
      %1645 = vmatpush.bf16.msra.mxu0 0
      %1646 = vmatpush.bf16.msra.mxu0 0
      %1647 = vmatpush.bf16.msra.mxu0 0
      %1648 = vmatpush.bf16.msra.mxu0 0
      %1649 = vmatpush.bf16.msra.mxu0 0
      %1650 = vmatpush.bf16.msra.mxu0 %v1638
      %1651 = vmatpush.bf16.msra.mxu0 %v1637
      %1652 = vmatmul.bf16.gmra.mxu0 %v1021
      %v1653 = vpop.f32.mrf.mxu0
      %v1654 = vadd.f32 %v1642, %v1653
      %v1655 = vpop.f32.mrf.mxu0
      %v1656 = vadd.f32 %v1642, %v1655
      %1657 = vdwg.mxu0
      %s1658 = scalar_lea.vmem %s647, 176
      %v1659 = vld [vmem:[%s1658] sm:$0xf]
      %v1660 = vld [vmem:[%s1658 + $0x4] sm:$0xf]
      %v1661 = vld [vmem:[%s1658 + $0x8] sm:$0xf]
      %v1662 = vld [vmem:[%s1658 + $0xc] sm:$0xf]
      %v1667 = vunpack.c.l.b16 %v1659
      %v1668 = vunpack.c.l.b16 %v1660
      %v1669 = vunpack.c.l.b16 %v1661
      %v1670 = vunpack.c.l.b16 %v1662
      %v1671 = vpack.c.b16 %v1668, %v1667
      %v1672 = vpack.c.b16 %v1670, %v1669
      %1675 = vrot.lane.b32.xlu0 %v1074, 104
      %v1676 = vpop.permute.xlu0 %1675
      %1678 = vmatpush.bf16.msra.mxu0 0
      %1679 = vmatpush.bf16.msra.mxu0 0
      %1680 = vmatpush.bf16.msra.mxu0 0
      %1681 = vmatpush.bf16.msra.mxu0 0
      %1682 = vmatpush.bf16.msra.mxu0 0
      %1683 = vmatpush.bf16.msra.mxu0 0
      %1684 = vmatpush.bf16.msra.mxu0 %v1672
      %1685 = vmatpush.bf16.msra.mxu0 %v1671
      %1686 = vmatmul.bf16.gmra.mxu0 %v1021
      %v1687 = vpop.f32.mrf.mxu0
      %v1688 = vadd.f32 %v1676, %v1687
      %v1689 = vpop.f32.mrf.mxu0
      %v1690 = vadd.f32 %v1676, %v1689
      %1691 = vdwg.mxu0
      %v1692 = vpack.c.bf16 %v1622, %v1620
      %v1693 = vpack.c.bf16 %v1656, %v1654
      %v1694 = vpack.c.bf16 %v1690, %v1688
      %s1695 = scalar_lea.vmem %s675, 48
      %v1696 = vld [vmem:[%s1695] sm:$0xff]
      %v1697 = vld [vmem:[%s1695 + $0x8] sm:$0xff]
      %s1698 = scalar_lea.vmem %s652, 12
      %v1699 = vld [vmem:[%s1698] sm:$0xf]
      %v1701 = vsel %vm1107, %v1692, 0
      %v1704 = vsel %vm1107, %v1693, 0
      %1706 = vmatpush.bf16.xpose.msra.mxu0 0
      %1707 = vmatpush.bf16.xpose.msra.mxu0 0
      %1708 = vmatpush.bf16.xpose.msra.mxu0 0
      %1709 = vmatpush.bf16.xpose.msra.mxu0 0
      %1710 = vmatpush.bf16.xpose.msra.mxu0 0
      %1711 = vmatpush.bf16.xpose.msra.mxu0 0
      %1712 = vmatpush.bf16.xpose.msra.mxu0 0
      %1713 = vmatpush.bf16.xpose.msra.mxu0 %v1704
      %1714 = vmatmul.bf16.gmra.mxu0 %v1701
      %v1715 = vpop.f32.mrf.mxu0
      %v1716 = vadd.f32 0.0, %v1715
      %v1717 = vpop.f32.mrf.mxu0
      %v1718 = vadd.f32 0.0, %v1717
      %1719 = vdwg.mxu0
      %v1720 = vmul.f32 %v1716, 0.35355338
      %v1721 = vmul.f32 %v1718, 0.35355338
      %v1722 = vadd.f32 %v1720, %v1696
      %v1723 = vadd.f32 %v1721, %v1697
      %v1724 = vsel %vm1132, %v1722, -inf
      %1725 = vmax.xlane.f32.xlu0 %v1724
      %v1726 = vpop.xlane.xlu0 %1725
      %v1727 = vsel %vm1132, %v1723, -inf
      %1728 = vmax.xlane.f32.xlu0 %v1727
      %v1729 = vpop.xlane.xlu0 %1728
      %v1730 = vsub.f32 %v1722, %v1726
      %v1731 = vsub.f32 %v1723, %v1729
      %v1732 = vmul.f32 %v1730, 1.442695
      %v1733 = vpow.pop %v1732
      %v1734 = vmul.f32 %v1731, 1.442695
      %v1735 = vpow.pop %v1734
      %v1736 = vsel %vm1132, %v1733, 0.0
      %1737 = vadd.xlane.f32.xlu0 %v1736
      %v1738 = vpop.xlane.xlu0 %1737
      %v1739 = vsel %vm1132, %v1735, 0.0
      %1740 = vadd.xlane.f32.xlu0 %v1739
      %v1741 = vpop.xlane.xlu0 %1740
      %v1742 = vrcp.pop %v1738
      %v1743 = vrcp.pop %v1741
      %v1744 = vmul.f32 %v1733, %v1742
      %v1745 = vmul.f32 %v1735, %v1743
      %v1746 = vpack.c.bf16 %v1745, %v1744
      %v1748 = vsel %vm1132, %v1746, 0
      %1750 = vmatpush.bf16.msra.mxu0 0
      %1751 = vmatpush.bf16.msra.mxu0 0
      %1752 = vmatpush.bf16.msra.mxu0 0
      %1753 = vmatpush.bf16.msra.mxu0 0
      %1754 = vmatpush.bf16.msra.mxu0 0
      %1755 = vmatpush.bf16.msra.mxu0 0
      %1756 = vmatpush.bf16.msra.mxu0 0
      %1757 = vmatpush.bf16.msra.mxu0 %v1694
      %1758 = vmatmul.bf16.gmra.mxu0 %v1748
      %v1759 = vpop.f32.mrf.mxu0
      %v1760 = vadd.f32 0.0, %v1759
      %v1761 = vpop.f32.mrf.mxu0
      %v1762 = vadd.f32 0.0, %v1761
      %1763 = vdwg.mxu0
      %v1764 = vpack.c.bf16 %v1762, %v1760
      %v1766 = vsel %vm1107, %v1764, 0
      %v1769 = vsel %vm1355, %v1699, 0
      %1771 = vmatpush.bf16.msra.mxu0 0
      %1772 = vmatpush.bf16.msra.mxu0 0
      %1773 = vmatpush.bf16.msra.mxu0 0
      %1774 = vmatpush.bf16.msra.mxu0 0
      %1775 = vmatpush.bf16.msra.mxu0 0
      %1776 = vmatpush.bf16.msra.mxu0 0
      %1777 = vmatpush.bf16.msra.mxu0 0
      %1778 = vmatpush.bf16.msra.mxu0 %v1769
      %1779 = vmatmul.bf16.gmra.mxu0 %v1766
      %v1780 = vpop.f32.mrf.mxu0
      %v1781 = vadd.f32 0.0, %v1780
      %v1782 = vpop.f32.mrf.mxu0
      %v1783 = vadd.f32 0.0, %v1782
      %1784 = vdwg.mxu0
      %v1785 = vadd.f32 %v1588, %v1781
      %v1786 = vadd.f32 %v1589, %v1783
      %v1787 = vadd.f32 %v940, %v1785
      %v1788 = vadd.f32 %v941, %v1786
      %v1789 = vperm.slane %v942, 4
      %v1790 = vadd.f32 %v1787, %v1789
      %v1791 = vadd.f32 %v1788, %v1789
      %v1792 = vsel %vm944, %v1790, 0.0
      %1793 = vadd.xlane.f32.xlu0 %v1792
      %v1794 = vpop.xlane.xlu0 %1793
      %v1795 = vsel %vm944, %v1791, 0.0
      %1796 = vadd.xlane.f32.xlu0 %v1795
      %v1797 = vpop.xlane.xlu0 %1796
      %v1798 = vmul.f32 %v1794, %v957
      %v1799 = vmul.f32 %v1797, %v957
      %v1800 = vsub.f32 %v1790, %v1798
      %v1801 = vsub.f32 %v1791, %v1799
      %v1802 = vmul.f32 %v1800, %v1800
      %v1803 = vmul.f32 %v1801, %v1801
      %v1804 = vsel %vm944, %v1802, 0.0
      %1805 = vadd.xlane.f32.xlu0 %v1804
      %v1806 = vpop.xlane.xlu0 %1805
      %v1807 = vsel %vm944, %v1803, 0.0
      %1808 = vadd.xlane.f32.xlu0 %v1807
      %v1809 = vpop.xlane.xlu0 %1808
      %v1810 = vmul.f32 %v1806, %v957
      %v1811 = vmul.f32 %v1809, %v957
      %v1812 = vadd.f32 %v1810, 1e-05
      %v1813 = vadd.f32 %v1811, 1e-05
      %v1814 = vrsqrt.pop %v1812
      %v1815 = vmul.f32 %v1814, %v1812
      %v1816 = vmul.f32 %v1815, %v1814
      %v1817 = vmul.f32 0.5, %v1816
      %v1818 = vsub.f32 1.5, %v1817
      %v1819 = vmul.f32 %v1814, %v1818
      %vm1820 = vweird.f32 %v1812
      %vm1821 = vweird.f32 %v1814
      %vm1822 = vmor %vm1820, %vm1821
      %v1823 = vsel %vm1822, %v1814, %v1819
      %v1824 = vrsqrt.pop %v1813
      %v1825 = vmul.f32 %v1824, %v1813
      %v1826 = vmul.f32 %v1825, %v1824
      %v1827 = vmul.f32 0.5, %v1826
      %v1828 = vsub.f32 1.5, %v1827
      %v1829 = vmul.f32 %v1824, %v1828
      %vm1830 = vweird.f32 %v1813
      %vm1831 = vweird.f32 %v1824
      %vm1832 = vmor %vm1830, %vm1831
      %v1833 = vsel %vm1832, %v1824, %v1829
      %v1834 = vmul.f32 %v1800, %v1823
      %v1835 = vmul.f32 %v1801, %v1833
      %v1836 = vperm.slane %v942, 2
      %v1837 = vmul.f32 %v1834, %v1836
      %v1838 = vmul.f32 %v1835, %v1836
      %v1839 = vperm.slane %v942, 3
      %v1840 = vadd.f32 %v1837, %v1839
      %v1841 = vadd.f32 %v1838, %v1839
      %v1842 = vpack.c.bf16 %v1841, %v1840
      %v1843 = vld [vmem:[%s657] sm:$0xf]
      %v1844 = vld [vmem:[%s657 + $0x4] sm:$0xf]
      %v1845 = vld [vmem:[%s657 + $0x8] sm:$0xf]
      %v1846 = vld [vmem:[%s657 + $0xc] sm:$0xf]
      %v1847 = vld [vmem:[%s670] sm:$0x1]
      %v1849 = vperm.slane %v1847, 0
      %v1855 = vunpack.c.l.b16 %v1843
      %v1856 = vunpack.c.l.b16 %v1844
      %v1857 = vunpack.c.l.b16 %v1845
      %v1858 = vunpack.c.l.b16 %v1846
      %v1859 = vpack.c.b16 %v1856, %v1855
      %v1860 = vpack.c.b16 %v1858, %v1857
      %v1864 = vsel %vm944, %v1842, 0
      %1866 = vmatpush.bf16.msra.mxu0 0
      %1867 = vmatpush.bf16.msra.mxu0 0
      %1868 = vmatpush.bf16.msra.mxu0 0
      %1869 = vmatpush.bf16.msra.mxu0 0
      %1870 = vmatpush.bf16.msra.mxu0 0
      %1871 = vmatpush.bf16.msra.mxu0 0
      %1872 = vmatpush.bf16.msra.mxu0 %v1860
      %1873 = vmatpush.bf16.msra.mxu0 %v1859
      %1874 = vmatmul.bf16.gmra.mxu0 %v1864
      %v1875 = vpop.f32.mrf.mxu0
      %v1876 = vadd.f32 %v1849, %v1875
      %v1877 = vpop.f32.mrf.mxu0
      %v1878 = vadd.f32 %v1849, %v1877
      %1879 = vdwg.mxu0
      %v1880 = vmul.f32 %v1876, %v1876
      %v1881 = vmul.f32 %v1878, %v1878
      %v1882 = vmul.f32 %v1876, %v1880
      %v1883 = vmul.f32 %v1878, %v1881
      %v1884 = vmul.f32 %v1882, 0.044715
      %v1885 = vmul.f32 %v1883, 0.044715
      %v1886 = vadd.f32 %v1876, %v1884
      %v1887 = vadd.f32 %v1878, %v1885
      %v1888 = vmul.f32 %v1886, 0.7978846
      %v1889 = vmul.f32 %v1887, 0.7978846
      %v1890 = vtanh.pop %v1888
      %v1891 = vtanh.pop %v1889
      %v1892 = vadd.f32 %v1890, 1.0
      %v1893 = vadd.f32 %v1891, 1.0
      %v1894 = vmul.f32 %v1892, 0.5
      %v1895 = vmul.f32 %v1893, 0.5
      %v1896 = vmul.f32 %v1876, %v1894
      %v1897 = vmul.f32 %v1878, %v1895
      %v1898 = vpack.c.bf16 %v1897, %v1896
      %v1899 = vld [vmem:[%s662] sm:$0xf]
      %v1900 = vld [vmem:[%s662 + $0x4] sm:$0xf]
      %v1901 = vld [vmem:[%s662 + $0x8] sm:$0xf]
      %v1902 = vld [vmem:[%s662 + $0xc] sm:$0xf]
      %v1903 = vld [vmem:[%s662 + $0x10] sm:$0xf]
      %v1904 = vld [vmem:[%s662 + $0x14] sm:$0xf]
      %v1905 = vld [vmem:[%s662 + $0x18] sm:$0xf]
      %v1906 = vld [vmem:[%s662 + $0x1c] sm:$0xf]
      %v1907 = vld [vmem:[%s662 + $0x20] sm:$0xf]
      %v1908 = vld [vmem:[%s662 + $0x24] sm:$0xf]
      %v1909 = vld [vmem:[%s662 + $0x28] sm:$0xf]
      %v1910 = vld [vmem:[%s662 + $0x2c] sm:$0xf]
      %v1911 = vld [vmem:[%s662 + $0x30] sm:$0xf]
      %v1912 = vld [vmem:[%s662 + $0x34] sm:$0xf]
      %v1913 = vld [vmem:[%s662 + $0x38] sm:$0xf]
      %v1914 = vld [vmem:[%s662 + $0x3c] sm:$0xf]
      %v1915 = vperm.slane %v942, 5
      %v1932 = vunpack.c.l.b16 %v1899
      %v1933 = vunpack.c.l.b16 %v1900
      %v1934 = vunpack.c.l.b16 %v1901
      %v1935 = vunpack.c.l.b16 %v1902
      %v1936 = vunpack.c.l.b16 %v1903
      %v1937 = vunpack.c.l.b16 %v1904
      %v1938 = vunpack.c.l.b16 %v1905
      %v1939 = vunpack.c.l.b16 %v1906
      %v1940 = vunpack.c.l.b16 %v1907
      %v1941 = vunpack.c.l.b16 %v1908
      %v1942 = vunpack.c.l.b16 %v1909
      %v1943 = vunpack.c.l.b16 %v1910
      %v1944 = vunpack.c.l.b16 %v1911
      %v1945 = vunpack.c.l.b16 %v1912
      %v1946 = vunpack.c.l.b16 %v1913
      %v1947 = vunpack.c.l.b16 %v1914
      %v1948 = vpack.c.b16 %v1933, %v1932
      %v1949 = vpack.c.b16 %v1935, %v1934
      %v1950 = vpack.c.b16 %v1937, %v1936
      %v1951 = vpack.c.b16 %v1939, %v1938
      %v1952 = vpack.c.b16 %v1941, %v1940
      %v1953 = vpack.c.b16 %v1943, %v1942
      %v1954 = vpack.c.b16 %v1945, %v1944
      %v1955 = vpack.c.b16 %v1947, %v1946
      %1964 = vmatpush.bf16.msra.mxu0 %v1955
      %1965 = vmatpush.bf16.msra.mxu0 %v1954
      %1966 = vmatpush.bf16.msra.mxu0 %v1953
      %1967 = vmatpush.bf16.msra.mxu0 %v1952
      %1968 = vmatpush.bf16.msra.mxu0 %v1951
      %1969 = vmatpush.bf16.msra.mxu0 %v1950
      %1970 = vmatpush.bf16.msra.mxu0 %v1949
      %1971 = vmatpush.bf16.msra.mxu0 %v1948
      %1972 = vmatmul.bf16.gmra.mxu0 %v1898
      %v1973 = vpop.f32.mrf.mxu0
      %v1974 = vadd.f32 %v1915, %v1973
      %v1975 = vpop.f32.mrf.mxu0
      %v1976 = vadd.f32 %v1915, %v1975
      %1977 = vdwg.mxu0
      %v1978 = vadd.f32 %v1790, %v1974
      %v1979 = vadd.f32 %v1791, %v1976
      %1980 = vst.msk [vmem:[#allocation2] sm:$0xff] %vm944, %v1978
      %1981 = vst.msk [vmem:[#allocation2 + $0x8] sm:$0xff] %vm944, %v1979
      %p1982 = scmp.eq.s32.totalorder %s32, 1
      // Predicated region
      $region89: #{fwd.1} parent=83 // pred_check
        %p1983 = pneg %p1982
      $region90: #{fwd.1} parent=83 // pred_check_branch
        %1985 = sbr.rel (%p1983) target = $region92
      $region91: #{fwd.1} parent=83 // pred_region
        %v1986 = vld [vmem:[%s15] sm:$0xff]
        %v1987 = vld [vmem:[%s15 + $0x8] sm:$0x1]
        %v1988 = vld [vmem:[#allocation2] sm:$0xff]
        %v1989 = vld [vmem:[#allocation2 + $0x8] sm:$0xff]
        %v1990 = vld [vmem:[%s679] sm:$0x3]
        %v1991 = vadd.f32 %v1990, 1.0
        %v1992 = vperm.slane %v1991, 0
        %v1993 = vmul.f32 %v1988, %v1992
        %v1994 = vmul.f32 %v1989, %v1992
        %v1995 = vperm.slane %v1990, 1
        %v1996 = vadd.f32 %v1993, %v1995
        %v1997 = vadd.f32 %v1994, %v1995
        %v1998 = vpack.c.bf16 %v1997, %v1996
        %v1999 = vld [vmem:[%s11] sm:$0xf]
        %v2000 = vld [vmem:[%s11 + $0x4] sm:$0xf]
        %v2001 = vld [vmem:[%s11 + $0x8] sm:$0xf]
        %v2002 = vld [vmem:[%s11 + $0xc] sm:$0xf]
        %v2003 = vld [vmem:[%s12] sm:$0x1]
        %v2005 = vperm.slane %v2003, 0
        %v2011 = vunpack.c.l.b16 %v1999
        %v2012 = vunpack.c.l.b16 %v2000
        %v2013 = vunpack.c.l.b16 %v2001
        %v2014 = vunpack.c.l.b16 %v2002
        %v2015 = vpack.c.b16 %v2012, %v2011
        %v2016 = vpack.c.b16 %v2014, %v2013
        %v2020 = vsel %vm944, %v1998, 0
        %2022 = vmatpush.bf16.msra.mxu0 0
        %2023 = vmatpush.bf16.msra.mxu0 0
        %2024 = vmatpush.bf16.msra.mxu0 0
        %2025 = vmatpush.bf16.msra.mxu0 0
        %2026 = vmatpush.bf16.msra.mxu0 0
        %2027 = vmatpush.bf16.msra.mxu0 0
        %2028 = vmatpush.bf16.msra.mxu0 %v2016
        %2029 = vmatpush.bf16.msra.mxu0 %v2015
        %2030 = vmatmul.bf16.gmra.mxu0 %v2020
        %v2031 = vpop.f32.mrf.mxu0
        %v2032 = vadd.f32 %v2005, %v2031
        %v2033 = vpop.f32.mrf.mxu0
        %v2034 = vadd.f32 %v2005, %v2033
        %2035 = vdwg.mxu0
        %v2036 = vmul.f32 %v2032, %v2032
        %v2037 = vmul.f32 %v2034, %v2034
        %v2038 = vmul.f32 %v2032, %v2036
        %v2039 = vmul.f32 %v2034, %v2037
        %v2040 = vmul.f32 %v2038, 0.044715
        %v2041 = vmul.f32 %v2039, 0.044715
        %v2042 = vadd.f32 %v2032, %v2040
        %v2043 = vadd.f32 %v2034, %v2041
        %v2044 = vmul.f32 %v2042, 0.7978846
        %v2045 = vmul.f32 %v2043, 0.7978846
        %v2046 = vtanh.pop %v2044
        %v2047 = vtanh.pop %v2045
        %v2048 = vadd.f32 %v2046, 1.0
        %v2049 = vadd.f32 %v2047, 1.0
        %v2050 = vmul.f32 %v2048, 0.5
        %v2051 = vmul.f32 %v2049, 0.5
        %v2052 = vmul.f32 %v2032, %v2050
        %v2053 = vmul.f32 %v2034, %v2051
        %v2054 = vpack.c.bf16 %v2053, %v2052
        %v2055 = vld [vmem:[%s13] sm:$0xf]
        %v2056 = vld [vmem:[%s13 + $0x4] sm:$0xf]
        %v2057 = vld [vmem:[%s13 + $0x8] sm:$0xf]
        %v2058 = vld [vmem:[%s13 + $0xc] sm:$0xf]
        %v2059 = vld [vmem:[%s13 + $0x10] sm:$0xf]
        %v2060 = vld [vmem:[%s13 + $0x14] sm:$0xf]
        %v2061 = vld [vmem:[%s13 + $0x18] sm:$0xf]
        %v2062 = vld [vmem:[%s13 + $0x1c] sm:$0xf]
        %v2063 = vperm.slane %v1987, 0
        %v2072 = vunpack.c.l.b16 %v2055
        %v2073 = vunpack.c.l.b16 %v2056
        %v2074 = vunpack.c.l.b16 %v2057
        %v2075 = vunpack.c.l.b16 %v2058
        %v2076 = vunpack.c.l.b16 %v2059
        %v2077 = vunpack.c.l.b16 %v2060
        %v2078 = vunpack.c.l.b16 %v2061
        %v2079 = vunpack.c.l.b16 %v2062
        %v2080 = vpack.c.b16 %v2073, %v2072
        %v2081 = vpack.c.b16 %v2075, %v2074
        %v2082 = vpack.c.b16 %v2077, %v2076
        %v2083 = vpack.c.b16 %v2079, %v2078
        %vm2088 = vcmask 523264
        %v2090 = vsel %vm2088, %v2054, 0
        %2092 = vmatpush.bf16.msra.mxu0 0
        %2093 = vmatpush.bf16.msra.mxu0 0
        %2094 = vmatpush.bf16.msra.mxu0 0
        %2095 = vmatpush.bf16.msra.mxu0 0
        %2096 = vmatpush.bf16.msra.mxu0 %v2083
        %2097 = vmatpush.bf16.msra.mxu0 %v2082
        %2098 = vmatpush.bf16.msra.mxu0 %v2081
        %2099 = vmatpush.bf16.msra.mxu0 %v2080
        %2100 = vmatmul.bf16.gmra.mxu0 %v2090
        %v2101 = vpop.f32.mrf.mxu0
        %v2102 = vadd.f32 %v2063, %v2101
        %v2103 = vpop.f32.mrf.mxu0
        %v2104 = vadd.f32 %v2063, %v2103
        %2105 = vdwg.mxu0
        %v2106 = vrot.slane %v2102, 7
        %v2107 = vrot.slane %v2104, 7
        %v2108 = vlaneseq
        %v2109 = vshrl.u32 %v2108, 7
        %vm2110 = vcmp.lt.s32.totalorder %v2109, 1
        %v2111 = vsel %vm2110, %v2106, %v2107
        %v2112 = vsel %vm2110, %v2107, %v2106
        %v2113 = vadd.s32 %v2109, 8
        %vm2114 = vcmp.lt.s32.totalorder %v2109, 0
        %v2115 = vsub.s32 0, %v2109
        %v2116 = vsel %vm2114, %v2115, %v2109
        %v2117 = vshrl.u32 %v2116, 4
        %v2118 = vand.u32 %v2116, 15
        %v2119 = vsub.s32 0, %v2118
        %v2120 = vsel %vm2114, %v2119, %v2118
        %vm2121 = vcmp.lt.s32.totalorder %v2113, 0
        %v2122 = vsub.s32 0, %v2113
        %v2123 = vsel %vm2121, %v2122, %v2113
        %v2124 = vshrl.u32 %v2123, 4
        %v2125 = vand.u32 %v2123, 15
        %v2126 = vsub.s32 0, %v2125
        %v2127 = vsel %vm2121, %v2126, %v2125
        %vm2128 = vcmp.ne.s32.totalorder %v2120, 0
        %vm2129 = vcmp.ne.s32.totalorder %v2127, 0
        %vm2130 = vcmp.lt.s32.totalorder %v2120, 0
        %vm2131 = vcmp.lt.s32.totalorder %v2127, 0
        %vm2132 = vmand %vm2130, %vm2128
        %vm2133 = vmand %vm2131, %vm2129
        %v2134 = vadd.s32 %v2120, 16
        %v2135 = vadd.s32 %v2127, 16
        %v2136 = vsel %vm2132, %v2134, %v2120
        %v2137 = vsel %vm2133, %v2135, %v2127
        %v2138 = vadd.s32 %v2136, 4294967295
        %v2139 = vadd.s32 %v2137, 4294967295
        %vm2140 = vcmp.ge.s32.totalorder %v2138, 0
        %vm2141 = vcmp.ge.s32.totalorder %v2139, 0
        %vm2142 = vcmp.lt.s32.totalorder %v2138, 16
        %vm2143 = vcmp.lt.s32.totalorder %v2139, 16
        %vm2144 = vmand %vm2140, %vm2142
        %vm2145 = vmand %vm2141, %vm2143
        %v2146 = vsel %vm2144, %v2112, 0.0
        %v2147 = vsel %vm2145, %v2111, 0.0
        %v2148 = vpack.c.bf16 %v2147, %v2146
        %v2149 = vld [vmem:[%s14] sm:$0xf]
        %v2150 = vld [vmem:[%s14 + $0x4] sm:$0xf]
        %v2151 = vld [vmem:[%s14 + $0x8] sm:$0xf]
        %v2152 = vld [vmem:[%s14 + $0xc] sm:$0xf]
        %v2153 = vpack.c.bf16 %v2104, %v2102
        %s2154 = scalar_lea.vmem %s14, 16
        %v2155 = vld [vmem:[%s2154] sm:$0xf]
        %v2156 = vld [vmem:[%s2154 + $0x4] sm:$0xf]
        %v2157 = vld [vmem:[%s2154 + $0x8] sm:$0xf]
        %v2158 = vld [vmem:[%s2154 + $0xc] sm:$0xf]
        %v2163 = vunpack.c.l.b16 %v2155
        %v2164 = vunpack.c.l.b16 %v2156
        %v2165 = vunpack.c.l.b16 %v2157
        %v2166 = vunpack.c.l.b16 %v2158
        %v2167 = vpack.c.b16 %v2164, %v2163
        %v2168 = vpack.c.b16 %v2166, %v2165
        %v2172 = vsel %vm944, %v2153, 0
        %2174 = vmatpush.bf16.msra.mxu0 0
        %2175 = vmatpush.bf16.msra.mxu0 0
        %2176 = vmatpush.bf16.msra.mxu0 0
        %2177 = vmatpush.bf16.msra.mxu0 0
        %2178 = vmatpush.bf16.msra.mxu0 0
        %2179 = vmatpush.bf16.msra.mxu0 0
        %2180 = vmatpush.bf16.msra.mxu0 %v2168
        %2181 = vmatpush.bf16.msra.mxu0 %v2167
        %2182 = vmatmul.bf16.gmra.mxu0 %v2172
        %v2183 = vpop.f32.mrf.mxu0
        %v2184 = vadd.f32 0.0, %v2183
        %v2185 = vpop.f32.mrf.mxu0
        %v2186 = vadd.f32 0.0, %v2185
        %2187 = vdwg.mxu0
        %v2192 = vunpack.c.l.b16 %v2149
        %v2193 = vunpack.c.l.b16 %v2150
        %v2194 = vunpack.c.l.b16 %v2151
        %v2195 = vunpack.c.l.b16 %v2152
        %v2196 = vpack.c.b16 %v2193, %v2192
        %v2197 = vpack.c.b16 %v2195, %v2194
        %v2201 = vsel %vm944, %v2148, 0
        %2203 = vmatpush.bf16.msra.mxu0 0
        %2204 = vmatpush.bf16.msra.mxu0 0
        %2205 = vmatpush.bf16.msra.mxu0 0
        %2206 = vmatpush.bf16.msra.mxu0 0
        %2207 = vmatpush.bf16.msra.mxu0 0
        %2208 = vmatpush.bf16.msra.mxu0 0
        %2209 = vmatpush.bf16.msra.mxu0 %v2197
        %2210 = vmatpush.bf16.msra.mxu0 %v2196
        %2211 = vmatmul.bf16.gmra.mxu0 %v2201
        %v2212 = vpop.f32.mrf.mxu0
        %v2213 = vadd.f32 %v2184, %v2212
        %v2214 = vpop.f32.mrf.mxu0
        %v2215 = vadd.f32 %v2186, %v2214
        %2216 = vdwg.mxu0
        %v2217 = vrot.slane %v2102, 1
        %v2218 = vrot.slane %v2104, 1
        %vm2219 = vcmp.lt.s32.totalorder %v2109, 7
        %v2220 = vsel %vm2219, %v2217, %v2218
        %v2221 = vsel %vm2219, %v2218, %v2217
        %v2222 = vadd.s32 %v2136, 1
        %v2223 = vadd.s32 %v2137, 1
        %vm2224 = vcmp.ge.s32.totalorder %v2222, 0
        %vm2225 = vcmp.ge.s32.totalorder %v2223, 0
        %vm2226 = vcmp.lt.s32.totalorder %v2222, 16
        %vm2227 = vcmp.lt.s32.totalorder %v2223, 16
        %vm2228 = vmand %vm2224, %vm2226
        %vm2229 = vmand %vm2225, %vm2227
        %v2230 = vsel %vm2228, %v2220, 0.0
        %v2231 = vsel %vm2229, %v2221, 0.0
        %v2232 = vpack.c.bf16 %v2231, %v2230
        %s2233 = scalar_lea.vmem %s14, 32
        %v2234 = vld [vmem:[%s2233] sm:$0xf]
        %v2235 = vld [vmem:[%s2233 + $0x4] sm:$0xf]
        %v2236 = vld [vmem:[%s2233 + $0x8] sm:$0xf]
        %v2237 = vld [vmem:[%s2233 + $0xc] sm:$0xf]
        %v2242 = vunpack.c.l.b16 %v2234
        %v2243 = vunpack.c.l.b16 %v2235
        %v2244 = vunpack.c.l.b16 %v2236
        %v2245 = vunpack.c.l.b16 %v2237
        %v2246 = vpack.c.b16 %v2243, %v2242
        %v2247 = vpack.c.b16 %v2245, %v2244
        %v2251 = vsel %vm944, %v2232, 0
        %2253 = vmatpush.bf16.msra.mxu0 0
        %2254 = vmatpush.bf16.msra.mxu0 0
        %2255 = vmatpush.bf16.msra.mxu0 0
        %2256 = vmatpush.bf16.msra.mxu0 0
        %2257 = vmatpush.bf16.msra.mxu0 0
        %2258 = vmatpush.bf16.msra.mxu0 0
        %2259 = vmatpush.bf16.msra.mxu0 %v2247
        %2260 = vmatpush.bf16.msra.mxu0 %v2246
        %2261 = vmatmul.bf16.gmra.mxu0 %v2251
        %v2262 = vpop.f32.mrf.mxu0
        %v2263 = vadd.f32 0.0, %v2262
        %v2264 = vpop.f32.mrf.mxu0
        %v2265 = vadd.f32 0.0, %v2264
        %2266 = vdwg.mxu0
        %v2267 = vadd.f32 %v2213, %v2263
        %v2268 = vadd.f32 %v2215, %v2265
        %v2269 = vperm.slane %v1986, 3
        %v2270 = vadd.f32 %v2267, %v2269
        %v2271 = vadd.f32 %v2268, %v2269
        %v2272 = vsel %vm944, %v2270, 0.0
        %2273 = vadd.xlane.f32.xlu0 %v2272
        %v2274 = vpop.xlane.xlu0 %2273
        %v2275 = vsel %vm944, %v2271, 0.0
        %2276 = vadd.xlane.f32.xlu0 %v2275
        %v2277 = vpop.xlane.xlu0 %2276
        %v2278 = vmul.f32 %v2274, %v957
        %v2279 = vmul.f32 %v2277, %v957
        %v2280 = vsub.f32 %v2270, %v2278
        %v2281 = vsub.f32 %v2271, %v2279
        %v2282 = vmul.f32 %v2280, %v2280
        %v2283 = vmul.f32 %v2281, %v2281
        %v2284 = vsel %vm944, %v2282, 0.0
        %2285 = vadd.xlane.f32.xlu0 %v2284
        %v2286 = vpop.xlane.xlu0 %2285
        %v2287 = vsel %vm944, %v2283, 0.0
        %2288 = vadd.xlane.f32.xlu0 %v2287
        %v2289 = vpop.xlane.xlu0 %2288
        %v2290 = vmul.f32 %v2286, %v957
        %v2291 = vmul.f32 %v2289, %v957
        %v2292 = vadd.f32 %v2290, 1e-05
        %v2293 = vadd.f32 %v2291, 1e-05
        %v2294 = vrsqrt.pop %v2292
        %v2295 = vmul.f32 %v2294, %v2292
        %v2296 = vmul.f32 %v2295, %v2294
        %v2297 = vmul.f32 0.5, %v2296
        %v2298 = vsub.f32 1.5, %v2297
        %v2299 = vmul.f32 %v2294, %v2298
        %vm2300 = vweird.f32 %v2292
        %vm2301 = vweird.f32 %v2294
        %vm2302 = vmor %vm2300, %vm2301
        %v2303 = vsel %vm2302, %v2294, %v2299
        %v2304 = vrsqrt.pop %v2293
        %v2305 = vmul.f32 %v2304, %v2293
        %v2306 = vmul.f32 %v2305, %v2304
        %v2307 = vmul.f32 0.5, %v2306
        %v2308 = vsub.f32 1.5, %v2307
        %v2309 = vmul.f32 %v2304, %v2308
        %vm2310 = vweird.f32 %v2293
        %vm2311 = vweird.f32 %v2304
        %vm2312 = vmor %vm2310, %vm2311
        %v2313 = vsel %vm2312, %v2304, %v2309
        %v2314 = vmul.f32 %v2280, %v2303
        %v2315 = vmul.f32 %v2281, %v2313
        %v2316 = vperm.slane %v1986, 4
        %v2317 = vmul.f32 %v2314, %v2316
        %v2318 = vmul.f32 %v2315, %v2316
        %v2319 = vperm.slane %v1986, 5
        %v2320 = vadd.f32 %v2317, %v2319
        %v2321 = vadd.f32 %v2318, %v2319
        %v2322 = vmul.f32 %v2320, %v2320
        %v2323 = vmul.f32 %v2321, %v2321
        %v2324 = vmul.f32 %v2320, %v2322
        %v2325 = vmul.f32 %v2321, %v2323
        %v2326 = vmul.f32 %v2324, 0.044715
        %v2327 = vmul.f32 %v2325, 0.044715
        %v2328 = vadd.f32 %v2320, %v2326
        %v2329 = vadd.f32 %v2321, %v2327
        %v2330 = vmul.f32 %v2328, 0.7978846
        %v2331 = vmul.f32 %v2329, 0.7978846
        %v2332 = vtanh.pop %v2330
        %v2333 = vtanh.pop %v2331
        %v2334 = vadd.f32 %v2332, 1.0
        %v2335 = vadd.f32 %v2333, 1.0
        %v2336 = vmul.f32 %v2334, 0.5
        %v2337 = vmul.f32 %v2335, 0.5
        %v2338 = vmul.f32 %v2320, %v2336
        %v2339 = vmul.f32 %v2321, %v2337
        %v2340 = vsel %vm944, %v2338, 0.0
        %2341 = vadd.xlane.f32.xlu0 %v2340
        %v2342 = vpop.xlane.xlu0 %2341
        %v2343 = vsel %vm944, %v2339, 0.0
        %2344 = vadd.xlane.f32.xlu0 %v2343
        %v2345 = vpop.xlane.xlu0 %2344
        %v2346 = vmul.f32 %v2342, %v957
        %v2347 = vmul.f32 %v2345, %v957
        %v2348 = vsub.f32 %v2338, %v2346
        %v2349 = vsub.f32 %v2339, %v2347
        %v2350 = vmul.f32 %v2348, %v2348
        %v2351 = vmul.f32 %v2349, %v2349
        %v2352 = vsel %vm944, %v2350, 0.0
        %2353 = vadd.xlane.f32.xlu0 %v2352
        %v2354 = vpop.xlane.xlu0 %2353
        %v2355 = vsel %vm944, %v2351, 0.0
        %2356 = vadd.xlane.f32.xlu0 %v2355
        %v2357 = vpop.xlane.xlu0 %2356
        %v2358 = vmul.f32 %v2354, %v957
        %v2359 = vmul.f32 %v2357, %v957
        %v2360 = vadd.f32 %v2358, 1e-05
        %v2361 = vadd.f32 %v2359, 1e-05
        %v2362 = vrsqrt.pop %v2360
        %v2363 = vmul.f32 %v2362, %v2360
        %v2364 = vmul.f32 %v2363, %v2362
        %v2365 = vmul.f32 0.5, %v2364
        %v2366 = vsub.f32 1.5, %v2365
        %v2367 = vmul.f32 %v2362, %v2366
        %vm2368 = vweird.f32 %v2360
        %vm2369 = vweird.f32 %v2362
        %vm2370 = vmor %vm2368, %vm2369
        %v2371 = vsel %vm2370, %v2362, %v2367
        %v2372 = vrsqrt.pop %v2361
        %v2373 = vmul.f32 %v2372, %v2361
        %v2374 = vmul.f32 %v2373, %v2372
        %v2375 = vmul.f32 0.5, %v2374
        %v2376 = vsub.f32 1.5, %v2375
        %v2377 = vmul.f32 %v2372, %v2376
        %vm2378 = vweird.f32 %v2361
        %vm2379 = vweird.f32 %v2372
        %vm2380 = vmor %vm2378, %vm2379
        %v2381 = vsel %vm2380, %v2372, %v2377
        %v2382 = vmul.f32 %v2348, %v2371
        %v2383 = vmul.f32 %v2349, %v2381
        %v2384 = vperm.slane %v1986, 6
        %v2385 = vmul.f32 %v2382, %v2384
        %v2386 = vmul.f32 %v2383, %v2384
        %v2387 = vperm.slane %v1986, 7
        %v2388 = vadd.f32 %v2385, %v2387
        %v2389 = vadd.f32 %v2386, %v2387
        %v2390 = vsel %vm944, %v2388, 0.0
        %v2391 = vsel %vm944, %v2389, 0.0
        %2392 = vst [vmem:[%s684] sm:$0xff] %v2390
        %2393 = vst [vmem:[%s684 + $0x8] sm:$0xff] %v2391
      $region92: #{fwd.1} parent=83 // pred_fallthru
        _
      %p2394 = scmp.lt.s32.totalorder %s31, 1
      %s2395 = scalar_select %p2394, %s31, 1
      %s2396 = smul.addr %s2395, 2
      %s2397 = smul.addr %s2396, 8
      %s2398 = scalar_lea.vmem %s16, %s2397
      // Predicated region
      $region93: #{fwd.1} parent=83 // pred_check
        %p2399 = pneg %p438
      $region94: #{fwd.1} parent=83 // pred_check_branch
        %2401 = sbr.rel (%p2399) target = $region96
      $region95: #{fwd.1} parent=83 // pred_region
        _
      $region96: #{fwd.1} parent=83 // pred_fallthru
        _
    $region84: #{fwd.1} parent=5 // pred_fallthru
      _
    %p2402 = scmp.le.s32.totalorder 2, %s22
    // Predicated region
    $region97: #{fwd.1} parent=5 // pred_check
      %p2403 = pneg %p2402
    $region98: #{fwd.1} parent=5 // pred_check_branch
      %2405 = sbr.rel (%p2403) target = $region100
    $region99: #{fwd.1} parent=5 // pred_region
      %s2406 = ssub.s32 %s22, 2
      // Predicated region
      $region101: #{fwd.1} parent=99 // pred_check
        %p2407 = pneg %p444
      $region102: #{fwd.1} parent=99 // pred_check_branch
        %2409 = sbr.rel (%p2407) target = $region104
      $region103: #{fwd.1} parent=99 // pred_region
        %p2410 = scmp.lt.s32.totalorder %s33, 1
        %s2411 = scalar_select %p2410, %s33, 1
        %s2412 = smul.addr %s2411, 2
        %s2413 = smul.addr %s2412, 8
        %s2414 = scalar_lea.vmem %s16, %s2413
      $region104: #{fwd.1} parent=99 // pred_fallthru
        _
    $region100: #{fwd.1} parent=5 // pred_fallthru
      _
  $region6: #{fwd.1} parent=0 // loop_footer
    %s26 = sadd.s32 1, %s22
  $region7: #{fwd.1} parent=0 // loop_footer_branch
    %21 = sbr.rel target = $region3
  $region8: #{fwd.1} parent=0 // loop_exit
    _

</llo_original>
